<compile_context>
chip_gen: v5e
topology: v5e:2x2
jax: 0.10.0
libtpu: 0.0.40
codegen_flags: <defaults>
</compile_context>

<pallas_src>
import functools

import jax
import jax.numpy as jnp
from jax.experimental import pallas as pl
from jax.experimental.pallas import tpu as pltpu


# ----------------------------------------------------------------------------
# Fused ResidualUnit kernel (one image per grid step, everything in VMEM)
# ----------------------------------------------------------------------------
def _residual_unit_kernel(x_ref, w1_ref, w2_ref, w3_ref, wd_ref,
                          s1_ref, b1_ref, s2_ref, b2_ref, s3_ref, b3_ref,
                          sd_ref, bd_ref, o_ref, h1pad_ref, *, H, W):
    width = w1_ref.shape[1]
    x = x_ref[0]                                                # (H*W, Cin)

    # conv1 (1x1) + bn1 + relu
    h1 = jnp.dot(x, w1_ref[...], preferred_element_type=jnp.float32)
    h1 = jnp.maximum(h1 * s1_ref[...] + b1_ref[...], 0.0)       # (H*W, width)

    # Zero-padded spatial copy of h1 for the 3x3 window (stays in VMEM).
    h1pad_ref[...] = jnp.zeros_like(h1pad_ref)
    h1pad_ref[1:H + 1, 1:W + 1, :] = h1.reshape(H, W, width)

    # conv2 (3x3, pad=1, stride=1) as 9 shifted 1x1 GEMMs accumulated in f32.
    acc = jnp.zeros((H * W, width), jnp.float32)
    for q in range(9):
        di, dj = q // 3, q % 3
        shifted = h1pad_ref[di:di + H, dj:dj + W, :].reshape(H * W, width)
        acc = acc + jnp.dot(shifted, w2_ref[q],
                            preferred_element_type=jnp.float32)
    h2 = jnp.maximum(acc * s2_ref[...] + b2_ref[...], 0.0)      # (H*W, width)

    # conv3 (1x1) + bn3, downsample conv1x1 + bn, fused residual add + relu.
    h3 = (jnp.dot(h2, w3_ref[...], preferred_element_type=jnp.float32)
          * s3_ref[...] + b3_ref[...])
    ds = (jnp.dot(x, wd_ref[...], preferred_element_type=jnp.float32)
          * sd_ref[...] + bd_ref[...])
    o_ref[0] = jnp.maximum(h3 + ds, 0.0).astype(o_ref.dtype)


def residual_unit_forward(x_nchw, params):
    """x_nchw: (N, Cin, H, W) float32 -> (N, Cout, H, W) float32."""
    N, Cin, H, W = x_nchw.shape
    w1, w2, w3, wd = params["w1"], params["w2"], params["w3"], params["wd"]
    width = w1.shape[1]
    Cout = w3.shape[1]
    s1, b1 = params["bn1"]
    s2, b2 = params["bn2"]
    s3, b3 = params["bn3"]
    sd, bd = params["bnd"]

    # NCHW -> NHWC once; flatten spatial so the kernel sees plain GEMM rows.
    x = jnp.transpose(x_nchw, (0, 2, 3, 1)).astype(jnp.float32)
    x = x.reshape(N, H * W, Cin)

    row = lambda v: v.reshape(1, -1).astype(jnp.float32)
    const2 = lambda n: (0, 0)          # weights / bn vectors: resident in VMEM
    const3 = lambda n: (0, 0, 0)

    out = pl.pallas_call(
        functools.partial(_residual_unit_kernel, H=H, W=W),
        out_shape=jax.ShapeDtypeStruct((N, H * W, Cout), jnp.float32),
        grid_spec=pltpu.PrefetchScalarGridSpec(
            num_scalar_prefetch=0,
            grid=(N,),
            in_specs=[
                pl.BlockSpec((1, H * W, Cin), lambda n: (n, 0, 0)),
                pl.BlockSpec(w1.shape, const2),      # (Cin, width)
                pl.BlockSpec(w2.shape, const3),      # (9, width, width)
                pl.BlockSpec(w3.shape, const2),      # (width, Cout)
                pl.BlockSpec(wd.shape, const2),      # (Cin, Cout)
                pl.BlockSpec((1, width), const2),    # bn1 scale
                pl.BlockSpec((1, width), const2),    # bn1 bias
                pl.BlockSpec((1, width), const2),    # bn2 scale
                pl.BlockSpec((1, width), const2),    # bn2 bias
                pl.BlockSpec((1, Cout), const2),     # bn3 scale
                pl.BlockSpec((1, Cout), const2),     # bn3 bias
                pl.BlockSpec((1, Cout), const2),     # bnd scale
                pl.BlockSpec((1, Cout), const2),     # bnd bias
            ],
            out_specs=pl.BlockSpec((1, H * W, Cout), lambda n: (n, 0, 0)),
            scratch_shapes=[pltpu.VMEM((H + 2, W + 2, width), jnp.float32)],
        ),
        compiler_params=pltpu.CompilerParams(
            dimension_semantics=("parallel",)),
    )(x, w1, w2, w3, wd,
      row(s1), row(b1), row(s2), row(b2), row(s3), row(b3), row(sd), row(bd))

    return jnp.transpose(out.reshape(N, H, W, Cout), (0, 3, 1, 2))


# ----------------------------------------------------------------------------
# Parameters (deterministic synthetic init, BatchNorm folded to scale/bias)
# ----------------------------------------------------------------------------
def _fold_bn(key, c, eps=1e-5):
    k1, k2, k3, k4 = jax.random.split(key, 4)
    gamma = 1.0 + 0.1 * jax.random.normal(k1, (c,), jnp.float32)
    beta = 0.1 * jax.random.normal(k2, (c,), jnp.float32)
    mean = 0.1 * jax.random.normal(k3, (c,), jnp.float32)
    var = 1.0 + 0.1 * jax.random.uniform(k4, (c,), jnp.float32)
    scale = gamma / jnp.sqrt(var + eps)
    bias = beta - mean * scale
    return scale, bias


def init_residual_unit(key, in_channels, out_channels):
    width = out_channels // 4
    ks = jax.random.split(key, 8)

    def cw(k, kk, cin, cout):
        fan_in = kk * kk * cin
        return (jax.random.normal(k, (kk * kk, cin, cout), jnp.float32)
                * (1.0 / jnp.sqrt(float(fan_in))))

    return dict(
        w1=cw(ks[0], 1, in_channels, width)[0],        # (Cin, width)
        bn1=_fold_bn(ks[1], width),
        w2=cw(ks[2], 3, width, width),                 # (9, width, width)
        bn2=_fold_bn(ks[3], width),
        w3=cw(ks[4], 1, width, out_channels)[0],       # (width, Cout)
        bn3=_fold_bn(ks[5], out_channels),
        wd=cw(ks[6], 1, in_channels, out_channels)[0], # (Cin, Cout)
        bnd=_fold_bn(ks[7], out_channels),
    )


# ----------------------------------------------------------------------------
# Pure-JAX reference (for correctness validation)
# ----------------------------------------------------------------------------
def _ref_residual_unit(x_nchw, p):
    prec = jax.lax.Precision.HIGHEST
    x = jnp.transpose(x_nchw, (0, 2, 3, 1)).astype(jnp.float32)   # NHWC
    N, H, W, _ = x.shape

    def c1x1(t, w):
        return jnp.einsum("nhwc,cd->nhwd", t, w, precision=prec)

    def bn(t, sb):
        return t * sb[0] + sb[1]

    h = jnp.maximum(bn(c1x1(x, p["w1"]), p["bn1"]), 0.0)
    hpad = jnp.pad(h, ((0, 0), (1, 1), (1, 1), (0, 0)))
    acc = jnp.zeros(h.shape[:3] + (p["w2"].shape[2],), jnp.float32)
    for q in range(9):
        di, dj = q // 3, q % 3
        acc = acc + jnp.einsum("nhwc,cd->nhwd",
                               hpad[:, di:di + H, dj:dj + W, :], p["w2"][q],
                               precision=prec)
    h = jnp.maximum(bn(acc, p["bn2"]), 0.0)
    h = bn(c1x1(h, p["w3"]), p["bn3"])
    ds = bn(c1x1(x, p["wd"]), p["bnd"])
    y = jnp.maximum(h + ds, 0.0)
    return jnp.transpose(y, (0, 3, 1, 2))


if __name__ == "__main__":
    key = jax.random.PRNGKey(0)
    kx, kp = jax.random.split(key)
    N, Cin, H, W = 2, 4, 16, 16
    Cout = 64                                        # width = Cout // 4 = 16
    x = jax.random.normal(kx, (N, Cin, H, W), jnp.float32)
    params = init_residual_unit(kp, Cin, Cout)

    fwd = jax.jit(residual_unit_forward)
    out = jax.block_until_ready(fwd(x, params))
    assert out.shape == (N, Cout, H, W), out.shape
    assert bool(jnp.all(jnp.isfinite(out))), "non-finite output"

    ref = _ref_residual_unit(x, params)
    max_err = float(jnp.max(jnp.abs(out - ref)))
    assert bool(jnp.allclose(out, ref, rtol=1e-2, atol=1e-2)), max_err
    print("KERNEL_OK")
</pallas_src>

<mosaic_0001>
module attributes {stable_mosaic.version = 11 : i64} {
  func.func @_residual_unit_kernel(%arg0: i32, %arg1: memref<1x256x4xf32, #tpu.memory_space<vmem>>, %arg2: memref<4x16xf32, #tpu.memory_space<vmem>>, %arg3: memref<9x16x16xf32, #tpu.memory_space<vmem>>, %arg4: memref<16x64xf32, #tpu.memory_space<vmem>>, %arg5: memref<4x64xf32, #tpu.memory_space<vmem>>, %arg6: memref<1x16xf32, #tpu.memory_space<vmem>>, %arg7: memref<1x16xf32, #tpu.memory_space<vmem>>, %arg8: memref<1x16xf32, #tpu.memory_space<vmem>>, %arg9: memref<1x16xf32, #tpu.memory_space<vmem>>, %arg10: memref<1x64xf32, #tpu.memory_space<vmem>>, %arg11: memref<1x64xf32, #tpu.memory_space<vmem>>, %arg12: memref<1x64xf32, #tpu.memory_space<vmem>>, %arg13: memref<1x64xf32, #tpu.memory_space<vmem>>, %arg14: memref<1x256x64xf32, #tpu.memory_space<vmem>>, %arg15: memref<18x18x16xf32, #tpu.memory_space<vmem>>) attributes {dimension_semantics = [#tpu.dimension_semantics<parallel>], iteration_bounds = array<i64: 2>, scalar_prefetch = 0 : i64, scratch_operands = 1 : i64, tpu.core_type = #tpu.core_type<tc>, window_params = [{transform_indices = @transform_0, window_bounds = array<i64: 1, 256, 4>}, {pipeline_mode = #tpu.pipeline_mode<synchronous>, transform_indices = @transform_1, window_bounds = array<i64: 4, 16>}, {pipeline_mode = #tpu.pipeline_mode<synchronous>, transform_indices = @transform_2, window_bounds = array<i64: 9, 16, 16>}, {pipeline_mode = #tpu.pipeline_mode<synchronous>, transform_indices = @transform_3, window_bounds = array<i64: 16, 64>}, {pipeline_mode = #tpu.pipeline_mode<synchronous>, transform_indices = @transform_4, window_bounds = array<i64: 4, 64>}, {pipeline_mode = #tpu.pipeline_mode<synchronous>, transform_indices = @transform_5, window_bounds = array<i64: 1, 16>}, {pipeline_mode = #tpu.pipeline_mode<synchronous>, transform_indices = @transform_6, window_bounds = array<i64: 1, 16>}, {pipeline_mode = #tpu.pipeline_mode<synchronous>, transform_indices = @transform_7, window_bounds = array<i64: 1, 16>}, {pipeline_mode = #tpu.pipeline_mode<synchronous>, transform_indices = @transform_8, window_bounds = array<i64: 1, 16>}, {pipeline_mode = #tpu.pipeline_mode<synchronous>, transform_indices = @transform_9, window_bounds = array<i64: 1, 64>}, {pipeline_mode = #tpu.pipeline_mode<synchronous>, transform_indices = @transform_10, window_bounds = array<i64: 1, 64>}, {pipeline_mode = #tpu.pipeline_mode<synchronous>, transform_indices = @transform_11, window_bounds = array<i64: 1, 64>}, {pipeline_mode = #tpu.pipeline_mode<synchronous>, transform_indices = @transform_12, window_bounds = array<i64: 1, 64>}, {transform_indices = @transform_13, window_bounds = array<i64: 1, 256, 64>}]} {
    %c0 = arith.constant 0 : index
    %c0_0 = arith.constant 0 : index
    %c0_1 = arith.constant 0 : index
    %0 = vector.load %arg1[%c0, %c0_0, %c0_1] : memref<1x256x4xf32, #tpu.memory_space<vmem>>, vector<1x256x4xf32>
    %1 = vector.shape_cast %0 : vector<1x256x4xf32> to vector<256x4xf32>
    %c0_2 = arith.constant 0 : index
    %c0_3 = arith.constant 0 : index
    %2 = vector.load %arg2[%c0_2, %c0_3] : memref<4x16xf32, #tpu.memory_space<vmem>>, vector<4x16xf32>
    %cst = arith.constant dense<0.000000e+00> : vector<256x16xf32>
    %3 = tpu.matmul %1, %2, %cst {dimension_numbers = #tpu.dot_dimension_numbers<[1], [0], [0], [1], [0, 0, 1, 1], [], []>} : vector<256x4xf32>, vector<4x16xf32>, vector<256x16xf32> -> vector<256x16xf32>
    %c0_4 = arith.constant 0 : index
    %c0_5 = arith.constant 0 : index
    %4 = vector.load %arg6[%c0_4, %c0_5] : memref<1x16xf32, #tpu.memory_space<vmem>>, vector<1x16xf32>
    %5 = vector.broadcast %4 : vector<1x16xf32> to vector<256x16xf32>
    %6 = arith.mulf %3, %5 : vector<256x16xf32>
    %c0_6 = arith.constant 0 : index
    %c0_7 = arith.constant 0 : index
    %7 = vector.load %arg7[%c0_6, %c0_7] : memref<1x16xf32, #tpu.memory_space<vmem>>, vector<1x16xf32>
    %8 = vector.broadcast %7 : vector<1x16xf32> to vector<256x16xf32>
    %9 = arith.addf %6, %8 : vector<256x16xf32>
    %cst_8 = arith.constant 0.000000e+00 : f32
    %10 = vector.broadcast %cst_8 : f32 to vector<256x16xf32>
    %11 = arith.maximumf %9, %10 : vector<256x16xf32>
    %cst_9 = arith.constant 0.000000e+00 : f32
    %12 = vector.broadcast %cst_9 : f32 to vector<18x18x16xf32>
    %c0_10 = arith.constant 0 : index
    %c0_11 = arith.constant 0 : index
    %c0_12 = arith.constant 0 : index
    %13 = vector.load %arg15[%c0_10, %c0_11, %c0_12] : memref<18x18x16xf32, #tpu.memory_space<vmem>>, vector<18x18x16xf32>
    tpu.vector_store %arg15[%c0_10, %c0_11, %c0_12], %12 {strides = array<i32>} : memref<18x18x16xf32, #tpu.memory_space<vmem>>, vector<18x18x16xf32>,
    %14 = vector.shape_cast %11 : vector<256x16xf32> to vector<16x16x16xf32>
    %c1 = arith.constant 1 : index
    %c1_13 = arith.constant 1 : index
    %c0_14 = arith.constant 0 : index
    %15 = vector.load %arg15[%c1, %c1_13, %c0_14] : memref<18x18x16xf32, #tpu.memory_space<vmem>>, vector<16x16x16xf32>
    tpu.vector_store %arg15[%c1, %c1_13, %c0_14], %14 {strides = array<i32>} : memref<18x18x16xf32, #tpu.memory_space<vmem>>, vector<16x16x16xf32>,
    %cst_15 = arith.constant 0.000000e+00 : f32
    %16 = vector.broadcast %cst_15 : f32 to vector<256x16xf32>
    %c0_16 = arith.constant 0 : index
    %c0_17 = arith.constant 0 : index
    %c0_18 = arith.constant 0 : index
    %17 = vector.load %arg15[%c0_16, %c0_17, %c0_18] : memref<18x18x16xf32, #tpu.memory_space<vmem>>, vector<16x16x16xf32>
    %18 = vector.shape_cast %17 : vector<16x16x16xf32> to vector<256x16xf32>
    %c0_19 = arith.constant 0 : index
    %c0_20 = arith.constant 0 : index
    %c0_21 = arith.constant 0 : index
    %19 = vector.load %arg3[%c0_19, %c0_20, %c0_21] : memref<9x16x16xf32, #tpu.memory_space<vmem>>, vector<1x16x16xf32>
    %20 = vector.shape_cast %19 : vector<1x16x16xf32> to vector<16x16xf32>
    %cst_22 = arith.constant dense<0.000000e+00> : vector<256x16xf32>
    %21 = tpu.matmul %18, %20, %cst_22 {dimension_numbers = #tpu.dot_dimension_numbers<[1], [0], [0], [1], [0, 0, 1, 1], [], []>} : vector<256x16xf32>, vector<16x16xf32>, vector<256x16xf32> -> vector<256x16xf32>
    %22 = arith.addf %16, %21 : vector<256x16xf32>
    %c0_23 = arith.constant 0 : index
    %c1_24 = arith.constant 1 : index
    %c0_25 = arith.constant 0 : index
    %23 = vector.load %arg15[%c0_23, %c1_24, %c0_25] : memref<18x18x16xf32, #tpu.memory_space<vmem>>, vector<16x16x16xf32>
    %24 = vector.shape_cast %23 : vector<16x16x16xf32> to vector<256x16xf32>
    %c1_26 = arith.constant 1 : index
    %c0_27 = arith.constant 0 : index
    %c0_28 = arith.constant 0 : index
    %25 = vector.load %arg3[%c1_26, %c0_27, %c0_28] : memref<9x16x16xf32, #tpu.memory_space<vmem>>, vector<1x16x16xf32>
    %26 = vector.shape_cast %25 : vector<1x16x16xf32> to vector<16x16xf32>
    %cst_29 = arith.constant dense<0.000000e+00> : vector<256x16xf32>
    %27 = tpu.matmul %24, %26, %cst_29 {dimension_numbers = #tpu.dot_dimension_numbers<[1], [0], [0], [1], [0, 0, 1, 1], [], []>} : vector<256x16xf32>, vector<16x16xf32>, vector<256x16xf32> -> vector<256x16xf32>
    %28 = arith.addf %22, %27 : vector<256x16xf32>
    %c0_30 = arith.constant 0 : index
    %c2 = arith.constant 2 : index
    %c0_31 = arith.constant 0 : index
    %29 = vector.load %arg15[%c0_30, %c2, %c0_31] : memref<18x18x16xf32, #tpu.memory_space<vmem>>, vector<16x16x16xf32>
    %30 = vector.shape_cast %29 : vector<16x16x16xf32> to vector<256x16xf32>
    %c2_32 = arith.constant 2 : index
    %c0_33 = arith.constant 0 : index
    %c0_34 = arith.constant 0 : index
    %31 = vector.load %arg3[%c2_32, %c0_33, %c0_34] : memref<9x16x16xf32, #tpu.memory_space<vmem>>, vector<1x16x16xf32>
    %32 = vector.shape_cast %31 : vector<1x16x16xf32> to vector<16x16xf32>
    %cst_35 = arith.constant dense<0.000000e+00> : vector<256x16xf32>
    %33 = tpu.matmul %30, %32, %cst_35 {dimension_numbers = #tpu.dot_dimension_numbers<[1], [0], [0], [1], [0, 0, 1, 1], [], []>} : vector<256x16xf32>, vector<16x16xf32>, vector<256x16xf32> -> vector<256x16xf32>
    %34 = arith.addf %28, %33 : vector<256x16xf32>
    %c1_36 = arith.constant 1 : index
    %c0_37 = arith.constant 0 : index
    %c0_38 = arith.constant 0 : index
    %35 = vector.load %arg15[%c1_36, %c0_37, %c0_38] : memref<18x18x16xf32, #tpu.memory_space<vmem>>, vector<16x16x16xf32>
    %36 = vector.shape_cast %35 : vector<16x16x16xf32> to vector<256x16xf32>
    %c3 = arith.constant 3 : index
    %c0_39 = arith.constant 0 : index
    %c0_40 = arith.constant 0 : index
    %37 = vector.load %arg3[%c3, %c0_39, %c0_40] : memref<9x16x16xf32, #tpu.memory_space<vmem>>, vector<1x16x16xf32>
    %38 = vector.shape_cast %37 : vector<1x16x16xf32> to vector<16x16xf32>
    %cst_41 = arith.constant dense<0.000000e+00> : vector<256x16xf32>
    %39 = tpu.matmul %36, %38, %cst_41 {dimension_numbers = #tpu.dot_dimension_numbers<[1], [0], [0], [1], [0, 0, 1, 1], [], []>} : vector<256x16xf32>, vector<16x16xf32>, vector<256x16xf32> -> vector<256x16xf32>
    %40 = arith.addf %34, %39 : vector<256x16xf32>
    %c1_42 = arith.constant 1 : index
    %c1_43 = arith.constant 1 : index
    %c0_44 = arith.constant 0 : index
    %41 = vector.load %arg15[%c1_42, %c1_43, %c0_44] : memref<18x18x16xf32, #tpu.memory_space<vmem>>, vector<16x16x16xf32>
    %42 = vector.shape_cast %41 : vector<16x16x16xf32> to vector<256x16xf32>
    %c4 = arith.constant 4 : index
    %c0_45 = arith.constant 0 : index
    %c0_46 = arith.constant 0 : index
    %43 = vector.load %arg3[%c4, %c0_45, %c0_46] : memref<9x16x16xf32, #tpu.memory_space<vmem>>, vector<1x16x16xf32>
    %44 = vector.shape_cast %43 : vector<1x16x16xf32> to vector<16x16xf32>
    %cst_47 = arith.constant dense<0.000000e+00> : vector<256x16xf32>
    %45 = tpu.matmul %42, %44, %cst_47 {dimension_numbers = #tpu.dot_dimension_numbers<[1], [0], [0], [1], [0, 0, 1, 1], [], []>} : vector<256x16xf32>, vector<16x16xf32>, vector<256x16xf32> -> vector<256x16xf32>
    %46 = arith.addf %40, %45 : vector<256x16xf32>
    %c1_48 = arith.constant 1 : index
    %c2_49 = arith.constant 2 : index
    %c0_50 = arith.constant 0 : index
    %47 = vector.load %arg15[%c1_48, %c2_49, %c0_50] : memref<18x18x16xf32, #tpu.memory_space<vmem>>, vector<16x16x16xf32>
    %48 = vector.shape_cast %47 : vector<16x16x16xf32> to vector<256x16xf32>
    %c5 = arith.constant 5 : index
    %c0_51 = arith.constant 0 : index
    %c0_52 = arith.constant 0 : index
    %49 = vector.load %arg3[%c5, %c0_51, %c0_52] : memref<9x16x16xf32, #tpu.memory_space<vmem>>, vector<1x16x16xf32>
    %50 = vector.shape_cast %49 : vector<1x16x16xf32> to vector<16x16xf32>
    %cst_53 = arith.constant dense<0.000000e+00> : vector<256x16xf32>
    %51 = tpu.matmul %48, %50, %cst_53 {dimension_numbers = #tpu.dot_dimension_numbers<[1], [0], [0], [1], [0, 0, 1, 1], [], []>} : vector<256x16xf32>, vector<16x16xf32>, vector<256x16xf32> -> vector<256x16xf32>
    %52 = arith.addf %46, %51 : vector<256x16xf32>
    %c2_54 = arith.constant 2 : index
    %c0_55 = arith.constant 0 : index
    %c0_56 = arith.constant 0 : index
    %53 = vector.load %arg15[%c2_54, %c0_55, %c0_56] : memref<18x18x16xf32, #tpu.memory_space<vmem>>, vector<16x16x16xf32>
    %54 = vector.shape_cast %53 : vector<16x16x16xf32> to vector<256x16xf32>
    %c6 = arith.constant 6 : index
    %c0_57 = arith.constant 0 : index
    %c0_58 = arith.constant 0 : index
    %55 = vector.load %arg3[%c6, %c0_57, %c0_58] : memref<9x16x16xf32, #tpu.memory_space<vmem>>, vector<1x16x16xf32>
    %56 = vector.shape_cast %55 : vector<1x16x16xf32> to vector<16x16xf32>
    %cst_59 = arith.constant dense<0.000000e+00> : vector<256x16xf32>
    %57 = tpu.matmul %54, %56, %cst_59 {dimension_numbers = #tpu.dot_dimension_numbers<[1], [0], [0], [1], [0, 0, 1, 1], [], []>} : vector<256x16xf32>, vector<16x16xf32>, vector<256x16xf32> -> vector<256x16xf32>
    %58 = arith.addf %52, %57 : vector<256x16xf32>
    %c2_60 = arith.constant 2 : index
    %c1_61 = arith.constant 1 : index
    %c0_62 = arith.constant 0 : index
    %59 = vector.load %arg15[%c2_60, %c1_61, %c0_62] : memref<18x18x16xf32, #tpu.memory_space<vmem>>, vector<16x16x16xf32>
    %60 = vector.shape_cast %59 : vector<16x16x16xf32> to vector<256x16xf32>
    %c7 = arith.constant 7 : index
    %c0_63 = arith.constant 0 : index
    %c0_64 = arith.constant 0 : index
    %61 = vector.load %arg3[%c7, %c0_63, %c0_64] : memref<9x16x16xf32, #tpu.memory_space<vmem>>, vector<1x16x16xf32>
    %62 = vector.shape_cast %61 : vector<1x16x16xf32> to vector<16x16xf32>
    %cst_65 = arith.constant dense<0.000000e+00> : vector<256x16xf32>
    %63 = tpu.matmul %60, %62, %cst_65 {dimension_numbers = #tpu.dot_dimension_numbers<[1], [0], [0], [1], [0, 0, 1, 1], [], []>} : vector<256x16xf32>, vector<16x16xf32>, vector<256x16xf32> -> vector<256x16xf32>
    %64 = arith.addf %58, %63 : vector<256x16xf32>
    %c2_66 = arith.constant 2 : index
    %c2_67 = arith.constant 2 : index
    %c0_68 = arith.constant 0 : index
    %65 = vector.load %arg15[%c2_66, %c2_67, %c0_68] : memref<18x18x16xf32, #tpu.memory_space<vmem>>, vector<16x16x16xf32>
    %66 = vector.shape_cast %65 : vector<16x16x16xf32> to vector<256x16xf32>
    %c8 = arith.constant 8 : index
    %c0_69 = arith.constant 0 : index
    %c0_70 = arith.constant 0 : index
    %67 = vector.load %arg3[%c8, %c0_69, %c0_70] : memref<9x16x16xf32, #tpu.memory_space<vmem>>, vector<1x16x16xf32>
    %68 = vector.shape_cast %67 : vector<1x16x16xf32> to vector<16x16xf32>
    %cst_71 = arith.constant dense<0.000000e+00> : vector<256x16xf32>
    %69 = tpu.matmul %66, %68, %cst_71 {dimension_numbers = #tpu.dot_dimension_numbers<[1], [0], [0], [1], [0, 0, 1, 1], [], []>} : vector<256x16xf32>, vector<16x16xf32>, vector<256x16xf32> -> vector<256x16xf32>
    %70 = arith.addf %64, %69 : vector<256x16xf32>
    %c0_72 = arith.constant 0 : index
    %c0_73 = arith.constant 0 : index
    %71 = vector.load %arg8[%c0_72, %c0_73] : memref<1x16xf32, #tpu.memory_space<vmem>>, vector<1x16xf32>
    %72 = vector.broadcast %71 : vector<1x16xf32> to vector<256x16xf32>
    %73 = arith.mulf %70, %72 : vector<256x16xf32>
    %c0_74 = arith.constant 0 : index
    %c0_75 = arith.constant 0 : index
    %74 = vector.load %arg9[%c0_74, %c0_75] : memref<1x16xf32, #tpu.memory_space<vmem>>, vector<1x16xf32>
    %75 = vector.broadcast %74 : vector<1x16xf32> to vector<256x16xf32>
    %76 = arith.addf %73, %75 : vector<256x16xf32>
    %cst_76 = arith.constant 0.000000e+00 : f32
    %77 = vector.broadcast %cst_76 : f32 to vector<256x16xf32>
    %78 = arith.maximumf %76, %77 : vector<256x16xf32>
    %c0_77 = arith.constant 0 : index
    %c0_78 = arith.constant 0 : index
    %79 = vector.load %arg4[%c0_77, %c0_78] : memref<16x64xf32, #tpu.memory_space<vmem>>, vector<16x64xf32>
    %cst_79 = arith.constant dense<0.000000e+00> : vector<256x64xf32>
    %80 = tpu.matmul %78, %79, %cst_79 {dimension_numbers = #tpu.dot_dimension_numbers<[1], [0], [0], [1], [0, 0, 1, 1], [], []>} : vector<256x16xf32>, vector<16x64xf32>, vector<256x64xf32> -> vector<256x64xf32>
    %c0_80 = arith.constant 0 : index
    %c0_81 = arith.constant 0 : index
    %81 = vector.load %arg10[%c0_80, %c0_81] : memref<1x64xf32, #tpu.memory_space<vmem>>, vector<1x64xf32>
    %82 = vector.broadcast %81 : vector<1x64xf32> to vector<256x64xf32>
    %83 = arith.mulf %80, %82 : vector<256x64xf32>
    %c0_82 = arith.constant 0 : index
    %c0_83 = arith.constant 0 : index
    %84 = vector.load %arg11[%c0_82, %c0_83] : memref<1x64xf32, #tpu.memory_space<vmem>>, vector<1x64xf32>
    %85 = vector.broadcast %84 : vector<1x64xf32> to vector<256x64xf32>
    %86 = arith.addf %83, %85 : vector<256x64xf32>
    %c0_84 = arith.constant 0 : index
    %c0_85 = arith.constant 0 : index
    %87 = vector.load %arg5[%c0_84, %c0_85] : memref<4x64xf32, #tpu.memory_space<vmem>>, vector<4x64xf32>
    %cst_86 = arith.constant dense<0.000000e+00> : vector<256x64xf32>
    %88 = tpu.matmul %1, %87, %cst_86 {dimension_numbers = #tpu.dot_dimension_numbers<[1], [0], [0], [1], [0, 0, 1, 1], [], []>} : vector<256x4xf32>, vector<4x64xf32>, vector<256x64xf32> -> vector<256x64xf32>
    %c0_87 = arith.constant 0 : index
    %c0_88 = arith.constant 0 : index
    %89 = vector.load %arg12[%c0_87, %c0_88] : memref<1x64xf32, #tpu.memory_space<vmem>>, vector<1x64xf32>
    %90 = vector.broadcast %89 : vector<1x64xf32> to vector<256x64xf32>
    %91 = arith.mulf %88, %90 : vector<256x64xf32>
    %c0_89 = arith.constant 0 : index
    %c0_90 = arith.constant 0 : index
    %92 = vector.load %arg13[%c0_89, %c0_90] : memref<1x64xf32, #tpu.memory_space<vmem>>, vector<1x64xf32>
    %93 = vector.broadcast %92 : vector<1x64xf32> to vector<256x64xf32>
    %94 = arith.addf %91, %93 : vector<256x64xf32>
    %95 = arith.addf %86, %94 : vector<256x64xf32>
    %cst_91 = arith.constant 0.000000e+00 : f32
    %96 = vector.broadcast %cst_91 : f32 to vector<256x64xf32>
    %97 = arith.maximumf %95, %96 : vector<256x64xf32>
    %c0_92 = arith.constant 0 : index
    %c0_93 = arith.constant 0 : index
    %c0_94 = arith.constant 0 : index
    %98 = vector.load %arg14[%c0_92, %c0_93, %c0_94] : memref<1x256x64xf32, #tpu.memory_space<vmem>>, vector<1x256x64xf32>
    %99 = vector.shape_cast %98 : vector<1x256x64xf32> to vector<256x64xf32>
    %100 = vector.shape_cast %97 : vector<256x64xf32> to vector<1x256x64xf32>
    tpu.vector_store %arg14[%c0_92, %c0_93, %c0_94], %100 {strides = array<i32>} : memref<1x256x64xf32, #tpu.memory_space<vmem>>, vector<1x256x64xf32>,
    return
  }
  func.func @transform_0(%arg0: i32) -> (i32, i32, i32) {
    %c0_i32 = arith.constant 0 : i32
    %c0_i32_0 = arith.constant 0 : i32
    %c0_i32_1 = arith.constant 0 : i32
    return %arg0, %c0_i32, %c0_i32_0 : i32, i32, i32
  }
  func.func @transform_1(%arg0: i32) -> (i32, i32) {
    %c0_i32 = arith.constant 0 : i32
    %c0_i32_0 = arith.constant 0 : i32
    %c0_i32_1 = arith.constant 0 : i32
    return %c0_i32, %c0_i32_0 : i32, i32
  }
  func.func @transform_2(%arg0: i32) -> (i32, i32, i32) {
    %c0_i32 = arith.constant 0 : i32
    %c0_i32_0 = arith.constant 0 : i32
    %c0_i32_1 = arith.constant 0 : i32
    %c0_i32_2 = arith.constant 0 : i32
    return %c0_i32, %c0_i32_0, %c0_i32_1 : i32, i32, i32
  }
  func.func @transform_3(%arg0: i32) -> (i32, i32) {
    %c0_i32 = arith.constant 0 : i32
    %c0_i32_0 = arith.constant 0 : i32
    %c0_i32_1 = arith.constant 0 : i32
    return %c0_i32, %c0_i32_0 : i32, i32
  }
  func.func @transform_4(%arg0: i32) -> (i32, i32) {
    %c0_i32 = arith.constant 0 : i32
    %c0_i32_0 = arith.constant 0 : i32
    %c0_i32_1 = arith.constant 0 : i32
    return %c0_i32, %c0_i32_0 : i32, i32
  }
  func.func @transform_5(%arg0: i32) -> (i32, i32) {
    %c0_i32 = arith.constant 0 : i32
    %c0_i32_0 = arith.constant 0 : i32
    %c0_i32_1 = arith.constant 0 : i32
    return %c0_i32, %c0_i32_0 : i32, i32
  }
  func.func @transform_6(%arg0: i32) -> (i32, i32) {
    %c0_i32 = arith.constant 0 : i32
    %c0_i32_0 = arith.constant 0 : i32
    %c0_i32_1 = arith.constant 0 : i32
    return %c0_i32, %c0_i32_0 : i32, i32
  }
  func.func @transform_7(%arg0: i32) -> (i32, i32) {
    %c0_i32 = arith.constant 0 : i32
    %c0_i32_0 = arith.constant 0 : i32
    %c0_i32_1 = arith.constant 0 : i32
    return %c0_i32, %c0_i32_0 : i32, i32
  }
  func.func @transform_8(%arg0: i32) -> (i32, i32) {
    %c0_i32 = arith.constant 0 : i32
    %c0_i32_0 = arith.constant 0 : i32
    %c0_i32_1 = arith.constant 0 : i32
    return %c0_i32, %c0_i32_0 : i32, i32
  }
  func.func @transform_9(%arg0: i32) -> (i32, i32) {
    %c0_i32 = arith.constant 0 : i32
    %c0_i32_0 = arith.constant 0 : i32
    %c0_i32_1 = arith.constant 0 : i32
    return %c0_i32, %c0_i32_0 : i32, i32
  }
  func.func @transform_10(%arg0: i32) -> (i32, i32) {
    %c0_i32 = arith.constant 0 : i32
    %c0_i32_0 = arith.constant 0 : i32
    %c0_i32_1 = arith.constant 0 : i32
    return %c0_i32, %c0_i32_0 : i32, i32
  }
  func.func @transform_11(%arg0: i32) -> (i32, i32) {
    %c0_i32 = arith.constant 0 : i32
    %c0_i32_0 = arith.constant 0 : i32
    %c0_i32_1 = arith.constant 0 : i32
    return %c0_i32, %c0_i32_0 : i32, i32
  }
  func.func @transform_12(%arg0: i32) -> (i32, i32) {
    %c0_i32 = arith.constant 0 : i32
    %c0_i32_0 = arith.constant 0 : i32
    %c0_i32_1 = arith.constant 0 : i32
    return %c0_i32, %c0_i32_0 : i32, i32
  }
  func.func @transform_13(%arg0: i32) -> (i32, i32, i32) {
    %c0_i32 = arith.constant 0 : i32
    %c0_i32_0 = arith.constant 0 : i32
    %c0_i32_1 = arith.constant 0 : i32
    return %arg0, %c0_i32, %c0_i32_0 : i32, i32, i32
  }
}

</mosaic_0001>

<llo_original>
// kernel: residual_unit_forward.1
$region0: #{residual_unit_forward.1}
  #allocation0 [shape = 'u32[]', space=smem, size = 0x4, offset = 0x4, fixed_abs, tag = 'smem constant byte address 0x4 - core index']
  #allocation1 [shape = 'u32[72,128]{1,0:T(1,128)}', space=vmem, size = 0x9000, scoped, tag = 'internal scratch']
  #allocation2 [shape = 'f32[18,18,16]{2,1,0:T(8,128)}', space=vmem, size = 0x36000, scoped, tag = 'scratch operand']
  %s0 = inlined_call_operand.vmem [shape: f32[2,256,4], index: 0, kind: input, shape index: {}]
  %s1 = inlined_call_operand.vmem [shape: f32[4,16], index: 1, kind: input, shape index: {}]
  %s2 = inlined_call_operand.vmem [shape: f32[9,16,16], index: 2, kind: input, shape index: {}]
  %s3 = inlined_call_operand.vmem [shape: f32[16,64], index: 3, kind: input, shape index: {}]
  %s4 = inlined_call_operand.vmem [shape: f32[4,64], index: 4, kind: input, shape index: {}]
  %s5 = inlined_call_operand.vmem [shape: f32[1,16], index: 5, kind: input, shape index: {}]
  %s6 = inlined_call_operand.vmem [shape: f32[1,16], index: 6, kind: input, shape index: {}]
  %s7 = inlined_call_operand.vmem [shape: f32[1,16], index: 7, kind: input, shape index: {}]
  %s8 = inlined_call_operand.vmem [shape: f32[1,16], index: 8, kind: input, shape index: {}]
  %s9 = inlined_call_operand.vmem [shape: f32[1,64], index: 9, kind: input, shape index: {}]
  %s10 = inlined_call_operand.vmem [shape: f32[1,64], index: 10, kind: input, shape index: {}]
  %s11 = inlined_call_operand.vmem [shape: f32[1,64], index: 11, kind: input, shape index: {}]
  %s12 = inlined_call_operand.vmem [shape: f32[1,64], index: 12, kind: input, shape index: {}]
  %s13 = inlined_call_operand.hbm [shape: f32[2,256,64], index: 13, kind: output, shape index: {}]
  %s14 = sld [smem:[#allocation0]]
  $region85: #{residual_unit_forward.1} parent=0
    _
  %s16 = ssub.s32 1, %s14
  %s17 = scalar_select 0, %s16, %s14
  $region1: #{residual_unit_forward.1} parent=0
    #allocation3 [shape = 'u8[262144]{0}', space=vmem, size = 0x40000, scoped, tag = 'output window, operand 0']
    #allocation4 [shape = 's32[2]{0}', space=sflag, size = 0x8, scoped, tag = 'scoped memory for residual_unit_forward.1']
    %18 = vsyncpa [#allocation4], 0
    %s19 = scalar_lea.sflag [#allocation4], 1
    %20 = vsyncpa %s19, 0
    loop: start=0, step=1, limit=4
    $region2: #{residual_unit_forward.1} parent=1 // loop_pre_header
      _
    $region3: #{residual_unit_forward.1} parent=1 // loop_header
      %s22 = sphi 0, %s26
      %p23 = scmp.ge.s32.totalorder %s22, 4
      %s32 = sphi 0, %s34
      %s35 = sphi 0, %s32
      %s36 = sphi 0, %s35
      %s52 = sphi 0, %s36
      %s56 = sphi 0, %s56
      %s58 = sphi 0, %s56
      %s59 = sphi 0, %s58
      %s73 = sphi 0, %s59
      %s77 = sphi 0, %s77
      %s79 = sphi 0, %s77
      %s80 = sphi 0, %s79
      %s94 = sphi 0, %s80
      %s98 = sphi 0, %s98
      %s100 = sphi 0, %s98
      %s101 = sphi 0, %s100
      %s115 = sphi 0, %s101
      %s119 = sphi 0, %s119
      %s121 = sphi 0, %s119
      %s122 = sphi 0, %s121
      %s136 = sphi 0, %s122
      %s140 = sphi 0, %s140
      %s142 = sphi 0, %s140
      %s143 = sphi 0, %s142
      %s157 = sphi 0, %s143
      %s161 = sphi 0, %s161
      %s163 = sphi 0, %s161
      %s164 = sphi 0, %s163
      %s178 = sphi 0, %s164
      %s182 = sphi 0, %s182
      %s184 = sphi 0, %s182
      %s185 = sphi 0, %s184
      %s199 = sphi 0, %s185
      %s203 = sphi 0, %s203
      %s205 = sphi 0, %s203
      %s206 = sphi 0, %s205
      %s220 = sphi 0, %s206
      %s224 = sphi 0, %s224
      %s226 = sphi 0, %s224
      %s227 = sphi 0, %s226
      %s241 = sphi 0, %s227
      %s245 = sphi 0, %s245
      %s247 = sphi 0, %s245
      %s248 = sphi 0, %s247
      %s262 = sphi 0, %s248
      %s266 = sphi 0, %s266
      %s268 = sphi 0, %s266
      %s269 = sphi 0, %s268
      %s283 = sphi 0, %s269
      %s287 = sphi 0, %s287
      %s289 = sphi 0, %s287
      %s290 = sphi 0, %s289
      %s304 = sphi 0, %s290
      %s310 = sphi 0, %s312
      %s313 = sphi 0, %s310
      %s314 = sphi 0, %s313
      %s330 = sphi 0, %s314
    $region4: #{residual_unit_forward.1} parent=1 // loop_header_branch
      %25 = sbr.rel (%p23) target = $region8
    $region5: #{residual_unit_forward.1} parent=1 // loop_body
      %s27 = ssub.s32 %s22, 1
      %s28 = ssub.s32 %s22, 2
      %s29 = sadd.s32 %s22, 1
      %s30 = ssub.s32 %s22, %s29
      %p31 = scmp.eq.s32.totalorder %s30, 0
      %s33 = sadd.s32 %s32, 1
      %s34 = scalar_select %p31, %s32, %s33
      %p37 = pneg %p31
      %p38 = scmp.eq.s32.totalorder %s22, 1
      %p39 = por %p37, %p38
      %p40 = scmp.ne.s32.totalorder %s32, %s35
      %p41 = scmp.eq.s32.totalorder %s22, 0
      %p42 = por %p40, %p41
      %p43 = scmp.ne.s32.totalorder %s32, %s35
      %p44 = scmp.eq.s32.totalorder %s27, 1
      %p45 = por %p43, %p44
      %p46 = scmp.ne.s32.totalorder %s35, %s36
      %p47 = scmp.eq.s32.totalorder %s27, 0
      %p48 = por %p46, %p47
      %p49 = scmp.ne.s32.totalorder %s35, %s36
      %p50 = scmp.eq.s32.totalorder %s28, 1
      %p51 = por %p49, %p50
      %p53 = scmp.ne.s32.totalorder %s36, %s52
      %p54 = scmp.eq.s32.totalorder %s28, 0
      %p55 = por %p53, %p54
      %s57 = sadd.s32 %s56, 1
      %p60 = scmp.eq.s32.totalorder %s22, 1
      %p61 = scmp.ne.s32.totalorder %s56, %s58
      %p62 = scmp.eq.s32.totalorder %s22, 0
      %p63 = por %p61, %p62
      %p64 = scmp.ne.s32.totalorder %s56, %s58
      %p65 = scmp.eq.s32.totalorder %s27, 1
      %p66 = por %p64, %p65
      %p67 = scmp.ne.s32.totalorder %s58, %s59
      %p68 = scmp.eq.s32.totalorder %s27, 0
      %p69 = por %p67, %p68
      %p70 = scmp.ne.s32.totalorder %s58, %s59
      %p71 = scmp.eq.s32.totalorder %s28, 1
      %p72 = por %p70, %p71
      %p74 = scmp.ne.s32.totalorder %s59, %s73
      %p75 = scmp.eq.s32.totalorder %s28, 0
      %p76 = por %p74, %p75
      %s78 = sadd.s32 %s77, 1
      %p81 = scmp.eq.s32.totalorder %s22, 1
      %p82 = scmp.ne.s32.totalorder %s77, %s79
      %p83 = scmp.eq.s32.totalorder %s22, 0
      %p84 = por %p82, %p83
      %p85 = scmp.ne.s32.totalorder %s77, %s79
      %p86 = scmp.eq.s32.totalorder %s27, 1
      %p87 = por %p85, %p86
      %p88 = scmp.ne.s32.totalorder %s79, %s80
      %p89 = scmp.eq.s32.totalorder %s27, 0
      %p90 = por %p88, %p89
      %p91 = scmp.ne.s32.totalorder %s79, %s80
      %p92 = scmp.eq.s32.totalorder %s28, 1
      %p93 = por %p91, %p92
      %p95 = scmp.ne.s32.totalorder %s80, %s94
      %p96 = scmp.eq.s32.totalorder %s28, 0
      %p97 = por %p95, %p96
      %s99 = sadd.s32 %s98, 1
      %p102 = scmp.eq.s32.totalorder %s22, 1
      %p103 = scmp.ne.s32.totalorder %s98, %s100
      %p104 = scmp.eq.s32.totalorder %s22, 0
      %p105 = por %p103, %p104
      %p106 = scmp.ne.s32.totalorder %s98, %s100
      %p107 = scmp.eq.s32.totalorder %s27, 1
      %p108 = por %p106, %p107
      %p109 = scmp.ne.s32.totalorder %s100, %s101
      %p110 = scmp.eq.s32.totalorder %s27, 0
      %p111 = por %p109, %p110
      %p112 = scmp.ne.s32.totalorder %s100, %s101
      %p113 = scmp.eq.s32.totalorder %s28, 1
      %p114 = por %p112, %p113
      %p116 = scmp.ne.s32.totalorder %s101, %s115
      %p117 = scmp.eq.s32.totalorder %s28, 0
      %p118 = por %p116, %p117
      %s120 = sadd.s32 %s119, 1
      %p123 = scmp.eq.s32.totalorder %s22, 1
      %p124 = scmp.ne.s32.totalorder %s119, %s121
      %p125 = scmp.eq.s32.totalorder %s22, 0
      %p126 = por %p124, %p125
      %p127 = scmp.ne.s32.totalorder %s119, %s121
      %p128 = scmp.eq.s32.totalorder %s27, 1
      %p129 = por %p127, %p128
      %p130 = scmp.ne.s32.totalorder %s121, %s122
      %p131 = scmp.eq.s32.totalorder %s27, 0
      %p132 = por %p130, %p131
      %p133 = scmp.ne.s32.totalorder %s121, %s122
      %p134 = scmp.eq.s32.totalorder %s28, 1
      %p135 = por %p133, %p134
      %p137 = scmp.ne.s32.totalorder %s122, %s136
      %p138 = scmp.eq.s32.totalorder %s28, 0
      %p139 = por %p137, %p138
      %s141 = sadd.s32 %s140, 1
      %p144 = scmp.eq.s32.totalorder %s22, 1
      %p145 = scmp.ne.s32.totalorder %s140, %s142
      %p146 = scmp.eq.s32.totalorder %s22, 0
      %p147 = por %p145, %p146
      %p148 = scmp.ne.s32.totalorder %s140, %s142
      %p149 = scmp.eq.s32.totalorder %s27, 1
      %p150 = por %p148, %p149
      %p151 = scmp.ne.s32.totalorder %s142, %s143
      %p152 = scmp.eq.s32.totalorder %s27, 0
      %p153 = por %p151, %p152
      %p154 = scmp.ne.s32.totalorder %s142, %s143
      %p155 = scmp.eq.s32.totalorder %s28, 1
      %p156 = por %p154, %p155
      %p158 = scmp.ne.s32.totalorder %s143, %s157
      %p159 = scmp.eq.s32.totalorder %s28, 0
      %p160 = por %p158, %p159
      %s162 = sadd.s32 %s161, 1
      %p165 = scmp.eq.s32.totalorder %s22, 1
      %p166 = scmp.ne.s32.totalorder %s161, %s163
      %p167 = scmp.eq.s32.totalorder %s22, 0
      %p168 = por %p166, %p167
      %p169 = scmp.ne.s32.totalorder %s161, %s163
      %p170 = scmp.eq.s32.totalorder %s27, 1
      %p171 = por %p169, %p170
      %p172 = scmp.ne.s32.totalorder %s163, %s164
      %p173 = scmp.eq.s32.totalorder %s27, 0
      %p174 = por %p172, %p173
      %p175 = scmp.ne.s32.totalorder %s163, %s164
      %p176 = scmp.eq.s32.totalorder %s28, 1
      %p177 = por %p175, %p176
      %p179 = scmp.ne.s32.totalorder %s164, %s178
      %p180 = scmp.eq.s32.totalorder %s28, 0
      %p181 = por %p179, %p180
      %s183 = sadd.s32 %s182, 1
      %p186 = scmp.eq.s32.totalorder %s22, 1
      %p187 = scmp.ne.s32.totalorder %s182, %s184
      %p188 = scmp.eq.s32.totalorder %s22, 0
      %p189 = por %p187, %p188
      %p190 = scmp.ne.s32.totalorder %s182, %s184
      %p191 = scmp.eq.s32.totalorder %s27, 1
      %p192 = por %p190, %p191
      %p193 = scmp.ne.s32.totalorder %s184, %s185
      %p194 = scmp.eq.s32.totalorder %s27, 0
      %p195 = por %p193, %p194
      %p196 = scmp.ne.s32.totalorder %s184, %s185
      %p197 = scmp.eq.s32.totalorder %s28, 1
      %p198 = por %p196, %p197
      %p200 = scmp.ne.s32.totalorder %s185, %s199
      %p201 = scmp.eq.s32.totalorder %s28, 0
      %p202 = por %p200, %p201
      %s204 = sadd.s32 %s203, 1
      %p207 = scmp.eq.s32.totalorder %s22, 1
      %p208 = scmp.ne.s32.totalorder %s203, %s205
      %p209 = scmp.eq.s32.totalorder %s22, 0
      %p210 = por %p208, %p209
      %p211 = scmp.ne.s32.totalorder %s203, %s205
      %p212 = scmp.eq.s32.totalorder %s27, 1
      %p213 = por %p211, %p212
      %p214 = scmp.ne.s32.totalorder %s205, %s206
      %p215 = scmp.eq.s32.totalorder %s27, 0
      %p216 = por %p214, %p215
      %p217 = scmp.ne.s32.totalorder %s205, %s206
      %p218 = scmp.eq.s32.totalorder %s28, 1
      %p219 = por %p217, %p218
      %p221 = scmp.ne.s32.totalorder %s206, %s220
      %p222 = scmp.eq.s32.totalorder %s28, 0
      %p223 = por %p221, %p222
      %s225 = sadd.s32 %s224, 1
      %p228 = scmp.eq.s32.totalorder %s22, 1
      %p229 = scmp.ne.s32.totalorder %s224, %s226
      %p230 = scmp.eq.s32.totalorder %s22, 0
      %p231 = por %p229, %p230
      %p232 = scmp.ne.s32.totalorder %s224, %s226
      %p233 = scmp.eq.s32.totalorder %s27, 1
      %p234 = por %p232, %p233
      %p235 = scmp.ne.s32.totalorder %s226, %s227
      %p236 = scmp.eq.s32.totalorder %s27, 0
      %p237 = por %p235, %p236
      %p238 = scmp.ne.s32.totalorder %s226, %s227
      %p239 = scmp.eq.s32.totalorder %s28, 1
      %p240 = por %p238, %p239
      %p242 = scmp.ne.s32.totalorder %s227, %s241
      %p243 = scmp.eq.s32.totalorder %s28, 0
      %p244 = por %p242, %p243
      %s246 = sadd.s32 %s245, 1
      %p249 = scmp.eq.s32.totalorder %s22, 1
      %p250 = scmp.ne.s32.totalorder %s245, %s247
      %p251 = scmp.eq.s32.totalorder %s22, 0
      %p252 = por %p250, %p251
      %p253 = scmp.ne.s32.totalorder %s245, %s247
      %p254 = scmp.eq.s32.totalorder %s27, 1
      %p255 = por %p253, %p254
      %p256 = scmp.ne.s32.totalorder %s247, %s248
      %p257 = scmp.eq.s32.totalorder %s27, 0
      %p258 = por %p256, %p257
      %p259 = scmp.ne.s32.totalorder %s247, %s248
      %p260 = scmp.eq.s32.totalorder %s28, 1
      %p261 = por %p259, %p260
      %p263 = scmp.ne.s32.totalorder %s248, %s262
      %p264 = scmp.eq.s32.totalorder %s28, 0
      %p265 = por %p263, %p264
      %s267 = sadd.s32 %s266, 1
      %p270 = scmp.eq.s32.totalorder %s22, 1
      %p271 = scmp.ne.s32.totalorder %s266, %s268
      %p272 = scmp.eq.s32.totalorder %s22, 0
      %p273 = por %p271, %p272
      %p274 = scmp.ne.s32.totalorder %s266, %s268
      %p275 = scmp.eq.s32.totalorder %s27, 1
      %p276 = por %p274, %p275
      %p277 = scmp.ne.s32.totalorder %s268, %s269
      %p278 = scmp.eq.s32.totalorder %s27, 0
      %p279 = por %p277, %p278
      %p280 = scmp.ne.s32.totalorder %s268, %s269
      %p281 = scmp.eq.s32.totalorder %s28, 1
      %p282 = por %p280, %p281
      %p284 = scmp.ne.s32.totalorder %s269, %s283
      %p285 = scmp.eq.s32.totalorder %s28, 0
      %p286 = por %p284, %p285
      %s288 = sadd.s32 %s287, 1
      %p291 = scmp.eq.s32.totalorder %s22, 1
      %p292 = scmp.ne.s32.totalorder %s287, %s289
      %p293 = scmp.eq.s32.totalorder %s22, 0
      %p294 = por %p292, %p293
      %p295 = scmp.ne.s32.totalorder %s287, %s289
      %p296 = scmp.eq.s32.totalorder %s27, 1
      %p297 = por %p295, %p296
      %p298 = scmp.ne.s32.totalorder %s289, %s290
      %p299 = scmp.eq.s32.totalorder %s27, 0
      %p300 = por %p298, %p299
      %p301 = scmp.ne.s32.totalorder %s289, %s290
      %p302 = scmp.eq.s32.totalorder %s28, 1
      %p303 = por %p301, %p302
      %p305 = scmp.ne.s32.totalorder %s290, %s304
      %p306 = scmp.eq.s32.totalorder %s28, 0
      %p307 = por %p305, %p306
      %s308 = ssub.s32 %s22, %s29
      %p309 = scmp.eq.s32.totalorder %s308, 0
      %s311 = sadd.s32 %s310, 1
      %s312 = scalar_select %p309, %s310, %s311
      %p315 = pneg %p309
      %p316 = scmp.eq.s32.totalorder %s22, 1
      %p317 = por %p315, %p316
      %p318 = scmp.ne.s32.totalorder %s310, %s313
      %p319 = scmp.eq.s32.totalorder %s22, 0
      %p320 = por %p318, %p319
      %p321 = scmp.ne.s32.totalorder %s310, %s313
      %p322 = scmp.eq.s32.totalorder %s27, 1
      %p323 = por %p321, %p322
      %p324 = scmp.ne.s32.totalorder %s313, %s314
      %p325 = scmp.eq.s32.totalorder %s27, 0
      %p326 = por %p324, %p325
      %p327 = scmp.ne.s32.totalorder %s313, %s314
      %p328 = scmp.eq.s32.totalorder %s28, 1
      %p329 = por %p327, %p328
      %p331 = scmp.ne.s32.totalorder %s314, %s330
      %p332 = scmp.eq.s32.totalorder %s28, 0
      %p333 = por %p331, %p332
      %p334 = scmp.le.s32.totalorder 1, %s22
      %p335 = scmp.lt.s32.totalorder %s22, 3
      %p336 = pnand %p334, %p335
      %p337 = pneg %p336
      // Predicated region
      $region9: #{residual_unit_forward.1} parent=5 // pred_check
        _
      $region10: #{residual_unit_forward.1} parent=5 // pred_check_branch
        %339 = sbr.rel (%p336) target = $region12
      $region11: #{residual_unit_forward.1} parent=5 // pred_region
        %s340 = ssub.s32 %s22, 1
        // Predicated region
        $region13: #{residual_unit_forward.1} parent=11 // pred_check
          %p341 = pneg %p69
        $region14: #{residual_unit_forward.1} parent=11 // pred_check_branch
          %343 = sbr.rel (%p341) target = $region16
        $region15: #{residual_unit_forward.1} parent=11 // pred_region
          _
        $region16: #{residual_unit_forward.1} parent=11 // pred_fallthru
          _
        // Predicated region
        $region17: #{residual_unit_forward.1} parent=11 // pred_check
          %p344 = pneg %p90
        $region18: #{residual_unit_forward.1} parent=11 // pred_check_branch
          %346 = sbr.rel (%p344) target = $region20
        $region19: #{residual_unit_forward.1} parent=11 // pred_region
          _
        $region20: #{residual_unit_forward.1} parent=11 // pred_fallthru
          _
        // Predicated region
        $region21: #{residual_unit_forward.1} parent=11 // pred_check
          %p347 = pneg %p111
        $region22: #{residual_unit_forward.1} parent=11 // pred_check_branch
          %349 = sbr.rel (%p347) target = $region24
        $region23: #{residual_unit_forward.1} parent=11 // pred_region
          _
        $region24: #{residual_unit_forward.1} parent=11 // pred_fallthru
          _
        // Predicated region
        $region25: #{residual_unit_forward.1} parent=11 // pred_check
          %p350 = pneg %p132
        $region26: #{residual_unit_forward.1} parent=11 // pred_check_branch
          %352 = sbr.rel (%p350) target = $region28
        $region27: #{residual_unit_forward.1} parent=11 // pred_region
          _
        $region28: #{residual_unit_forward.1} parent=11 // pred_fallthru
          _
        // Predicated region
        $region29: #{residual_unit_forward.1} parent=11 // pred_check
          %p353 = pneg %p153
        $region30: #{residual_unit_forward.1} parent=11 // pred_check_branch
          %355 = sbr.rel (%p353) target = $region32
        $region31: #{residual_unit_forward.1} parent=11 // pred_region
          _
        $region32: #{residual_unit_forward.1} parent=11 // pred_fallthru
          _
        // Predicated region
        $region33: #{residual_unit_forward.1} parent=11 // pred_check
          %p356 = pneg %p174
        $region34: #{residual_unit_forward.1} parent=11 // pred_check_branch
          %358 = sbr.rel (%p356) target = $region36
        $region35: #{residual_unit_forward.1} parent=11 // pred_region
          _
        $region36: #{residual_unit_forward.1} parent=11 // pred_fallthru
          _
        // Predicated region
        $region37: #{residual_unit_forward.1} parent=11 // pred_check
          %p359 = pneg %p195
        $region38: #{residual_unit_forward.1} parent=11 // pred_check_branch
          %361 = sbr.rel (%p359) target = $region40
        $region39: #{residual_unit_forward.1} parent=11 // pred_region
          _
        $region40: #{residual_unit_forward.1} parent=11 // pred_fallthru
          _
        // Predicated region
        $region41: #{residual_unit_forward.1} parent=11 // pred_check
          %p362 = pneg %p216
        $region42: #{residual_unit_forward.1} parent=11 // pred_check_branch
          %364 = sbr.rel (%p362) target = $region44
        $region43: #{residual_unit_forward.1} parent=11 // pred_region
          _
        $region44: #{residual_unit_forward.1} parent=11 // pred_fallthru
          _
        // Predicated region
        $region45: #{residual_unit_forward.1} parent=11 // pred_check
          %p365 = pneg %p237
        $region46: #{residual_unit_forward.1} parent=11 // pred_check_branch
          %367 = sbr.rel (%p365) target = $region48
        $region47: #{residual_unit_forward.1} parent=11 // pred_region
          _
        $region48: #{residual_unit_forward.1} parent=11 // pred_fallthru
          _
        // Predicated region
        $region49: #{residual_unit_forward.1} parent=11 // pred_check
          %p368 = pneg %p258
        $region50: #{residual_unit_forward.1} parent=11 // pred_check_branch
          %370 = sbr.rel (%p368) target = $region52
        $region51: #{residual_unit_forward.1} parent=11 // pred_region
          _
        $region52: #{residual_unit_forward.1} parent=11 // pred_fallthru
          _
        // Predicated region
        $region53: #{residual_unit_forward.1} parent=11 // pred_check
          %p371 = pneg %p279
        $region54: #{residual_unit_forward.1} parent=11 // pred_check_branch
          %373 = sbr.rel (%p371) target = $region56
        $region55: #{residual_unit_forward.1} parent=11 // pred_region
          _
        $region56: #{residual_unit_forward.1} parent=11 // pred_fallthru
          _
        // Predicated region
        $region57: #{residual_unit_forward.1} parent=11 // pred_check
          %p374 = pneg %p300
        $region58: #{residual_unit_forward.1} parent=11 // pred_check_branch
          %376 = sbr.rel (%p374) target = $region60
        $region59: #{residual_unit_forward.1} parent=11 // pred_region
          _
        $region60: #{residual_unit_forward.1} parent=11 // pred_fallthru
          _
      $region12: #{residual_unit_forward.1} parent=5 // pred_fallthru
        _
      %p377 = scmp.lt.s32.totalorder %s22, 2
      // Predicated region
      $region61: #{residual_unit_forward.1} parent=5 // pred_check
        %p378 = pneg %p377
      $region62: #{residual_unit_forward.1} parent=5 // pred_check_branch
        %380 = sbr.rel (%p378) target = $region64
      $region63: #{residual_unit_forward.1} parent=5 // pred_region
        // Predicated region
        $region65: #{residual_unit_forward.1} parent=63 // pred_check
          %p381 = pneg %p42
        $region66: #{residual_unit_forward.1} parent=63 // pred_check_branch
          %383 = sbr.rel (%p381) target = $region68
        $region67: #{residual_unit_forward.1} parent=63 // pred_region
          %p384 = scmp.lt.s32.totalorder %s22, 1
          %s385 = scalar_select %p384, %s22, 1
          %s386 = smul.addr %s385, 32
          %s387 = smul.addr %s386, 8
          %s388 = scalar_lea.vmem %s0, %s387
        $region68: #{residual_unit_forward.1} parent=63 // pred_fallthru
          _
      $region64: #{residual_unit_forward.1} parent=5 // pred_fallthru
        _
      %p389 = scmp.le.s32.totalorder 1, %s22
      %p390 = scmp.lt.s32.totalorder %s22, 3
      %p391 = pnand %p389, %p390
      %p392 = pneg %p391
      // Predicated region
      $region69: #{residual_unit_forward.1} parent=5 // pred_check
        _
      $region70: #{residual_unit_forward.1} parent=5 // pred_check_branch
        %394 = sbr.rel (%p391) target = $region72
      $region71: #{residual_unit_forward.1} parent=5 // pred_region
        %s395 = ssub.s32 %s22, 1
        %p396 = scmp.lt.s32.totalorder %s27, 1
        %s397 = scalar_select %p396, %s27, 1
        %s398 = smul.addr %s397, 32
        %s399 = smul.addr %s398, 8
        %s400 = scalar_lea.vmem %s0, %s399
        %p401 = pneg %p48
        %p402 = pneg %p45
        %p403 = pneg %p69
        %p404 = pneg %p66
        %p405 = pneg %p90
        %p406 = pneg %p87
        %p407 = pneg %p111
        %p408 = pneg %p108
        %p409 = pneg %p132
        %p410 = pneg %p129
        %p411 = pneg %p153
        %p412 = pneg %p150
        %p413 = pneg %p174
        %p414 = pneg %p171
        %p415 = pneg %p195
        %p416 = pneg %p192
        %p417 = pneg %p216
        %p418 = pneg %p213
        %p419 = pneg %p237
        %p420 = pneg %p234
        %p421 = pneg %p258
        %p422 = pneg %p255
        %p423 = pneg %p279
        %p424 = pneg %p276
        %p425 = pneg %p300
        %p426 = pneg %p297
        %p427 = pneg %p326
        %p428 = pneg %p323
        %s429 = sand.u32 %s313, 1
        %s430 = scalar_lea.sflag [#allocation4], %s429
        %s431 = sand.u32 %s313, 1
        %s432 = smul.addr %s431, 256
        %s433 = scalar_lea.vmem [#allocation3], %s432
        %p434 = scmp.lt.s32.totalorder %s27, 1
        %s435 = scalar_select %p434, %s27, 1
        %s436 = smul.addr %s435, 32
        %s437 = smul.addr %s436, 8
        %s438 = scalar_lea.vmem %s0, %s437
        %v439 = vld [vmem:[%s438] sm:$0xff]
        %v440 = vld [vmem:[%s438 + $0x8] sm:$0xff]
        %v441 = vld [vmem:[%s438 + $0x10] sm:$0xff]
        %v442 = vld [vmem:[%s438 + $0x18] sm:$0xff]
        %v443 = vld [vmem:[%s438 + $0x20] sm:$0xff]
        %v444 = vld [vmem:[%s438 + $0x28] sm:$0xff]
        %v445 = vld [vmem:[%s438 + $0x30] sm:$0xff]
        %v446 = vld [vmem:[%s438 + $0x38] sm:$0xff]
        %v447 = vld [vmem:[%s438 + $0x40] sm:$0xff]
        %v448 = vld [vmem:[%s438 + $0x48] sm:$0xff]
        %v449 = vld [vmem:[%s438 + $0x50] sm:$0xff]
        %v450 = vld [vmem:[%s438 + $0x58] sm:$0xff]
        %v451 = vld [vmem:[%s438 + $0x60] sm:$0xff]
        %v452 = vld [vmem:[%s438 + $0x68] sm:$0xff]
        %v453 = vld [vmem:[%s438 + $0x70] sm:$0xff]
        %v454 = vld [vmem:[%s438 + $0x78] sm:$0xff]
        %v455 = vld [vmem:[%s438 + $0x80] sm:$0xff]
        %v456 = vld [vmem:[%s438 + $0x88] sm:$0xff]
        %v457 = vld [vmem:[%s438 + $0x90] sm:$0xff]
        %v458 = vld [vmem:[%s438 + $0x98] sm:$0xff]
        %v459 = vld [vmem:[%s438 + $0xa0] sm:$0xff]
        %v460 = vld [vmem:[%s438 + $0xa8] sm:$0xff]
        %v461 = vld [vmem:[%s438 + $0xb0] sm:$0xff]
        %v462 = vld [vmem:[%s438 + $0xb8] sm:$0xff]
        %v463 = vld [vmem:[%s438 + $0xc0] sm:$0xff]
        %v464 = vld [vmem:[%s438 + $0xc8] sm:$0xff]
        %v465 = vld [vmem:[%s438 + $0xd0] sm:$0xff]
        %v466 = vld [vmem:[%s438 + $0xd8] sm:$0xff]
        %v467 = vld [vmem:[%s438 + $0xe0] sm:$0xff]
        %v468 = vld [vmem:[%s438 + $0xe8] sm:$0xff]
        %v469 = vld [vmem:[%s438 + $0xf0] sm:$0xff]
        %v470 = vld [vmem:[%s438 + $0xf8] sm:$0xff]
        %v471 = vld [vmem:[%s1] sm:$0xf]
        %vm472 = vcmask 31744
        %v474 = vsel %vm472, %v439, 0
        %v477 = vsel %vm472, %v440, 0
        %v480 = vsel %vm472, %v441, 0
        %v483 = vsel %vm472, %v442, 0
        %v486 = vsel %vm472, %v443, 0
        %v489 = vsel %vm472, %v444, 0
        %v492 = vsel %vm472, %v445, 0
        %v495 = vsel %vm472, %v446, 0
        %v498 = vsel %vm472, %v447, 0
        %v501 = vsel %vm472, %v448, 0
        %v504 = vsel %vm472, %v449, 0
        %v507 = vsel %vm472, %v450, 0
        %v510 = vsel %vm472, %v451, 0
        %v513 = vsel %vm472, %v452, 0
        %v516 = vsel %vm472, %v453, 0
        %v519 = vsel %vm472, %v454, 0
        %v522 = vsel %vm472, %v455, 0
        %v525 = vsel %vm472, %v456, 0
        %v528 = vsel %vm472, %v457, 0
        %v531 = vsel %vm472, %v458, 0
        %v534 = vsel %vm472, %v459, 0
        %v537 = vsel %vm472, %v460, 0
        %v540 = vsel %vm472, %v461, 0
        %v543 = vsel %vm472, %v462, 0
        %v546 = vsel %vm472, %v463, 0
        %v549 = vsel %vm472, %v464, 0
        %v552 = vsel %vm472, %v465, 0
        %v555 = vsel %vm472, %v466, 0
        %v558 = vsel %vm472, %v467, 0
        %v561 = vsel %vm472, %v468, 0
        %v564 = vsel %vm472, %v469, 0
        %v567 = vsel %vm472, %v470, 0
        %vm569 = vcmask 1043456
        %v571 = vsel %vm569, %v471, 0
        %573 = vmatpush.msra.mxu0 0.0
        %574 = vmatpush.msra.mxu0 0.0
        %575 = vmatpush.msra.mxu0 0.0
        %576 = vmatpush.msra.mxu0 0.0
        %577 = vmatpush.msra.mxu0 0.0
        %578 = vmatpush.msra.mxu0 0.0
        %579 = vmatpush.msra.mxu0 0.0
        %580 = vmatpush.msra.mxu0 0.0
        %581 = vmatpush.msra.mxu0 0.0
        %582 = vmatpush.msra.mxu0 0.0
        %583 = vmatpush.msra.mxu0 0.0
        %584 = vmatpush.msra.mxu0 0.0
        %585 = vmatpush.msra.mxu0 0.0
        %586 = vmatpush.msra.mxu0 0.0
        %587 = vmatpush.msra.mxu0 0.0
        %588 = vmatpush.msra.mxu0 %v571
        %589 = vmatmul.f32.gmra.mxu0 %v474
        %v590 = vpop.f32.mrf.mxu0
        %v591 = vadd.f32 0.0, %v590
        %592 = vmatmul.f32.gmra.mxu0 %v477
        %v593 = vpop.f32.mrf.mxu0
        %v594 = vadd.f32 0.0, %v593
        %595 = vmatmul.f32.gmra.mxu0 %v480
        %v596 = vpop.f32.mrf.mxu0
        %v597 = vadd.f32 0.0, %v596
        %598 = vmatmul.f32.gmra.mxu0 %v483
        %v599 = vpop.f32.mrf.mxu0
        %v600 = vadd.f32 0.0, %v599
        %601 = vmatmul.f32.gmra.mxu0 %v486
        %v602 = vpop.f32.mrf.mxu0
        %v603 = vadd.f32 0.0, %v602
        %604 = vmatmul.f32.gmra.mxu0 %v489
        %v605 = vpop.f32.mrf.mxu0
        %v606 = vadd.f32 0.0, %v605
        %607 = vmatmul.f32.gmra.mxu0 %v492
        %v608 = vpop.f32.mrf.mxu0
        %v609 = vadd.f32 0.0, %v608
        %610 = vmatmul.f32.gmra.mxu0 %v495
        %v611 = vpop.f32.mrf.mxu0
        %v612 = vadd.f32 0.0, %v611
        %613 = vmatmul.f32.gmra.mxu0 %v498
        %v614 = vpop.f32.mrf.mxu0
        %v615 = vadd.f32 0.0, %v614
        %616 = vmatmul.f32.gmra.mxu0 %v501
        %v617 = vpop.f32.mrf.mxu0
        %v618 = vadd.f32 0.0, %v617
        %619 = vmatmul.f32.gmra.mxu0 %v504
        %v620 = vpop.f32.mrf.mxu0
        %v621 = vadd.f32 0.0, %v620
        %622 = vmatmul.f32.gmra.mxu0 %v507
        %v623 = vpop.f32.mrf.mxu0
        %v624 = vadd.f32 0.0, %v623
        %625 = vmatmul.f32.gmra.mxu0 %v510
        %v626 = vpop.f32.mrf.mxu0
        %v627 = vadd.f32 0.0, %v626
        %628 = vmatmul.f32.gmra.mxu0 %v513
        %v629 = vpop.f32.mrf.mxu0
        %v630 = vadd.f32 0.0, %v629
        %631 = vmatmul.f32.gmra.mxu0 %v516
        %v632 = vpop.f32.mrf.mxu0
        %v633 = vadd.f32 0.0, %v632
        %634 = vmatmul.f32.gmra.mxu0 %v519
        %v635 = vpop.f32.mrf.mxu0
        %v636 = vadd.f32 0.0, %v635
        %637 = vmatmul.f32.gmra.mxu0 %v522
        %v638 = vpop.f32.mrf.mxu0
        %v639 = vadd.f32 0.0, %v638
        %640 = vmatmul.f32.gmra.mxu0 %v525
        %v641 = vpop.f32.mrf.mxu0
        %v642 = vadd.f32 0.0, %v641
        %643 = vmatmul.f32.gmra.mxu0 %v528
        %v644 = vpop.f32.mrf.mxu0
        %v645 = vadd.f32 0.0, %v644
        %646 = vmatmul.f32.gmra.mxu0 %v531
        %v647 = vpop.f32.mrf.mxu0
        %v648 = vadd.f32 0.0, %v647
        %649 = vmatmul.f32.gmra.mxu0 %v534
        %v650 = vpop.f32.mrf.mxu0
        %v651 = vadd.f32 0.0, %v650
        %652 = vmatmul.f32.gmra.mxu0 %v537
        %v653 = vpop.f32.mrf.mxu0
        %v654 = vadd.f32 0.0, %v653
        %655 = vmatmul.f32.gmra.mxu0 %v540
        %v656 = vpop.f32.mrf.mxu0
        %v657 = vadd.f32 0.0, %v656
        %658 = vmatmul.f32.gmra.mxu0 %v543
        %v659 = vpop.f32.mrf.mxu0
        %v660 = vadd.f32 0.0, %v659
        %661 = vmatmul.f32.gmra.mxu0 %v546
        %v662 = vpop.f32.mrf.mxu0
        %v663 = vadd.f32 0.0, %v662
        %664 = vmatmul.f32.gmra.mxu0 %v549
        %v665 = vpop.f32.mrf.mxu0
        %v666 = vadd.f32 0.0, %v665
        %667 = vmatmul.f32.gmra.mxu0 %v552
        %v668 = vpop.f32.mrf.mxu0
        %v669 = vadd.f32 0.0, %v668
        %670 = vmatmul.f32.gmra.mxu0 %v555
        %v671 = vpop.f32.mrf.mxu0
        %v672 = vadd.f32 0.0, %v671
        %673 = vmatmul.f32.gmra.mxu0 %v558
        %v674 = vpop.f32.mrf.mxu0
        %v675 = vadd.f32 0.0, %v674
        %676 = vmatmul.f32.gmra.mxu0 %v561
        %v677 = vpop.f32.mrf.mxu0
        %v678 = vadd.f32 0.0, %v677
        %679 = vmatmul.f32.gmra.mxu0 %v564
        %v680 = vpop.f32.mrf.mxu0
        %v681 = vadd.f32 0.0, %v680
        %682 = vmatmul.f32.gmra.mxu0 %v567
        %v683 = vpop.f32.mrf.mxu0
        %v684 = vadd.f32 0.0, %v683
        %685 = vdwg.mxu0
        %v686 = vld [vmem:[%s5] sm:$0x1]
        %v688 = vperm.slane %v686, 0
        %v690 = vmul.f32 %v591, %v688
        %v691 = vmul.f32 %v594, %v688
        %v692 = vmul.f32 %v597, %v688
        %v693 = vmul.f32 %v600, %v688
        %v694 = vmul.f32 %v603, %v688
        %v695 = vmul.f32 %v606, %v688
        %v696 = vmul.f32 %v609, %v688
        %v697 = vmul.f32 %v612, %v688
        %v698 = vmul.f32 %v615, %v688
        %v699 = vmul.f32 %v618, %v688
        %v700 = vmul.f32 %v621, %v688
        %v701 = vmul.f32 %v624, %v688
        %v702 = vmul.f32 %v627, %v688
        %v703 = vmul.f32 %v630, %v688
        %v704 = vmul.f32 %v633, %v688
        %v705 = vmul.f32 %v636, %v688
        %v706 = vmul.f32 %v639, %v688
        %v707 = vmul.f32 %v642, %v688
        %v708 = vmul.f32 %v645, %v688
        %v709 = vmul.f32 %v648, %v688
        %v710 = vmul.f32 %v651, %v688
        %v711 = vmul.f32 %v654, %v688
        %v712 = vmul.f32 %v657, %v688
        %v713 = vmul.f32 %v660, %v688
        %v714 = vmul.f32 %v663, %v688
        %v715 = vmul.f32 %v666, %v688
        %v716 = vmul.f32 %v669, %v688
        %v717 = vmul.f32 %v672, %v688
        %v718 = vmul.f32 %v675, %v688
        %v719 = vmul.f32 %v678, %v688
        %v720 = vmul.f32 %v681, %v688
        %v721 = vmul.f32 %v684, %v688
        %v722 = vld [vmem:[%s6] sm:$0x1]
        %v724 = vperm.slane %v722, 0
        %v726 = vadd.f32 %v690, %v724
        %v727 = vadd.f32 %v691, %v724
        %v728 = vadd.f32 %v692, %v724
        %v729 = vadd.f32 %v693, %v724
        %v730 = vadd.f32 %v694, %v724
        %v731 = vadd.f32 %v695, %v724
        %v732 = vadd.f32 %v696, %v724
        %v733 = vadd.f32 %v697, %v724
        %v734 = vadd.f32 %v698, %v724
        %v735 = vadd.f32 %v699, %v724
        %v736 = vadd.f32 %v700, %v724
        %v737 = vadd.f32 %v701, %v724
        %v738 = vadd.f32 %v702, %v724
        %v739 = vadd.f32 %v703, %v724
        %v740 = vadd.f32 %v704, %v724
        %v741 = vadd.f32 %v705, %v724
        %v742 = vadd.f32 %v706, %v724
        %v743 = vadd.f32 %v707, %v724
        %v744 = vadd.f32 %v708, %v724
        %v745 = vadd.f32 %v709, %v724
        %v746 = vadd.f32 %v710, %v724
        %v747 = vadd.f32 %v711, %v724
        %v748 = vadd.f32 %v712, %v724
        %v749 = vadd.f32 %v713, %v724
        %v750 = vadd.f32 %v714, %v724
        %v751 = vadd.f32 %v715, %v724
        %v752 = vadd.f32 %v716, %v724
        %v753 = vadd.f32 %v717, %v724
        %v754 = vadd.f32 %v718, %v724
        %v755 = vadd.f32 %v719, %v724
        %v756 = vadd.f32 %v720, %v724
        %v757 = vadd.f32 %v721, %v724
        %v758 = vmax.f32 %v726, 0.0
        %v759 = vmax.f32 %v727, 0.0
        %v760 = vmax.f32 %v728, 0.0
        %v761 = vmax.f32 %v729, 0.0
        %v762 = vmax.f32 %v730, 0.0
        %v763 = vmax.f32 %v731, 0.0
        %v764 = vmax.f32 %v732, 0.0
        %v765 = vmax.f32 %v733, 0.0
        %v766 = vmax.f32 %v734, 0.0
        %v767 = vmax.f32 %v735, 0.0
        %v768 = vmax.f32 %v736, 0.0
        %v769 = vmax.f32 %v737, 0.0
        %v770 = vmax.f32 %v738, 0.0
        %v771 = vmax.f32 %v739, 0.0
        %v772 = vmax.f32 %v740, 0.0
        %v773 = vmax.f32 %v741, 0.0
        %v774 = vmax.f32 %v742, 0.0
        %v775 = vmax.f32 %v743, 0.0
        %v776 = vmax.f32 %v744, 0.0
        %v777 = vmax.f32 %v745, 0.0
        %v778 = vmax.f32 %v746, 0.0
        %v779 = vmax.f32 %v747, 0.0
        %v780 = vmax.f32 %v748, 0.0
        %v781 = vmax.f32 %v749, 0.0
        %v782 = vmax.f32 %v750, 0.0
        %v783 = vmax.f32 %v751, 0.0
        %v784 = vmax.f32 %v752, 0.0
        %v785 = vmax.f32 %v753, 0.0
        %v786 = vmax.f32 %v754, 0.0
        %v787 = vmax.f32 %v755, 0.0
        %v788 = vmax.f32 %v756, 0.0
        %v789 = vmax.f32 %v757, 0.0
        %vm790 = vcmask 130048
        %791 = vst.msk [vmem:[#allocation2] sm:$0xff] %vm790, 0.0
        %792 = vst.msk [vmem:[#allocation2 + $0x8] sm:$0xff] %vm790, 0.0
        %vm793 = vcmask 123904
        %794 = vst.msk [vmem:[#allocation2 + $0x10] sm:$0x3] %vm793, 0.0
        %795 = vst.msk [vmem:[#allocation2 + $0x18] sm:$0xff] %vm790, 0.0
        %796 = vst.msk [vmem:[#allocation2 + $0x20] sm:$0xff] %vm790, 0.0
        %797 = vst.msk [vmem:[#allocation2 + $0x28] sm:$0x3] %vm793, 0.0
        %798 = vst.msk [vmem:[#allocation2 + $0x30] sm:$0xff] %vm790, 0.0
        %799 = vst.msk [vmem:[#allocation2 + $0x38] sm:$0xff] %vm790, 0.0
        %800 = vst.msk [vmem:[#allocation2 + $0x40] sm:$0x3] %vm793, 0.0
        %801 = vst.msk [vmem:[#allocation2 + $0x48] sm:$0xff] %vm790, 0.0
        %802 = vst.msk [vmem:[#allocation2 + $0x50] sm:$0xff] %vm790, 0.0
        %803 = vst.msk [vmem:[#allocation2 + $0x58] sm:$0x3] %vm793, 0.0
        %804 = vst.msk [vmem:[#allocation2 + $0x60] sm:$0xff] %vm790, 0.0
        %805 = vst.msk [vmem:[#allocation2 + $0x68] sm:$0xff] %vm790, 0.0
        %806 = vst.msk [vmem:[#allocation2 + $0x70] sm:$0x3] %vm793, 0.0
        %807 = vst.msk [vmem:[#allocation2 + $0x78] sm:$0xff] %vm790, 0.0
        %808 = vst.msk [vmem:[#allocation2 + $0x80] sm:$0xff] %vm790, 0.0
        %809 = vst.msk [vmem:[#allocation2 + $0x88] sm:$0x3] %vm793, 0.0
        %810 = vst.msk [vmem:[#allocation2 + $0x90] sm:$0xff] %vm790, 0.0
        %811 = vst.msk [vmem:[#allocation2 + $0x98] sm:$0xff] %vm790, 0.0
        %812 = vst.msk [vmem:[#allocation2 + $0xa0] sm:$0x3] %vm793, 0.0
        %813 = vst.msk [vmem:[#allocation2 + $0xa8] sm:$0xff] %vm790, 0.0
        %814 = vst.msk [vmem:[#allocation2 + $0xb0] sm:$0xff] %vm790, 0.0
        %815 = vst.msk [vmem:[#allocation2 + $0xb8] sm:$0x3] %vm793, 0.0
        %816 = vst.msk [vmem:[#allocation2 + $0xc0] sm:$0xff] %vm790, 0.0
        %817 = vst.msk [vmem:[#allocation2 + $0xc8] sm:$0xff] %vm790, 0.0
        %818 = vst.msk [vmem:[#allocation2 + $0xd0] sm:$0x3] %vm793, 0.0
        %819 = vst.msk [vmem:[#allocation2 + $0xd8] sm:$0xff] %vm790, 0.0
        %820 = vst.msk [vmem:[#allocation2 + $0xe0] sm:$0xff] %vm790, 0.0
        %821 = vst.msk [vmem:[#allocation2 + $0xe8] sm:$0x3] %vm793, 0.0
        %822 = vst.msk [vmem:[#allocation2 + $0xf0] sm:$0xff] %vm790, 0.0
        %823 = vst.msk [vmem:[#allocation2 + $0xf8] sm:$0xff] %vm790, 0.0
        %824 = vst.msk [vmem:[#allocation2 + $0x100] sm:$0x3] %vm793, 0.0
        %825 = vst.msk [vmem:[#allocation2 + $0x108] sm:$0xff] %vm790, 0.0
        %826 = vst.msk [vmem:[#allocation2 + $0x110] sm:$0xff] %vm790, 0.0
        %827 = vst.msk [vmem:[#allocation2 + $0x118] sm:$0x3] %vm793, 0.0
        %828 = vst.msk [vmem:[#allocation2 + $0x120] sm:$0xff] %vm790, 0.0
        %829 = vst.msk [vmem:[#allocation2 + $0x128] sm:$0xff] %vm790, 0.0
        %830 = vst.msk [vmem:[#allocation2 + $0x130] sm:$0x3] %vm793, 0.0
        %831 = vst.msk [vmem:[#allocation2 + $0x138] sm:$0xff] %vm790, 0.0
        %832 = vst.msk [vmem:[#allocation2 + $0x140] sm:$0xff] %vm790, 0.0
        %833 = vst.msk [vmem:[#allocation2 + $0x148] sm:$0x3] %vm793, 0.0
        %834 = vst.msk [vmem:[#allocation2 + $0x150] sm:$0xff] %vm790, 0.0
        %835 = vst.msk [vmem:[#allocation2 + $0x158] sm:$0xff] %vm790, 0.0
        %836 = vst.msk [vmem:[#allocation2 + $0x160] sm:$0x3] %vm793, 0.0
        %837 = vst.msk [vmem:[#allocation2 + $0x168] sm:$0xff] %vm790, 0.0
        %838 = vst.msk [vmem:[#allocation2 + $0x170] sm:$0xff] %vm790, 0.0
        %839 = vst.msk [vmem:[#allocation2 + $0x178] sm:$0x3] %vm793, 0.0
        %840 = vst.msk [vmem:[#allocation2 + $0x180] sm:$0xff] %vm790, 0.0
        %841 = vst.msk [vmem:[#allocation2 + $0x188] sm:$0xff] %vm790, 0.0
        %842 = vst.msk [vmem:[#allocation2 + $0x190] sm:$0x3] %vm793, 0.0
        %843 = vst.msk [vmem:[#allocation2 + $0x198] sm:$0xff] %vm790, 0.0
        %844 = vst.msk [vmem:[#allocation2 + $0x1a0] sm:$0xff] %vm790, 0.0
        %845 = vst.msk [vmem:[#allocation2 + $0x1a8] sm:$0x3] %vm793, 0.0
        %s846 = scalar_lea.vmem [#allocation2], 24
        %847 = vst.msk [vmem:[%s846 + $0x1] sm:$0xff] %vm790, %v758
        %848 = vst.msk [vmem:[%s846 + $0x9] sm:$0xff] %vm790, %v759
        %849 = vst.msk [vmem:[%s846 + $0x19] sm:$0xff] %vm790, %v760
        %850 = vst.msk [vmem:[%s846 + $0x21] sm:$0xff] %vm790, %v761
        %851 = vst.msk [vmem:[%s846 + $0x31] sm:$0xff] %vm790, %v762
        %852 = vst.msk [vmem:[%s846 + $0x39] sm:$0xff] %vm790, %v763
        %853 = vst.msk [vmem:[%s846 + $0x49] sm:$0xff] %vm790, %v764
        %854 = vst.msk [vmem:[%s846 + $0x51] sm:$0xff] %vm790, %v765
        %855 = vst.msk [vmem:[%s846 + $0x61] sm:$0xff] %vm790, %v766
        %856 = vst.msk [vmem:[%s846 + $0x69] sm:$0xff] %vm790, %v767
        %857 = vst.msk [vmem:[%s846 + $0x79] sm:$0xff] %vm790, %v768
        %858 = vst.msk [vmem:[%s846 + $0x81] sm:$0xff] %vm790, %v769
        %859 = vst.msk [vmem:[%s846 + $0x91] sm:$0xff] %vm790, %v770
        %860 = vst.msk [vmem:[%s846 + $0x99] sm:$0xff] %vm790, %v771
        %861 = vst.msk [vmem:[%s846 + $0xa9] sm:$0xff] %vm790, %v772
        %862 = vst.msk [vmem:[%s846 + $0xb1] sm:$0xff] %vm790, %v773
        %863 = vst.msk [vmem:[%s846 + $0xc1] sm:$0xff] %vm790, %v774
        %864 = vst.msk [vmem:[%s846 + $0xc9] sm:$0xff] %vm790, %v775
        %865 = vst.msk [vmem:[%s846 + $0xd9] sm:$0xff] %vm790, %v776
        %866 = vst.msk [vmem:[%s846 + $0xe1] sm:$0xff] %vm790, %v777
        %867 = vst.msk [vmem:[%s846 + $0xf1] sm:$0xff] %vm790, %v778
        %868 = vst.msk [vmem:[%s846 + $0xf9] sm:$0xff] %vm790, %v779
        %869 = vst.msk [vmem:[%s846 + $0x109] sm:$0xff] %vm790, %v780
        %870 = vst.msk [vmem:[%s846 + $0x111] sm:$0xff] %vm790, %v781
        %871 = vst.msk [vmem:[%s846 + $0x121] sm:$0xff] %vm790, %v782
        %872 = vst.msk [vmem:[%s846 + $0x129] sm:$0xff] %vm790, %v783
        %873 = vst.msk [vmem:[%s846 + $0x139] sm:$0xff] %vm790, %v784
        %874 = vst.msk [vmem:[%s846 + $0x141] sm:$0xff] %vm790, %v785
        %875 = vst.msk [vmem:[%s846 + $0x151] sm:$0xff] %vm790, %v786
        %876 = vst.msk [vmem:[%s846 + $0x159] sm:$0xff] %vm790, %v787
        %877 = vst.msk [vmem:[%s846 + $0x169] sm:$0xff] %vm790, %v788
        %878 = vst.msk [vmem:[%s846 + $0x171] sm:$0xff] %vm790, %v789
        %v879 = vld [vmem:[#allocation2] sm:$0xff]
        %v880 = vld [vmem:[#allocation2 + $0x8] sm:$0xff]
        %v881 = vld [vmem:[#allocation2 + $0x18] sm:$0xff]
        %v882 = vld [vmem:[#allocation2 + $0x20] sm:$0xff]
        %v883 = vld [vmem:[#allocation2 + $0x30] sm:$0xff]
        %v884 = vld [vmem:[#allocation2 + $0x38] sm:$0xff]
        %v885 = vld [vmem:[#allocation2 + $0x48] sm:$0xff]
        %v886 = vld [vmem:[#allocation2 + $0x50] sm:$0xff]
        %v887 = vld [vmem:[#allocation2 + $0x60] sm:$0xff]
        %v888 = vld [vmem:[#allocation2 + $0x68] sm:$0xff]
        %v889 = vld [vmem:[#allocation2 + $0x78] sm:$0xff]
        %v890 = vld [vmem:[#allocation2 + $0x80] sm:$0xff]
        %v891 = vld [vmem:[#allocation2 + $0x90] sm:$0xff]
        %v892 = vld [vmem:[#allocation2 + $0x98] sm:$0xff]
        %v893 = vld [vmem:[#allocation2 + $0xa8] sm:$0xff]
        %v894 = vld [vmem:[#allocation2 + $0xb0] sm:$0xff]
        %v895 = vld [vmem:[#allocation2 + $0xc0] sm:$0xff]
        %v896 = vld [vmem:[#allocation2 + $0xc8] sm:$0xff]
        %v897 = vld [vmem:[#allocation2 + $0xd8] sm:$0xff]
        %v898 = vld [vmem:[#allocation2 + $0xe0] sm:$0xff]
        %v899 = vld [vmem:[#allocation2 + $0xf0] sm:$0xff]
        %v900 = vld [vmem:[#allocation2 + $0xf8] sm:$0xff]
        %v901 = vld [vmem:[#allocation2 + $0x108] sm:$0xff]
        %v902 = vld [vmem:[#allocation2 + $0x110] sm:$0xff]
        %v903 = vld [vmem:[#allocation2 + $0x120] sm:$0xff]
        %v904 = vld [vmem:[#allocation2 + $0x128] sm:$0xff]
        %v905 = vld [vmem:[#allocation2 + $0x138] sm:$0xff]
        %v906 = vld [vmem:[#allocation2 + $0x140] sm:$0xff]
        %v907 = vld [vmem:[#allocation2 + $0x150] sm:$0xff]
        %v908 = vld [vmem:[#allocation2 + $0x158] sm:$0xff]
        %v909 = vld [vmem:[#allocation2 + $0x168] sm:$0xff]
        %v910 = vld [vmem:[#allocation2 + $0x170] sm:$0xff]
        %v911 = vld [vmem:[%s2] sm:$0xff]
        %v912 = vld [vmem:[%s2 + $0x8] sm:$0xff]
        %v913 = vld [vmem:[#allocation2 + $0x1] sm:$0xff]
        %v914 = vld [vmem:[#allocation2 + $0x9] sm:$0xff]
        %v915 = vld [vmem:[#allocation2 + $0x19] sm:$0xff]
        %v916 = vld [vmem:[#allocation2 + $0x21] sm:$0xff]
        %v917 = vld [vmem:[#allocation2 + $0x31] sm:$0xff]
        %v918 = vld [vmem:[#allocation2 + $0x39] sm:$0xff]
        %v919 = vld [vmem:[#allocation2 + $0x49] sm:$0xff]
        %v920 = vld [vmem:[#allocation2 + $0x51] sm:$0xff]
        %v921 = vld [vmem:[#allocation2 + $0x61] sm:$0xff]
        %v922 = vld [vmem:[#allocation2 + $0x69] sm:$0xff]
        %v923 = vld [vmem:[#allocation2 + $0x79] sm:$0xff]
        %v924 = vld [vmem:[#allocation2 + $0x81] sm:$0xff]
        %v925 = vld [vmem:[#allocation2 + $0x91] sm:$0xff]
        %v926 = vld [vmem:[#allocation2 + $0x99] sm:$0xff]
        %v927 = vld [vmem:[#allocation2 + $0xa9] sm:$0xff]
        %v928 = vld [vmem:[#allocation2 + $0xb1] sm:$0xff]
        %v929 = vld [vmem:[#allocation2 + $0xc1] sm:$0xff]
        %v930 = vld [vmem:[#allocation2 + $0xc9] sm:$0xff]
        %v931 = vld [vmem:[#allocation2 + $0xd9] sm:$0xff]
        %v932 = vld [vmem:[#allocation2 + $0xe1] sm:$0xff]
        %v933 = vld [vmem:[#allocation2 + $0xf1] sm:$0xff]
        %v934 = vld [vmem:[#allocation2 + $0xf9] sm:$0xff]
        %v935 = vld [vmem:[#allocation2 + $0x109] sm:$0xff]
        %v936 = vld [vmem:[#allocation2 + $0x111] sm:$0xff]
        %v937 = vld [vmem:[#allocation2 + $0x121] sm:$0xff]
        %v938 = vld [vmem:[#allocation2 + $0x129] sm:$0xff]
        %v939 = vld [vmem:[#allocation2 + $0x139] sm:$0xff]
        %v940 = vld [vmem:[#allocation2 + $0x141] sm:$0xff]
        %v941 = vld [vmem:[#allocation2 + $0x151] sm:$0xff]
        %v942 = vld [vmem:[#allocation2 + $0x159] sm:$0xff]
        %v943 = vld [vmem:[#allocation2 + $0x169] sm:$0xff]
        %v944 = vld [vmem:[#allocation2 + $0x171] sm:$0xff]
        %s945 = scalar_lea.vmem %s2, 16
        %v946 = vld [vmem:[%s945] sm:$0xff]
        %v947 = vld [vmem:[%s945 + $0x8] sm:$0xff]
        %v949 = vsel %vm790, %v913, 0
        %v952 = vsel %vm790, %v914, 0
        %v955 = vsel %vm790, %v915, 0
        %v958 = vsel %vm790, %v916, 0
        %v961 = vsel %vm790, %v917, 0
        %v964 = vsel %vm790, %v918, 0
        %v967 = vsel %vm790, %v919, 0
        %v970 = vsel %vm790, %v920, 0
        %v973 = vsel %vm790, %v921, 0
        %v976 = vsel %vm790, %v922, 0
        %v979 = vsel %vm790, %v923, 0
        %v982 = vsel %vm790, %v924, 0
        %v985 = vsel %vm790, %v925, 0
        %v988 = vsel %vm790, %v926, 0
        %v991 = vsel %vm790, %v927, 0
        %v994 = vsel %vm790, %v928, 0
        %v997 = vsel %vm790, %v929, 0
        %v1000 = vsel %vm790, %v930, 0
        %v1003 = vsel %vm790, %v931, 0
        %v1006 = vsel %vm790, %v932, 0
        %v1009 = vsel %vm790, %v933, 0
        %v1012 = vsel %vm790, %v934, 0
        %v1015 = vsel %vm790, %v935, 0
        %v1018 = vsel %vm790, %v936, 0
        %v1021 = vsel %vm790, %v937, 0
        %v1024 = vsel %vm790, %v938, 0
        %v1027 = vsel %vm790, %v939, 0
        %v1030 = vsel %vm790, %v940, 0
        %v1033 = vsel %vm790, %v941, 0
        %v1036 = vsel %vm790, %v942, 0
        %v1039 = vsel %vm790, %v943, 0
        %v1042 = vsel %vm790, %v944, 0
        %1044 = vmatpush.msra.mxu0 0.0
        %1045 = vmatpush.msra.mxu0 0.0
        %1046 = vmatpush.msra.mxu0 0.0
        %1047 = vmatpush.msra.mxu0 0.0
        %1048 = vmatpush.msra.mxu0 0.0
        %1049 = vmatpush.msra.mxu0 0.0
        %1050 = vmatpush.msra.mxu0 0.0
        %1051 = vmatpush.msra.mxu0 0.0
        %1052 = vmatpush.msra.mxu0 0.0
        %1053 = vmatpush.msra.mxu0 0.0
        %1054 = vmatpush.msra.mxu0 0.0
        %1055 = vmatpush.msra.mxu0 0.0
        %1056 = vmatpush.msra.mxu0 0.0
        %1057 = vmatpush.msra.mxu0 0.0
        %1058 = vmatpush.msra.mxu0 %v947
        %1059 = vmatpush.msra.mxu0 %v946
        %1060 = vmatmul.f32.gmra.mxu0 %v949
        %v1061 = vpop.f32.mrf.mxu0
        %v1062 = vadd.f32 0.0, %v1061
        %1063 = vmatmul.f32.gmra.mxu0 %v952
        %v1064 = vpop.f32.mrf.mxu0
        %v1065 = vadd.f32 0.0, %v1064
        %1066 = vmatmul.f32.gmra.mxu0 %v955
        %v1067 = vpop.f32.mrf.mxu0
        %v1068 = vadd.f32 0.0, %v1067
        %1069 = vmatmul.f32.gmra.mxu0 %v958
        %v1070 = vpop.f32.mrf.mxu0
        %v1071 = vadd.f32 0.0, %v1070
        %1072 = vmatmul.f32.gmra.mxu0 %v961
        %v1073 = vpop.f32.mrf.mxu0
        %v1074 = vadd.f32 0.0, %v1073
        %1075 = vmatmul.f32.gmra.mxu0 %v964
        %v1076 = vpop.f32.mrf.mxu0
        %v1077 = vadd.f32 0.0, %v1076
        %1078 = vmatmul.f32.gmra.mxu0 %v967
        %v1079 = vpop.f32.mrf.mxu0
        %v1080 = vadd.f32 0.0, %v1079
        %1081 = vmatmul.f32.gmra.mxu0 %v970
        %v1082 = vpop.f32.mrf.mxu0
        %v1083 = vadd.f32 0.0, %v1082
        %1084 = vmatmul.f32.gmra.mxu0 %v973
        %v1085 = vpop.f32.mrf.mxu0
        %v1086 = vadd.f32 0.0, %v1085
        %1087 = vmatmul.f32.gmra.mxu0 %v976
        %v1088 = vpop.f32.mrf.mxu0
        %v1089 = vadd.f32 0.0, %v1088
        %1090 = vmatmul.f32.gmra.mxu0 %v979
        %v1091 = vpop.f32.mrf.mxu0
        %v1092 = vadd.f32 0.0, %v1091
        %1093 = vmatmul.f32.gmra.mxu0 %v982
        %v1094 = vpop.f32.mrf.mxu0
        %v1095 = vadd.f32 0.0, %v1094
        %1096 = vmatmul.f32.gmra.mxu0 %v985
        %v1097 = vpop.f32.mrf.mxu0
        %v1098 = vadd.f32 0.0, %v1097
        %1099 = vmatmul.f32.gmra.mxu0 %v988
        %v1100 = vpop.f32.mrf.mxu0
        %v1101 = vadd.f32 0.0, %v1100
        %1102 = vmatmul.f32.gmra.mxu0 %v991
        %v1103 = vpop.f32.mrf.mxu0
        %v1104 = vadd.f32 0.0, %v1103
        %1105 = vmatmul.f32.gmra.mxu0 %v994
        %v1106 = vpop.f32.mrf.mxu0
        %v1107 = vadd.f32 0.0, %v1106
        %1108 = vmatmul.f32.gmra.mxu0 %v997
        %v1109 = vpop.f32.mrf.mxu0
        %v1110 = vadd.f32 0.0, %v1109
        %1111 = vmatmul.f32.gmra.mxu0 %v1000
        %v1112 = vpop.f32.mrf.mxu0
        %v1113 = vadd.f32 0.0, %v1112
        %1114 = vmatmul.f32.gmra.mxu0 %v1003
        %v1115 = vpop.f32.mrf.mxu0
        %v1116 = vadd.f32 0.0, %v1115
        %1117 = vmatmul.f32.gmra.mxu0 %v1006
        %v1118 = vpop.f32.mrf.mxu0
        %v1119 = vadd.f32 0.0, %v1118
        %1120 = vmatmul.f32.gmra.mxu0 %v1009
        %v1121 = vpop.f32.mrf.mxu0
        %v1122 = vadd.f32 0.0, %v1121
        %1123 = vmatmul.f32.gmra.mxu0 %v1012
        %v1124 = vpop.f32.mrf.mxu0
        %v1125 = vadd.f32 0.0, %v1124
        %1126 = vmatmul.f32.gmra.mxu0 %v1015
        %v1127 = vpop.f32.mrf.mxu0
        %v1128 = vadd.f32 0.0, %v1127
        %1129 = vmatmul.f32.gmra.mxu0 %v1018
        %v1130 = vpop.f32.mrf.mxu0
        %v1131 = vadd.f32 0.0, %v1130
        %1132 = vmatmul.f32.gmra.mxu0 %v1021
        %v1133 = vpop.f32.mrf.mxu0
        %v1134 = vadd.f32 0.0, %v1133
        %1135 = vmatmul.f32.gmra.mxu0 %v1024
        %v1136 = vpop.f32.mrf.mxu0
        %v1137 = vadd.f32 0.0, %v1136
        %1138 = vmatmul.f32.gmra.mxu0 %v1027
        %v1139 = vpop.f32.mrf.mxu0
        %v1140 = vadd.f32 0.0, %v1139
        %1141 = vmatmul.f32.gmra.mxu0 %v1030
        %v1142 = vpop.f32.mrf.mxu0
        %v1143 = vadd.f32 0.0, %v1142
        %1144 = vmatmul.f32.gmra.mxu0 %v1033
        %v1145 = vpop.f32.mrf.mxu0
        %v1146 = vadd.f32 0.0, %v1145
        %1147 = vmatmul.f32.gmra.mxu0 %v1036
        %v1148 = vpop.f32.mrf.mxu0
        %v1149 = vadd.f32 0.0, %v1148
        %1150 = vmatmul.f32.gmra.mxu0 %v1039
        %v1151 = vpop.f32.mrf.mxu0
        %v1152 = vadd.f32 0.0, %v1151
        %1153 = vmatmul.f32.gmra.mxu0 %v1042
        %v1154 = vpop.f32.mrf.mxu0
        %v1155 = vadd.f32 0.0, %v1154
        %1156 = vdwg.mxu0
        %v1158 = vsel %vm790, %v879, 0
        %v1161 = vsel %vm790, %v880, 0
        %v1164 = vsel %vm790, %v881, 0
        %v1167 = vsel %vm790, %v882, 0
        %v1170 = vsel %vm790, %v883, 0
        %v1173 = vsel %vm790, %v884, 0
        %v1176 = vsel %vm790, %v885, 0
        %v1179 = vsel %vm790, %v886, 0
        %v1182 = vsel %vm790, %v887, 0
        %v1185 = vsel %vm790, %v888, 0
        %v1188 = vsel %vm790, %v889, 0
        %v1191 = vsel %vm790, %v890, 0
        %v1194 = vsel %vm790, %v891, 0
        %v1197 = vsel %vm790, %v892, 0
        %v1200 = vsel %vm790, %v893, 0
        %v1203 = vsel %vm790, %v894, 0
        %v1206 = vsel %vm790, %v895, 0
        %v1209 = vsel %vm790, %v896, 0
        %v1212 = vsel %vm790, %v897, 0
        %v1215 = vsel %vm790, %v898, 0
        %v1218 = vsel %vm790, %v899, 0
        %v1221 = vsel %vm790, %v900, 0
        %v1224 = vsel %vm790, %v901, 0
        %v1227 = vsel %vm790, %v902, 0
        %v1230 = vsel %vm790, %v903, 0
        %v1233 = vsel %vm790, %v904, 0
        %v1236 = vsel %vm790, %v905, 0
        %v1239 = vsel %vm790, %v906, 0
        %v1242 = vsel %vm790, %v907, 0
        %v1245 = vsel %vm790, %v908, 0
        %v1248 = vsel %vm790, %v909, 0
        %v1251 = vsel %vm790, %v910, 0
        %1253 = vmatpush.msra.mxu0 0.0
        %1254 = vmatpush.msra.mxu0 0.0
        %1255 = vmatpush.msra.mxu0 0.0
        %1256 = vmatpush.msra.mxu0 0.0
        %1257 = vmatpush.msra.mxu0 0.0
        %1258 = vmatpush.msra.mxu0 0.0
        %1259 = vmatpush.msra.mxu0 0.0
        %1260 = vmatpush.msra.mxu0 0.0
        %1261 = vmatpush.msra.mxu0 0.0
        %1262 = vmatpush.msra.mxu0 0.0
        %1263 = vmatpush.msra.mxu0 0.0
        %1264 = vmatpush.msra.mxu0 0.0
        %1265 = vmatpush.msra.mxu0 0.0
        %1266 = vmatpush.msra.mxu0 0.0
        %1267 = vmatpush.msra.mxu0 %v912
        %1268 = vmatpush.msra.mxu0 %v911
        %1269 = vmatmul.f32.gmra.mxu0 %v1158
        %v1270 = vpop.f32.mrf.mxu0
        %v1271 = vadd.f32 %v1062, %v1270
        %1272 = vmatmul.f32.gmra.mxu0 %v1161
        %v1273 = vpop.f32.mrf.mxu0
        %v1274 = vadd.f32 %v1065, %v1273
        %1275 = vmatmul.f32.gmra.mxu0 %v1164
        %v1276 = vpop.f32.mrf.mxu0
        %v1277 = vadd.f32 %v1068, %v1276
        %1278 = vmatmul.f32.gmra.mxu0 %v1167
        %v1279 = vpop.f32.mrf.mxu0
        %v1280 = vadd.f32 %v1071, %v1279
        %1281 = vmatmul.f32.gmra.mxu0 %v1170
        %v1282 = vpop.f32.mrf.mxu0
        %v1283 = vadd.f32 %v1074, %v1282
        %1284 = vmatmul.f32.gmra.mxu0 %v1173
        %v1285 = vpop.f32.mrf.mxu0
        %v1286 = vadd.f32 %v1077, %v1285
        %1287 = vmatmul.f32.gmra.mxu0 %v1176
        %v1288 = vpop.f32.mrf.mxu0
        %v1289 = vadd.f32 %v1080, %v1288
        %1290 = vmatmul.f32.gmra.mxu0 %v1179
        %v1291 = vpop.f32.mrf.mxu0
        %v1292 = vadd.f32 %v1083, %v1291
        %1293 = vmatmul.f32.gmra.mxu0 %v1182
        %v1294 = vpop.f32.mrf.mxu0
        %v1295 = vadd.f32 %v1086, %v1294
        %1296 = vmatmul.f32.gmra.mxu0 %v1185
        %v1297 = vpop.f32.mrf.mxu0
        %v1298 = vadd.f32 %v1089, %v1297
        %1299 = vmatmul.f32.gmra.mxu0 %v1188
        %v1300 = vpop.f32.mrf.mxu0
        %v1301 = vadd.f32 %v1092, %v1300
        %1302 = vmatmul.f32.gmra.mxu0 %v1191
        %v1303 = vpop.f32.mrf.mxu0
        %v1304 = vadd.f32 %v1095, %v1303
        %1305 = vmatmul.f32.gmra.mxu0 %v1194
        %v1306 = vpop.f32.mrf.mxu0
        %v1307 = vadd.f32 %v1098, %v1306
        %1308 = vmatmul.f32.gmra.mxu0 %v1197
        %v1309 = vpop.f32.mrf.mxu0
        %v1310 = vadd.f32 %v1101, %v1309
        %1311 = vmatmul.f32.gmra.mxu0 %v1200
        %v1312 = vpop.f32.mrf.mxu0
        %v1313 = vadd.f32 %v1104, %v1312
        %1314 = vmatmul.f32.gmra.mxu0 %v1203
        %v1315 = vpop.f32.mrf.mxu0
        %v1316 = vadd.f32 %v1107, %v1315
        %1317 = vmatmul.f32.gmra.mxu0 %v1206
        %v1318 = vpop.f32.mrf.mxu0
        %v1319 = vadd.f32 %v1110, %v1318
        %1320 = vmatmul.f32.gmra.mxu0 %v1209
        %v1321 = vpop.f32.mrf.mxu0
        %v1322 = vadd.f32 %v1113, %v1321
        %1323 = vmatmul.f32.gmra.mxu0 %v1212
        %v1324 = vpop.f32.mrf.mxu0
        %v1325 = vadd.f32 %v1116, %v1324
        %1326 = vmatmul.f32.gmra.mxu0 %v1215
        %v1327 = vpop.f32.mrf.mxu0
        %v1328 = vadd.f32 %v1119, %v1327
        %1329 = vmatmul.f32.gmra.mxu0 %v1218
        %v1330 = vpop.f32.mrf.mxu0
        %v1331 = vadd.f32 %v1122, %v1330
        %1332 = vmatmul.f32.gmra.mxu0 %v1221
        %v1333 = vpop.f32.mrf.mxu0
        %v1334 = vadd.f32 %v1125, %v1333
        %1335 = vmatmul.f32.gmra.mxu0 %v1224
        %v1336 = vpop.f32.mrf.mxu0
        %v1337 = vadd.f32 %v1128, %v1336
        %1338 = vmatmul.f32.gmra.mxu0 %v1227
        %v1339 = vpop.f32.mrf.mxu0
        %v1340 = vadd.f32 %v1131, %v1339
        %1341 = vmatmul.f32.gmra.mxu0 %v1230
        %v1342 = vpop.f32.mrf.mxu0
        %v1343 = vadd.f32 %v1134, %v1342
        %1344 = vmatmul.f32.gmra.mxu0 %v1233
        %v1345 = vpop.f32.mrf.mxu0
        %v1346 = vadd.f32 %v1137, %v1345
        %1347 = vmatmul.f32.gmra.mxu0 %v1236
        %v1348 = vpop.f32.mrf.mxu0
        %v1349 = vadd.f32 %v1140, %v1348
        %1350 = vmatmul.f32.gmra.mxu0 %v1239
        %v1351 = vpop.f32.mrf.mxu0
        %v1352 = vadd.f32 %v1143, %v1351
        %1353 = vmatmul.f32.gmra.mxu0 %v1242
        %v1354 = vpop.f32.mrf.mxu0
        %v1355 = vadd.f32 %v1146, %v1354
        %1356 = vmatmul.f32.gmra.mxu0 %v1245
        %v1357 = vpop.f32.mrf.mxu0
        %v1358 = vadd.f32 %v1149, %v1357
        %1359 = vmatmul.f32.gmra.mxu0 %v1248
        %v1360 = vpop.f32.mrf.mxu0
        %v1361 = vadd.f32 %v1152, %v1360
        %1362 = vmatmul.f32.gmra.mxu0 %v1251
        %v1363 = vpop.f32.mrf.mxu0
        %v1364 = vadd.f32 %v1155, %v1363
        %1365 = vdwg.mxu0
        %v1366 = vld [vmem:[#allocation2 + $0x2] sm:$0xff]
        %v1367 = vld [vmem:[#allocation2 + $0xa] sm:$0xff]
        %v1368 = vld [vmem:[#allocation2 + $0x1a] sm:$0xff]
        %v1369 = vld [vmem:[#allocation2 + $0x22] sm:$0xff]
        %v1370 = vld [vmem:[#allocation2 + $0x32] sm:$0xff]
        %v1371 = vld [vmem:[#allocation2 + $0x3a] sm:$0xff]
        %v1372 = vld [vmem:[#allocation2 + $0x4a] sm:$0xff]
        %v1373 = vld [vmem:[#allocation2 + $0x52] sm:$0xff]
        %v1374 = vld [vmem:[#allocation2 + $0x62] sm:$0xff]
        %v1375 = vld [vmem:[#allocation2 + $0x6a] sm:$0xff]
        %v1376 = vld [vmem:[#allocation2 + $0x7a] sm:$0xff]
        %v1377 = vld [vmem:[#allocation2 + $0x82] sm:$0xff]
        %v1378 = vld [vmem:[#allocation2 + $0x92] sm:$0xff]
        %v1379 = vld [vmem:[#allocation2 + $0x9a] sm:$0xff]
        %v1380 = vld [vmem:[#allocation2 + $0xaa] sm:$0xff]
        %v1381 = vld [vmem:[#allocation2 + $0xb2] sm:$0xff]
        %v1382 = vld [vmem:[#allocation2 + $0xc2] sm:$0xff]
        %v1383 = vld [vmem:[#allocation2 + $0xca] sm:$0xff]
        %v1384 = vld [vmem:[#allocation2 + $0xda] sm:$0xff]
        %v1385 = vld [vmem:[#allocation2 + $0xe2] sm:$0xff]
        %v1386 = vld [vmem:[#allocation2 + $0xf2] sm:$0xff]
        %v1387 = vld [vmem:[#allocation2 + $0xfa] sm:$0xff]
        %v1388 = vld [vmem:[#allocation2 + $0x10a] sm:$0xff]
        %v1389 = vld [vmem:[#allocation2 + $0x112] sm:$0xff]
        %v1390 = vld [vmem:[#allocation2 + $0x122] sm:$0xff]
        %v1391 = vld [vmem:[#allocation2 + $0x12a] sm:$0xff]
        %v1392 = vld [vmem:[#allocation2 + $0x13a] sm:$0xff]
        %v1393 = vld [vmem:[#allocation2 + $0x142] sm:$0xff]
        %v1394 = vld [vmem:[#allocation2 + $0x152] sm:$0xff]
        %v1395 = vld [vmem:[#allocation2 + $0x15a] sm:$0xff]
        %v1396 = vld [vmem:[#allocation2 + $0x16a] sm:$0xff]
        %v1397 = vld [vmem:[#allocation2 + $0x172] sm:$0xff]
        %s1398 = scalar_lea.vmem %s2, 32
        %v1399 = vld [vmem:[%s1398] sm:$0xff]
        %v1400 = vld [vmem:[%s1398 + $0x8] sm:$0xff]
        %v1402 = vsel %vm790, %v1366, 0
        %v1405 = vsel %vm790, %v1367, 0
        %v1408 = vsel %vm790, %v1368, 0
        %v1411 = vsel %vm790, %v1369, 0
        %v1414 = vsel %vm790, %v1370, 0
        %v1417 = vsel %vm790, %v1371, 0
        %v1420 = vsel %vm790, %v1372, 0
        %v1423 = vsel %vm790, %v1373, 0
        %v1426 = vsel %vm790, %v1374, 0
        %v1429 = vsel %vm790, %v1375, 0
        %v1432 = vsel %vm790, %v1376, 0
        %v1435 = vsel %vm790, %v1377, 0
        %v1438 = vsel %vm790, %v1378, 0
        %v1441 = vsel %vm790, %v1379, 0
        %v1444 = vsel %vm790, %v1380, 0
        %v1447 = vsel %vm790, %v1381, 0
        %v1450 = vsel %vm790, %v1382, 0
        %v1453 = vsel %vm790, %v1383, 0
        %v1456 = vsel %vm790, %v1384, 0
        %v1459 = vsel %vm790, %v1385, 0
        %v1462 = vsel %vm790, %v1386, 0
        %v1465 = vsel %vm790, %v1387, 0
        %v1468 = vsel %vm790, %v1388, 0
        %v1471 = vsel %vm790, %v1389, 0
        %v1474 = vsel %vm790, %v1390, 0
        %v1477 = vsel %vm790, %v1391, 0
        %v1480 = vsel %vm790, %v1392, 0
        %v1483 = vsel %vm790, %v1393, 0
        %v1486 = vsel %vm790, %v1394, 0
        %v1489 = vsel %vm790, %v1395, 0
        %v1492 = vsel %vm790, %v1396, 0
        %v1495 = vsel %vm790, %v1397, 0
        %1497 = vmatpush.msra.mxu0 0.0
        %1498 = vmatpush.msra.mxu0 0.0
        %1499 = vmatpush.msra.mxu0 0.0
        %1500 = vmatpush.msra.mxu0 0.0
        %1501 = vmatpush.msra.mxu0 0.0
        %1502 = vmatpush.msra.mxu0 0.0
        %1503 = vmatpush.msra.mxu0 0.0
        %1504 = vmatpush.msra.mxu0 0.0
        %1505 = vmatpush.msra.mxu0 0.0
        %1506 = vmatpush.msra.mxu0 0.0
        %1507 = vmatpush.msra.mxu0 0.0
        %1508 = vmatpush.msra.mxu0 0.0
        %1509 = vmatpush.msra.mxu0 0.0
        %1510 = vmatpush.msra.mxu0 0.0
        %1511 = vmatpush.msra.mxu0 %v1400
        %1512 = vmatpush.msra.mxu0 %v1399
        %1513 = vmatmul.f32.gmra.mxu0 %v1402
        %v1514 = vpop.f32.mrf.mxu0
        %v1515 = vadd.f32 0.0, %v1514
        %1516 = vmatmul.f32.gmra.mxu0 %v1405
        %v1517 = vpop.f32.mrf.mxu0
        %v1518 = vadd.f32 0.0, %v1517
        %1519 = vmatmul.f32.gmra.mxu0 %v1408
        %v1520 = vpop.f32.mrf.mxu0
        %v1521 = vadd.f32 0.0, %v1520
        %1522 = vmatmul.f32.gmra.mxu0 %v1411
        %v1523 = vpop.f32.mrf.mxu0
        %v1524 = vadd.f32 0.0, %v1523
        %1525 = vmatmul.f32.gmra.mxu0 %v1414
        %v1526 = vpop.f32.mrf.mxu0
        %v1527 = vadd.f32 0.0, %v1526
        %1528 = vmatmul.f32.gmra.mxu0 %v1417
        %v1529 = vpop.f32.mrf.mxu0
        %v1530 = vadd.f32 0.0, %v1529
        %1531 = vmatmul.f32.gmra.mxu0 %v1420
        %v1532 = vpop.f32.mrf.mxu0
        %v1533 = vadd.f32 0.0, %v1532
        %1534 = vmatmul.f32.gmra.mxu0 %v1423
        %v1535 = vpop.f32.mrf.mxu0
        %v1536 = vadd.f32 0.0, %v1535
        %1537 = vmatmul.f32.gmra.mxu0 %v1426
        %v1538 = vpop.f32.mrf.mxu0
        %v1539 = vadd.f32 0.0, %v1538
        %1540 = vmatmul.f32.gmra.mxu0 %v1429
        %v1541 = vpop.f32.mrf.mxu0
        %v1542 = vadd.f32 0.0, %v1541
        %1543 = vmatmul.f32.gmra.mxu0 %v1432
        %v1544 = vpop.f32.mrf.mxu0
        %v1545 = vadd.f32 0.0, %v1544
        %1546 = vmatmul.f32.gmra.mxu0 %v1435
        %v1547 = vpop.f32.mrf.mxu0
        %v1548 = vadd.f32 0.0, %v1547
        %1549 = vmatmul.f32.gmra.mxu0 %v1438
        %v1550 = vpop.f32.mrf.mxu0
        %v1551 = vadd.f32 0.0, %v1550
        %1552 = vmatmul.f32.gmra.mxu0 %v1441
        %v1553 = vpop.f32.mrf.mxu0
        %v1554 = vadd.f32 0.0, %v1553
        %1555 = vmatmul.f32.gmra.mxu0 %v1444
        %v1556 = vpop.f32.mrf.mxu0
        %v1557 = vadd.f32 0.0, %v1556
        %1558 = vmatmul.f32.gmra.mxu0 %v1447
        %v1559 = vpop.f32.mrf.mxu0
        %v1560 = vadd.f32 0.0, %v1559
        %1561 = vmatmul.f32.gmra.mxu0 %v1450
        %v1562 = vpop.f32.mrf.mxu0
        %v1563 = vadd.f32 0.0, %v1562
        %1564 = vmatmul.f32.gmra.mxu0 %v1453
        %v1565 = vpop.f32.mrf.mxu0
        %v1566 = vadd.f32 0.0, %v1565
        %1567 = vmatmul.f32.gmra.mxu0 %v1456
        %v1568 = vpop.f32.mrf.mxu0
        %v1569 = vadd.f32 0.0, %v1568
        %1570 = vmatmul.f32.gmra.mxu0 %v1459
        %v1571 = vpop.f32.mrf.mxu0
        %v1572 = vadd.f32 0.0, %v1571
        %1573 = vmatmul.f32.gmra.mxu0 %v1462
        %v1574 = vpop.f32.mrf.mxu0
        %v1575 = vadd.f32 0.0, %v1574
        %1576 = vmatmul.f32.gmra.mxu0 %v1465
        %v1577 = vpop.f32.mrf.mxu0
        %v1578 = vadd.f32 0.0, %v1577
        %1579 = vmatmul.f32.gmra.mxu0 %v1468
        %v1580 = vpop.f32.mrf.mxu0
        %v1581 = vadd.f32 0.0, %v1580
        %1582 = vmatmul.f32.gmra.mxu0 %v1471
        %v1583 = vpop.f32.mrf.mxu0
        %v1584 = vadd.f32 0.0, %v1583
        %1585 = vmatmul.f32.gmra.mxu0 %v1474
        %v1586 = vpop.f32.mrf.mxu0
        %v1587 = vadd.f32 0.0, %v1586
        %1588 = vmatmul.f32.gmra.mxu0 %v1477
        %v1589 = vpop.f32.mrf.mxu0
        %v1590 = vadd.f32 0.0, %v1589
        %1591 = vmatmul.f32.gmra.mxu0 %v1480
        %v1592 = vpop.f32.mrf.mxu0
        %v1593 = vadd.f32 0.0, %v1592
        %1594 = vmatmul.f32.gmra.mxu0 %v1483
        %v1595 = vpop.f32.mrf.mxu0
        %v1596 = vadd.f32 0.0, %v1595
        %1597 = vmatmul.f32.gmra.mxu0 %v1486
        %v1598 = vpop.f32.mrf.mxu0
        %v1599 = vadd.f32 0.0, %v1598
        %1600 = vmatmul.f32.gmra.mxu0 %v1489
        %v1601 = vpop.f32.mrf.mxu0
        %v1602 = vadd.f32 0.0, %v1601
        %1603 = vmatmul.f32.gmra.mxu0 %v1492
        %v1604 = vpop.f32.mrf.mxu0
        %v1605 = vadd.f32 0.0, %v1604
        %1606 = vmatmul.f32.gmra.mxu0 %v1495
        %v1607 = vpop.f32.mrf.mxu0
        %v1608 = vadd.f32 0.0, %v1607
        %1609 = vdwg.mxu0
        %v1610 = vadd.f32 %v1271, %v1515
        %v1611 = vadd.f32 %v1274, %v1518
        %v1612 = vadd.f32 %v1277, %v1521
        %v1613 = vadd.f32 %v1280, %v1524
        %v1614 = vadd.f32 %v1283, %v1527
        %v1615 = vadd.f32 %v1286, %v1530
        %v1616 = vadd.f32 %v1289, %v1533
        %v1617 = vadd.f32 %v1292, %v1536
        %v1618 = vadd.f32 %v1295, %v1539
        %v1619 = vadd.f32 %v1298, %v1542
        %v1620 = vadd.f32 %v1301, %v1545
        %v1621 = vadd.f32 %v1304, %v1548
        %v1622 = vadd.f32 %v1307, %v1551
        %v1623 = vadd.f32 %v1310, %v1554
        %v1624 = vadd.f32 %v1313, %v1557
        %v1625 = vadd.f32 %v1316, %v1560
        %v1626 = vadd.f32 %v1319, %v1563
        %v1627 = vadd.f32 %v1322, %v1566
        %v1628 = vadd.f32 %v1325, %v1569
        %v1629 = vadd.f32 %v1328, %v1572
        %v1630 = vadd.f32 %v1331, %v1575
        %v1631 = vadd.f32 %v1334, %v1578
        %v1632 = vadd.f32 %v1337, %v1581
        %v1633 = vadd.f32 %v1340, %v1584
        %v1634 = vadd.f32 %v1343, %v1587
        %v1635 = vadd.f32 %v1346, %v1590
        %v1636 = vadd.f32 %v1349, %v1593
        %v1637 = vadd.f32 %v1352, %v1596
        %v1638 = vadd.f32 %v1355, %v1599
        %v1639 = vadd.f32 %v1358, %v1602
        %v1640 = vadd.f32 %v1361, %v1605
        %v1641 = vadd.f32 %v1364, %v1608
        %v1642 = vld [vmem:[%s846] sm:$0xff]
        %v1643 = vld [vmem:[%s846 + $0x8] sm:$0xff]
        %v1644 = vld [vmem:[%s846 + $0x18] sm:$0xff]
        %v1645 = vld [vmem:[%s846 + $0x20] sm:$0xff]
        %v1646 = vld [vmem:[%s846 + $0x30] sm:$0xff]
        %v1647 = vld [vmem:[%s846 + $0x38] sm:$0xff]
        %v1648 = vld [vmem:[%s846 + $0x48] sm:$0xff]
        %v1649 = vld [vmem:[%s846 + $0x50] sm:$0xff]
        %v1650 = vld [vmem:[%s846 + $0x60] sm:$0xff]
        %v1651 = vld [vmem:[%s846 + $0x68] sm:$0xff]
        %v1652 = vld [vmem:[%s846 + $0x78] sm:$0xff]
        %v1653 = vld [vmem:[%s846 + $0x80] sm:$0xff]
        %v1654 = vld [vmem:[%s846 + $0x90] sm:$0xff]
        %v1655 = vld [vmem:[%s846 + $0x98] sm:$0xff]
        %v1656 = vld [vmem:[%s846 + $0xa8] sm:$0xff]
        %v1657 = vld [vmem:[%s846 + $0xb0] sm:$0xff]
        %v1658 = vld [vmem:[%s846 + $0xc0] sm:$0xff]
        %v1659 = vld [vmem:[%s846 + $0xc8] sm:$0xff]
        %v1660 = vld [vmem:[%s846 + $0xd8] sm:$0xff]
        %v1661 = vld [vmem:[%s846 + $0xe0] sm:$0xff]
        %v1662 = vld [vmem:[%s846 + $0xf0] sm:$0xff]
        %v1663 = vld [vmem:[%s846 + $0xf8] sm:$0xff]
        %v1664 = vld [vmem:[%s846 + $0x108] sm:$0xff]
        %v1665 = vld [vmem:[%s846 + $0x110] sm:$0xff]
        %v1666 = vld [vmem:[%s846 + $0x120] sm:$0xff]
        %v1667 = vld [vmem:[%s846 + $0x128] sm:$0xff]
        %v1668 = vld [vmem:[%s846 + $0x138] sm:$0xff]
        %v1669 = vld [vmem:[%s846 + $0x140] sm:$0xff]
        %v1670 = vld [vmem:[%s846 + $0x150] sm:$0xff]
        %v1671 = vld [vmem:[%s846 + $0x158] sm:$0xff]
        %v1672 = vld [vmem:[%s846 + $0x168] sm:$0xff]
        %v1673 = vld [vmem:[%s846 + $0x170] sm:$0xff]
        %s1674 = scalar_lea.vmem %s2, 48
        %v1675 = vld [vmem:[%s1674] sm:$0xff]
        %v1676 = vld [vmem:[%s1674 + $0x8] sm:$0xff]
        %v1678 = vsel %vm790, %v1642, 0
        %v1681 = vsel %vm790, %v1643, 0
        %v1684 = vsel %vm790, %v1644, 0
        %v1687 = vsel %vm790, %v1645, 0
        %v1690 = vsel %vm790, %v1646, 0
        %v1693 = vsel %vm790, %v1647, 0
        %v1696 = vsel %vm790, %v1648, 0
        %v1699 = vsel %vm790, %v1649, 0
        %v1702 = vsel %vm790, %v1650, 0
        %v1705 = vsel %vm790, %v1651, 0
        %v1708 = vsel %vm790, %v1652, 0
        %v1711 = vsel %vm790, %v1653, 0
        %v1714 = vsel %vm790, %v1654, 0
        %v1717 = vsel %vm790, %v1655, 0
        %v1720 = vsel %vm790, %v1656, 0
        %v1723 = vsel %vm790, %v1657, 0
        %v1726 = vsel %vm790, %v1658, 0
        %v1729 = vsel %vm790, %v1659, 0
        %v1732 = vsel %vm790, %v1660, 0
        %v1735 = vsel %vm790, %v1661, 0
        %v1738 = vsel %vm790, %v1662, 0
        %v1741 = vsel %vm790, %v1663, 0
        %v1744 = vsel %vm790, %v1664, 0
        %v1747 = vsel %vm790, %v1665, 0
        %v1750 = vsel %vm790, %v1666, 0
        %v1753 = vsel %vm790, %v1667, 0
        %v1756 = vsel %vm790, %v1668, 0
        %v1759 = vsel %vm790, %v1669, 0
        %v1762 = vsel %vm790, %v1670, 0
        %v1765 = vsel %vm790, %v1671, 0
        %v1768 = vsel %vm790, %v1672, 0
        %v1771 = vsel %vm790, %v1673, 0
        %1773 = vmatpush.msra.mxu0 0.0
        %1774 = vmatpush.msra.mxu0 0.0
        %1775 = vmatpush.msra.mxu0 0.0
        %1776 = vmatpush.msra.mxu0 0.0
        %1777 = vmatpush.msra.mxu0 0.0
        %1778 = vmatpush.msra.mxu0 0.0
        %1779 = vmatpush.msra.mxu0 0.0
        %1780 = vmatpush.msra.mxu0 0.0
        %1781 = vmatpush.msra.mxu0 0.0
        %1782 = vmatpush.msra.mxu0 0.0
        %1783 = vmatpush.msra.mxu0 0.0
        %1784 = vmatpush.msra.mxu0 0.0
        %1785 = vmatpush.msra.mxu0 0.0
        %1786 = vmatpush.msra.mxu0 0.0
        %1787 = vmatpush.msra.mxu0 %v1676
        %1788 = vmatpush.msra.mxu0 %v1675
        %1789 = vmatmul.f32.gmra.mxu0 %v1678
        %v1790 = vpop.f32.mrf.mxu0
        %v1791 = vadd.f32 0.0, %v1790
        %1792 = vmatmul.f32.gmra.mxu0 %v1681
        %v1793 = vpop.f32.mrf.mxu0
        %v1794 = vadd.f32 0.0, %v1793
        %1795 = vmatmul.f32.gmra.mxu0 %v1684
        %v1796 = vpop.f32.mrf.mxu0
        %v1797 = vadd.f32 0.0, %v1796
        %1798 = vmatmul.f32.gmra.mxu0 %v1687
        %v1799 = vpop.f32.mrf.mxu0
        %v1800 = vadd.f32 0.0, %v1799
        %1801 = vmatmul.f32.gmra.mxu0 %v1690
        %v1802 = vpop.f32.mrf.mxu0
        %v1803 = vadd.f32 0.0, %v1802
        %1804 = vmatmul.f32.gmra.mxu0 %v1693
        %v1805 = vpop.f32.mrf.mxu0
        %v1806 = vadd.f32 0.0, %v1805
        %1807 = vmatmul.f32.gmra.mxu0 %v1696
        %v1808 = vpop.f32.mrf.mxu0
        %v1809 = vadd.f32 0.0, %v1808
        %1810 = vmatmul.f32.gmra.mxu0 %v1699
        %v1811 = vpop.f32.mrf.mxu0
        %v1812 = vadd.f32 0.0, %v1811
        %1813 = vmatmul.f32.gmra.mxu0 %v1702
        %v1814 = vpop.f32.mrf.mxu0
        %v1815 = vadd.f32 0.0, %v1814
        %1816 = vmatmul.f32.gmra.mxu0 %v1705
        %v1817 = vpop.f32.mrf.mxu0
        %v1818 = vadd.f32 0.0, %v1817
        %1819 = vmatmul.f32.gmra.mxu0 %v1708
        %v1820 = vpop.f32.mrf.mxu0
        %v1821 = vadd.f32 0.0, %v1820
        %1822 = vmatmul.f32.gmra.mxu0 %v1711
        %v1823 = vpop.f32.mrf.mxu0
        %v1824 = vadd.f32 0.0, %v1823
        %1825 = vmatmul.f32.gmra.mxu0 %v1714
        %v1826 = vpop.f32.mrf.mxu0
        %v1827 = vadd.f32 0.0, %v1826
        %1828 = vmatmul.f32.gmra.mxu0 %v1717
        %v1829 = vpop.f32.mrf.mxu0
        %v1830 = vadd.f32 0.0, %v1829
        %1831 = vmatmul.f32.gmra.mxu0 %v1720
        %v1832 = vpop.f32.mrf.mxu0
        %v1833 = vadd.f32 0.0, %v1832
        %1834 = vmatmul.f32.gmra.mxu0 %v1723
        %v1835 = vpop.f32.mrf.mxu0
        %v1836 = vadd.f32 0.0, %v1835
        %1837 = vmatmul.f32.gmra.mxu0 %v1726
        %v1838 = vpop.f32.mrf.mxu0
        %v1839 = vadd.f32 0.0, %v1838
        %1840 = vmatmul.f32.gmra.mxu0 %v1729
        %v1841 = vpop.f32.mrf.mxu0
        %v1842 = vadd.f32 0.0, %v1841
        %1843 = vmatmul.f32.gmra.mxu0 %v1732
        %v1844 = vpop.f32.mrf.mxu0
        %v1845 = vadd.f32 0.0, %v1844
        %1846 = vmatmul.f32.gmra.mxu0 %v1735
        %v1847 = vpop.f32.mrf.mxu0
        %v1848 = vadd.f32 0.0, %v1847
        %1849 = vmatmul.f32.gmra.mxu0 %v1738
        %v1850 = vpop.f32.mrf.mxu0
        %v1851 = vadd.f32 0.0, %v1850
        %1852 = vmatmul.f32.gmra.mxu0 %v1741
        %v1853 = vpop.f32.mrf.mxu0
        %v1854 = vadd.f32 0.0, %v1853
        %1855 = vmatmul.f32.gmra.mxu0 %v1744
        %v1856 = vpop.f32.mrf.mxu0
        %v1857 = vadd.f32 0.0, %v1856
        %1858 = vmatmul.f32.gmra.mxu0 %v1747
        %v1859 = vpop.f32.mrf.mxu0
        %v1860 = vadd.f32 0.0, %v1859
        %1861 = vmatmul.f32.gmra.mxu0 %v1750
        %v1862 = vpop.f32.mrf.mxu0
        %v1863 = vadd.f32 0.0, %v1862
        %1864 = vmatmul.f32.gmra.mxu0 %v1753
        %v1865 = vpop.f32.mrf.mxu0
        %v1866 = vadd.f32 0.0, %v1865
        %1867 = vmatmul.f32.gmra.mxu0 %v1756
        %v1868 = vpop.f32.mrf.mxu0
        %v1869 = vadd.f32 0.0, %v1868
        %1870 = vmatmul.f32.gmra.mxu0 %v1759
        %v1871 = vpop.f32.mrf.mxu0
        %v1872 = vadd.f32 0.0, %v1871
        %1873 = vmatmul.f32.gmra.mxu0 %v1762
        %v1874 = vpop.f32.mrf.mxu0
        %v1875 = vadd.f32 0.0, %v1874
        %1876 = vmatmul.f32.gmra.mxu0 %v1765
        %v1877 = vpop.f32.mrf.mxu0
        %v1878 = vadd.f32 0.0, %v1877
        %1879 = vmatmul.f32.gmra.mxu0 %v1768
        %v1880 = vpop.f32.mrf.mxu0
        %v1881 = vadd.f32 0.0, %v1880
        %1882 = vmatmul.f32.gmra.mxu0 %v1771
        %v1883 = vpop.f32.mrf.mxu0
        %v1884 = vadd.f32 0.0, %v1883
        %1885 = vdwg.mxu0
        %v1886 = vadd.f32 %v1610, %v1791
        %v1887 = vadd.f32 %v1611, %v1794
        %v1888 = vadd.f32 %v1612, %v1797
        %v1889 = vadd.f32 %v1613, %v1800
        %v1890 = vadd.f32 %v1614, %v1803
        %v1891 = vadd.f32 %v1615, %v1806
        %v1892 = vadd.f32 %v1616, %v1809
        %v1893 = vadd.f32 %v1617, %v1812
        %v1894 = vadd.f32 %v1618, %v1815
        %v1895 = vadd.f32 %v1619, %v1818
        %v1896 = vadd.f32 %v1620, %v1821
        %v1897 = vadd.f32 %v1621, %v1824
        %v1898 = vadd.f32 %v1622, %v1827
        %v1899 = vadd.f32 %v1623, %v1830
        %v1900 = vadd.f32 %v1624, %v1833
        %v1901 = vadd.f32 %v1625, %v1836
        %v1902 = vadd.f32 %v1626, %v1839
        %v1903 = vadd.f32 %v1627, %v1842
        %v1904 = vadd.f32 %v1628, %v1845
        %v1905 = vadd.f32 %v1629, %v1848
        %v1906 = vadd.f32 %v1630, %v1851
        %v1907 = vadd.f32 %v1631, %v1854
        %v1908 = vadd.f32 %v1632, %v1857
        %v1909 = vadd.f32 %v1633, %v1860
        %v1910 = vadd.f32 %v1634, %v1863
        %v1911 = vadd.f32 %v1635, %v1866
        %v1912 = vadd.f32 %v1636, %v1869
        %v1913 = vadd.f32 %v1637, %v1872
        %v1914 = vadd.f32 %v1638, %v1875
        %v1915 = vadd.f32 %v1639, %v1878
        %v1916 = vadd.f32 %v1640, %v1881
        %v1917 = vadd.f32 %v1641, %v1884
        %v1918 = vld [vmem:[%s846 + $0x1] sm:$0xff]
        %v1919 = vld [vmem:[%s846 + $0x9] sm:$0xff]
        %v1920 = vld [vmem:[%s846 + $0x19] sm:$0xff]
        %v1921 = vld [vmem:[%s846 + $0x21] sm:$0xff]
        %v1922 = vld [vmem:[%s846 + $0x31] sm:$0xff]
        %v1923 = vld [vmem:[%s846 + $0x39] sm:$0xff]
        %v1924 = vld [vmem:[%s846 + $0x49] sm:$0xff]
        %v1925 = vld [vmem:[%s846 + $0x51] sm:$0xff]
        %v1926 = vld [vmem:[%s846 + $0x61] sm:$0xff]
        %v1927 = vld [vmem:[%s846 + $0x69] sm:$0xff]
        %v1928 = vld [vmem:[%s846 + $0x79] sm:$0xff]
        %v1929 = vld [vmem:[%s846 + $0x81] sm:$0xff]
        %v1930 = vld [vmem:[%s846 + $0x91] sm:$0xff]
        %v1931 = vld [vmem:[%s846 + $0x99] sm:$0xff]
        %v1932 = vld [vmem:[%s846 + $0xa9] sm:$0xff]
        %v1933 = vld [vmem:[%s846 + $0xb1] sm:$0xff]
        %v1934 = vld [vmem:[%s846 + $0xc1] sm:$0xff]
        %v1935 = vld [vmem:[%s846 + $0xc9] sm:$0xff]
        %v1936 = vld [vmem:[%s846 + $0xd9] sm:$0xff]
        %v1937 = vld [vmem:[%s846 + $0xe1] sm:$0xff]
        %v1938 = vld [vmem:[%s846 + $0xf1] sm:$0xff]
        %v1939 = vld [vmem:[%s846 + $0xf9] sm:$0xff]
        %v1940 = vld [vmem:[%s846 + $0x109] sm:$0xff]
        %v1941 = vld [vmem:[%s846 + $0x111] sm:$0xff]
        %v1942 = vld [vmem:[%s846 + $0x121] sm:$0xff]
        %v1943 = vld [vmem:[%s846 + $0x129] sm:$0xff]
        %v1944 = vld [vmem:[%s846 + $0x139] sm:$0xff]
        %v1945 = vld [vmem:[%s846 + $0x141] sm:$0xff]
        %v1946 = vld [vmem:[%s846 + $0x151] sm:$0xff]
        %v1947 = vld [vmem:[%s846 + $0x159] sm:$0xff]
        %v1948 = vld [vmem:[%s846 + $0x169] sm:$0xff]
        %v1949 = vld [vmem:[%s846 + $0x171] sm:$0xff]
        %s1950 = scalar_lea.vmem %s2, 64
        %v1951 = vld [vmem:[%s1950] sm:$0xff]
        %v1952 = vld [vmem:[%s1950 + $0x8] sm:$0xff]
        %v1954 = vsel %vm790, %v1918, 0
        %v1957 = vsel %vm790, %v1919, 0
        %v1960 = vsel %vm790, %v1920, 0
        %v1963 = vsel %vm790, %v1921, 0
        %v1966 = vsel %vm790, %v1922, 0
        %v1969 = vsel %vm790, %v1923, 0
        %v1972 = vsel %vm790, %v1924, 0
        %v1975 = vsel %vm790, %v1925, 0
        %v1978 = vsel %vm790, %v1926, 0
        %v1981 = vsel %vm790, %v1927, 0
        %v1984 = vsel %vm790, %v1928, 0
        %v1987 = vsel %vm790, %v1929, 0
        %v1990 = vsel %vm790, %v1930, 0
        %v1993 = vsel %vm790, %v1931, 0
        %v1996 = vsel %vm790, %v1932, 0
        %v1999 = vsel %vm790, %v1933, 0
        %v2002 = vsel %vm790, %v1934, 0
        %v2005 = vsel %vm790, %v1935, 0
        %v2008 = vsel %vm790, %v1936, 0
        %v2011 = vsel %vm790, %v1937, 0
        %v2014 = vsel %vm790, %v1938, 0
        %v2017 = vsel %vm790, %v1939, 0
        %v2020 = vsel %vm790, %v1940, 0
        %v2023 = vsel %vm790, %v1941, 0
        %v2026 = vsel %vm790, %v1942, 0
        %v2029 = vsel %vm790, %v1943, 0
        %v2032 = vsel %vm790, %v1944, 0
        %v2035 = vsel %vm790, %v1945, 0
        %v2038 = vsel %vm790, %v1946, 0
        %v2041 = vsel %vm790, %v1947, 0
        %v2044 = vsel %vm790, %v1948, 0
        %v2047 = vsel %vm790, %v1949, 0
        %2049 = vmatpush.msra.mxu0 0.0
        %2050 = vmatpush.msra.mxu0 0.0
        %2051 = vmatpush.msra.mxu0 0.0
        %2052 = vmatpush.msra.mxu0 0.0
        %2053 = vmatpush.msra.mxu0 0.0
        %2054 = vmatpush.msra.mxu0 0.0
        %2055 = vmatpush.msra.mxu0 0.0
        %2056 = vmatpush.msra.mxu0 0.0
        %2057 = vmatpush.msra.mxu0 0.0
        %2058 = vmatpush.msra.mxu0 0.0
        %2059 = vmatpush.msra.mxu0 0.0
        %2060 = vmatpush.msra.mxu0 0.0
        %2061 = vmatpush.msra.mxu0 0.0
        %2062 = vmatpush.msra.mxu0 0.0
        %2063 = vmatpush.msra.mxu0 %v1952
        %2064 = vmatpush.msra.mxu0 %v1951
        %2065 = vmatmul.f32.gmra.mxu0 %v1954
        %v2066 = vpop.f32.mrf.mxu0
        %v2067 = vadd.f32 0.0, %v2066
        %2068 = vmatmul.f32.gmra.mxu0 %v1957
        %v2069 = vpop.f32.mrf.mxu0
        %v2070 = vadd.f32 0.0, %v2069
        %2071 = vmatmul.f32.gmra.mxu0 %v1960
        %v2072 = vpop.f32.mrf.mxu0
        %v2073 = vadd.f32 0.0, %v2072
        %2074 = vmatmul.f32.gmra.mxu0 %v1963
        %v2075 = vpop.f32.mrf.mxu0
        %v2076 = vadd.f32 0.0, %v2075
        %2077 = vmatmul.f32.gmra.mxu0 %v1966
        %v2078 = vpop.f32.mrf.mxu0
        %v2079 = vadd.f32 0.0, %v2078
        %2080 = vmatmul.f32.gmra.mxu0 %v1969
        %v2081 = vpop.f32.mrf.mxu0
        %v2082 = vadd.f32 0.0, %v2081
        %2083 = vmatmul.f32.gmra.mxu0 %v1972
        %v2084 = vpop.f32.mrf.mxu0
        %v2085 = vadd.f32 0.0, %v2084
        %2086 = vmatmul.f32.gmra.mxu0 %v1975
        %v2087 = vpop.f32.mrf.mxu0
        %v2088 = vadd.f32 0.0, %v2087
        %2089 = vmatmul.f32.gmra.mxu0 %v1978
        %v2090 = vpop.f32.mrf.mxu0
        %v2091 = vadd.f32 0.0, %v2090
        %2092 = vmatmul.f32.gmra.mxu0 %v1981
        %v2093 = vpop.f32.mrf.mxu0
        %v2094 = vadd.f32 0.0, %v2093
        %2095 = vmatmul.f32.gmra.mxu0 %v1984
        %v2096 = vpop.f32.mrf.mxu0
        %v2097 = vadd.f32 0.0, %v2096
        %2098 = vmatmul.f32.gmra.mxu0 %v1987
        %v2099 = vpop.f32.mrf.mxu0
        %v2100 = vadd.f32 0.0, %v2099
        %2101 = vmatmul.f32.gmra.mxu0 %v1990
        %v2102 = vpop.f32.mrf.mxu0
        %v2103 = vadd.f32 0.0, %v2102
        %2104 = vmatmul.f32.gmra.mxu0 %v1993
        %v2105 = vpop.f32.mrf.mxu0
        %v2106 = vadd.f32 0.0, %v2105
        %2107 = vmatmul.f32.gmra.mxu0 %v1996
        %v2108 = vpop.f32.mrf.mxu0
        %v2109 = vadd.f32 0.0, %v2108
        %2110 = vmatmul.f32.gmra.mxu0 %v1999
        %v2111 = vpop.f32.mrf.mxu0
        %v2112 = vadd.f32 0.0, %v2111
        %2113 = vmatmul.f32.gmra.mxu0 %v2002
        %v2114 = vpop.f32.mrf.mxu0
        %v2115 = vadd.f32 0.0, %v2114
        %2116 = vmatmul.f32.gmra.mxu0 %v2005
        %v2117 = vpop.f32.mrf.mxu0
        %v2118 = vadd.f32 0.0, %v2117
        %2119 = vmatmul.f32.gmra.mxu0 %v2008
        %v2120 = vpop.f32.mrf.mxu0
        %v2121 = vadd.f32 0.0, %v2120
        %2122 = vmatmul.f32.gmra.mxu0 %v2011
        %v2123 = vpop.f32.mrf.mxu0
        %v2124 = vadd.f32 0.0, %v2123
        %2125 = vmatmul.f32.gmra.mxu0 %v2014
        %v2126 = vpop.f32.mrf.mxu0
        %v2127 = vadd.f32 0.0, %v2126
        %2128 = vmatmul.f32.gmra.mxu0 %v2017
        %v2129 = vpop.f32.mrf.mxu0
        %v2130 = vadd.f32 0.0, %v2129
        %2131 = vmatmul.f32.gmra.mxu0 %v2020
        %v2132 = vpop.f32.mrf.mxu0
        %v2133 = vadd.f32 0.0, %v2132
        %2134 = vmatmul.f32.gmra.mxu0 %v2023
        %v2135 = vpop.f32.mrf.mxu0
        %v2136 = vadd.f32 0.0, %v2135
        %2137 = vmatmul.f32.gmra.mxu0 %v2026
        %v2138 = vpop.f32.mrf.mxu0
        %v2139 = vadd.f32 0.0, %v2138
        %2140 = vmatmul.f32.gmra.mxu0 %v2029
        %v2141 = vpop.f32.mrf.mxu0
        %v2142 = vadd.f32 0.0, %v2141
        %2143 = vmatmul.f32.gmra.mxu0 %v2032
        %v2144 = vpop.f32.mrf.mxu0
        %v2145 = vadd.f32 0.0, %v2144
        %2146 = vmatmul.f32.gmra.mxu0 %v2035
        %v2147 = vpop.f32.mrf.mxu0
        %v2148 = vadd.f32 0.0, %v2147
        %2149 = vmatmul.f32.gmra.mxu0 %v2038
        %v2150 = vpop.f32.mrf.mxu0
        %v2151 = vadd.f32 0.0, %v2150
        %2152 = vmatmul.f32.gmra.mxu0 %v2041
        %v2153 = vpop.f32.mrf.mxu0
        %v2154 = vadd.f32 0.0, %v2153
        %2155 = vmatmul.f32.gmra.mxu0 %v2044
        %v2156 = vpop.f32.mrf.mxu0
        %v2157 = vadd.f32 0.0, %v2156
        %2158 = vmatmul.f32.gmra.mxu0 %v2047
        %v2159 = vpop.f32.mrf.mxu0
        %v2160 = vadd.f32 0.0, %v2159
        %2161 = vdwg.mxu0
        %v2162 = vadd.f32 %v1886, %v2067
        %v2163 = vadd.f32 %v1887, %v2070
        %v2164 = vadd.f32 %v1888, %v2073
        %v2165 = vadd.f32 %v1889, %v2076
        %v2166 = vadd.f32 %v1890, %v2079
        %v2167 = vadd.f32 %v1891, %v2082
        %v2168 = vadd.f32 %v1892, %v2085
        %v2169 = vadd.f32 %v1893, %v2088
        %v2170 = vadd.f32 %v1894, %v2091
        %v2171 = vadd.f32 %v1895, %v2094
        %v2172 = vadd.f32 %v1896, %v2097
        %v2173 = vadd.f32 %v1897, %v2100
        %v2174 = vadd.f32 %v1898, %v2103
        %v2175 = vadd.f32 %v1899, %v2106
        %v2176 = vadd.f32 %v1900, %v2109
        %v2177 = vadd.f32 %v1901, %v2112
        %v2178 = vadd.f32 %v1902, %v2115
        %v2179 = vadd.f32 %v1903, %v2118
        %v2180 = vadd.f32 %v1904, %v2121
        %v2181 = vadd.f32 %v1905, %v2124
        %v2182 = vadd.f32 %v1906, %v2127
        %v2183 = vadd.f32 %v1907, %v2130
        %v2184 = vadd.f32 %v1908, %v2133
        %v2185 = vadd.f32 %v1909, %v2136
        %v2186 = vadd.f32 %v1910, %v2139
        %v2187 = vadd.f32 %v1911, %v2142
        %v2188 = vadd.f32 %v1912, %v2145
        %v2189 = vadd.f32 %v1913, %v2148
        %v2190 = vadd.f32 %v1914, %v2151
        %v2191 = vadd.f32 %v1915, %v2154
        %v2192 = vadd.f32 %v1916, %v2157
        %v2193 = vadd.f32 %v1917, %v2160
        %v2194 = vld [vmem:[%s846 + $0x2] sm:$0xff]
        %v2195 = vld [vmem:[%s846 + $0xa] sm:$0xff]
        %v2196 = vld [vmem:[%s846 + $0x1a] sm:$0xff]
        %v2197 = vld [vmem:[%s846 + $0x22] sm:$0xff]
        %v2198 = vld [vmem:[%s846 + $0x32] sm:$0xff]
        %v2199 = vld [vmem:[%s846 + $0x3a] sm:$0xff]
        %v2200 = vld [vmem:[%s846 + $0x4a] sm:$0xff]
        %v2201 = vld [vmem:[%s846 + $0x52] sm:$0xff]
        %v2202 = vld [vmem:[%s846 + $0x62] sm:$0xff]
        %v2203 = vld [vmem:[%s846 + $0x6a] sm:$0xff]
        %v2204 = vld [vmem:[%s846 + $0x7a] sm:$0xff]
        %v2205 = vld [vmem:[%s846 + $0x82] sm:$0xff]
        %v2206 = vld [vmem:[%s846 + $0x92] sm:$0xff]
        %v2207 = vld [vmem:[%s846 + $0x9a] sm:$0xff]
        %v2208 = vld [vmem:[%s846 + $0xaa] sm:$0xff]
        %v2209 = vld [vmem:[%s846 + $0xb2] sm:$0xff]
        %v2210 = vld [vmem:[%s846 + $0xc2] sm:$0xff]
        %v2211 = vld [vmem:[%s846 + $0xca] sm:$0xff]
        %v2212 = vld [vmem:[%s846 + $0xda] sm:$0xff]
        %v2213 = vld [vmem:[%s846 + $0xe2] sm:$0xff]
        %v2214 = vld [vmem:[%s846 + $0xf2] sm:$0xff]
        %v2215 = vld [vmem:[%s846 + $0xfa] sm:$0xff]
        %v2216 = vld [vmem:[%s846 + $0x10a] sm:$0xff]
        %v2217 = vld [vmem:[%s846 + $0x112] sm:$0xff]
        %v2218 = vld [vmem:[%s846 + $0x122] sm:$0xff]
        %v2219 = vld [vmem:[%s846 + $0x12a] sm:$0xff]
        %v2220 = vld [vmem:[%s846 + $0x13a] sm:$0xff]
        %v2221 = vld [vmem:[%s846 + $0x142] sm:$0xff]
        %v2222 = vld [vmem:[%s846 + $0x152] sm:$0xff]
        %v2223 = vld [vmem:[%s846 + $0x15a] sm:$0xff]
        %v2224 = vld [vmem:[%s846 + $0x16a] sm:$0xff]
        %v2225 = vld [vmem:[%s846 + $0x172] sm:$0xff]
        %s2226 = scalar_lea.vmem %s2, 80
        %v2227 = vld [vmem:[%s2226] sm:$0xff]
        %v2228 = vld [vmem:[%s2226 + $0x8] sm:$0xff]
        %v2230 = vsel %vm790, %v2194, 0
        %v2233 = vsel %vm790, %v2195, 0
        %v2236 = vsel %vm790, %v2196, 0
        %v2239 = vsel %vm790, %v2197, 0
        %v2242 = vsel %vm790, %v2198, 0
        %v2245 = vsel %vm790, %v2199, 0
        %v2248 = vsel %vm790, %v2200, 0
        %v2251 = vsel %vm790, %v2201, 0
        %v2254 = vsel %vm790, %v2202, 0
        %v2257 = vsel %vm790, %v2203, 0
        %v2260 = vsel %vm790, %v2204, 0
        %v2263 = vsel %vm790, %v2205, 0
        %v2266 = vsel %vm790, %v2206, 0
        %v2269 = vsel %vm790, %v2207, 0
        %v2272 = vsel %vm790, %v2208, 0
        %v2275 = vsel %vm790, %v2209, 0
        %v2278 = vsel %vm790, %v2210, 0
        %v2281 = vsel %vm790, %v2211, 0
        %v2284 = vsel %vm790, %v2212, 0
        %v2287 = vsel %vm790, %v2213, 0
        %v2290 = vsel %vm790, %v2214, 0
        %v2293 = vsel %vm790, %v2215, 0
        %v2296 = vsel %vm790, %v2216, 0
        %v2299 = vsel %vm790, %v2217, 0
        %v2302 = vsel %vm790, %v2218, 0
        %v2305 = vsel %vm790, %v2219, 0
        %v2308 = vsel %vm790, %v2220, 0
        %v2311 = vsel %vm790, %v2221, 0
        %v2314 = vsel %vm790, %v2222, 0
        %v2317 = vsel %vm790, %v2223, 0
        %v2320 = vsel %vm790, %v2224, 0
        %v2323 = vsel %vm790, %v2225, 0
        %2325 = vmatpush.msra.mxu0 0.0
        %2326 = vmatpush.msra.mxu0 0.0
        %2327 = vmatpush.msra.mxu0 0.0
        %2328 = vmatpush.msra.mxu0 0.0
        %2329 = vmatpush.msra.mxu0 0.0
        %2330 = vmatpush.msra.mxu0 0.0
        %2331 = vmatpush.msra.mxu0 0.0
        %2332 = vmatpush.msra.mxu0 0.0
        %2333 = vmatpush.msra.mxu0 0.0
        %2334 = vmatpush.msra.mxu0 0.0
        %2335 = vmatpush.msra.mxu0 0.0
        %2336 = vmatpush.msra.mxu0 0.0
        %2337 = vmatpush.msra.mxu0 0.0
        %2338 = vmatpush.msra.mxu0 0.0
        %2339 = vmatpush.msra.mxu0 %v2228
        %2340 = vmatpush.msra.mxu0 %v2227
        %2341 = vmatmul.f32.gmra.mxu0 %v2230
        %v2342 = vpop.f32.mrf.mxu0
        %v2343 = vadd.f32 0.0, %v2342
        %2344 = vmatmul.f32.gmra.mxu0 %v2233
        %v2345 = vpop.f32.mrf.mxu0
        %v2346 = vadd.f32 0.0, %v2345
        %2347 = vmatmul.f32.gmra.mxu0 %v2236
        %v2348 = vpop.f32.mrf.mxu0
        %v2349 = vadd.f32 0.0, %v2348
        %2350 = vmatmul.f32.gmra.mxu0 %v2239
        %v2351 = vpop.f32.mrf.mxu0
        %v2352 = vadd.f32 0.0, %v2351
        %2353 = vmatmul.f32.gmra.mxu0 %v2242
        %v2354 = vpop.f32.mrf.mxu0
        %v2355 = vadd.f32 0.0, %v2354
        %2356 = vmatmul.f32.gmra.mxu0 %v2245
        %v2357 = vpop.f32.mrf.mxu0
        %v2358 = vadd.f32 0.0, %v2357
        %2359 = vmatmul.f32.gmra.mxu0 %v2248
        %v2360 = vpop.f32.mrf.mxu0
        %v2361 = vadd.f32 0.0, %v2360
        %2362 = vmatmul.f32.gmra.mxu0 %v2251
        %v2363 = vpop.f32.mrf.mxu0
        %v2364 = vadd.f32 0.0, %v2363
        %2365 = vmatmul.f32.gmra.mxu0 %v2254
        %v2366 = vpop.f32.mrf.mxu0
        %v2367 = vadd.f32 0.0, %v2366
        %2368 = vmatmul.f32.gmra.mxu0 %v2257
        %v2369 = vpop.f32.mrf.mxu0
        %v2370 = vadd.f32 0.0, %v2369
        %2371 = vmatmul.f32.gmra.mxu0 %v2260
        %v2372 = vpop.f32.mrf.mxu0
        %v2373 = vadd.f32 0.0, %v2372
        %2374 = vmatmul.f32.gmra.mxu0 %v2263
        %v2375 = vpop.f32.mrf.mxu0
        %v2376 = vadd.f32 0.0, %v2375
        %2377 = vmatmul.f32.gmra.mxu0 %v2266
        %v2378 = vpop.f32.mrf.mxu0
        %v2379 = vadd.f32 0.0, %v2378
        %2380 = vmatmul.f32.gmra.mxu0 %v2269
        %v2381 = vpop.f32.mrf.mxu0
        %v2382 = vadd.f32 0.0, %v2381
        %2383 = vmatmul.f32.gmra.mxu0 %v2272
        %v2384 = vpop.f32.mrf.mxu0
        %v2385 = vadd.f32 0.0, %v2384
        %2386 = vmatmul.f32.gmra.mxu0 %v2275
        %v2387 = vpop.f32.mrf.mxu0
        %v2388 = vadd.f32 0.0, %v2387
        %2389 = vmatmul.f32.gmra.mxu0 %v2278
        %v2390 = vpop.f32.mrf.mxu0
        %v2391 = vadd.f32 0.0, %v2390
        %2392 = vmatmul.f32.gmra.mxu0 %v2281
        %v2393 = vpop.f32.mrf.mxu0
        %v2394 = vadd.f32 0.0, %v2393
        %2395 = vmatmul.f32.gmra.mxu0 %v2284
        %v2396 = vpop.f32.mrf.mxu0
        %v2397 = vadd.f32 0.0, %v2396
        %2398 = vmatmul.f32.gmra.mxu0 %v2287
        %v2399 = vpop.f32.mrf.mxu0
        %v2400 = vadd.f32 0.0, %v2399
        %2401 = vmatmul.f32.gmra.mxu0 %v2290
        %v2402 = vpop.f32.mrf.mxu0
        %v2403 = vadd.f32 0.0, %v2402
        %2404 = vmatmul.f32.gmra.mxu0 %v2293
        %v2405 = vpop.f32.mrf.mxu0
        %v2406 = vadd.f32 0.0, %v2405
        %2407 = vmatmul.f32.gmra.mxu0 %v2296
        %v2408 = vpop.f32.mrf.mxu0
        %v2409 = vadd.f32 0.0, %v2408
        %2410 = vmatmul.f32.gmra.mxu0 %v2299
        %v2411 = vpop.f32.mrf.mxu0
        %v2412 = vadd.f32 0.0, %v2411
        %2413 = vmatmul.f32.gmra.mxu0 %v2302
        %v2414 = vpop.f32.mrf.mxu0
        %v2415 = vadd.f32 0.0, %v2414
        %2416 = vmatmul.f32.gmra.mxu0 %v2305
        %v2417 = vpop.f32.mrf.mxu0
        %v2418 = vadd.f32 0.0, %v2417
        %2419 = vmatmul.f32.gmra.mxu0 %v2308
        %v2420 = vpop.f32.mrf.mxu0
        %v2421 = vadd.f32 0.0, %v2420
        %2422 = vmatmul.f32.gmra.mxu0 %v2311
        %v2423 = vpop.f32.mrf.mxu0
        %v2424 = vadd.f32 0.0, %v2423
        %2425 = vmatmul.f32.gmra.mxu0 %v2314
        %v2426 = vpop.f32.mrf.mxu0
        %v2427 = vadd.f32 0.0, %v2426
        %2428 = vmatmul.f32.gmra.mxu0 %v2317
        %v2429 = vpop.f32.mrf.mxu0
        %v2430 = vadd.f32 0.0, %v2429
        %2431 = vmatmul.f32.gmra.mxu0 %v2320
        %v2432 = vpop.f32.mrf.mxu0
        %v2433 = vadd.f32 0.0, %v2432
        %2434 = vmatmul.f32.gmra.mxu0 %v2323
        %v2435 = vpop.f32.mrf.mxu0
        %v2436 = vadd.f32 0.0, %v2435
        %2437 = vdwg.mxu0
        %v2438 = vadd.f32 %v2162, %v2343
        %v2439 = vadd.f32 %v2163, %v2346
        %v2440 = vadd.f32 %v2164, %v2349
        %v2441 = vadd.f32 %v2165, %v2352
        %v2442 = vadd.f32 %v2166, %v2355
        %v2443 = vadd.f32 %v2167, %v2358
        %v2444 = vadd.f32 %v2168, %v2361
        %v2445 = vadd.f32 %v2169, %v2364
        %v2446 = vadd.f32 %v2170, %v2367
        %v2447 = vadd.f32 %v2171, %v2370
        %v2448 = vadd.f32 %v2172, %v2373
        %v2449 = vadd.f32 %v2173, %v2376
        %v2450 = vadd.f32 %v2174, %v2379
        %v2451 = vadd.f32 %v2175, %v2382
        %v2452 = vadd.f32 %v2176, %v2385
        %v2453 = vadd.f32 %v2177, %v2388
        %v2454 = vadd.f32 %v2178, %v2391
        %v2455 = vadd.f32 %v2179, %v2394
        %v2456 = vadd.f32 %v2180, %v2397
        %v2457 = vadd.f32 %v2181, %v2400
        %v2458 = vadd.f32 %v2182, %v2403
        %v2459 = vadd.f32 %v2183, %v2406
        %v2460 = vadd.f32 %v2184, %v2409
        %v2461 = vadd.f32 %v2185, %v2412
        %v2462 = vadd.f32 %v2186, %v2415
        %v2463 = vadd.f32 %v2187, %v2418
        %v2464 = vadd.f32 %v2188, %v2421
        %v2465 = vadd.f32 %v2189, %v2424
        %v2466 = vadd.f32 %v2190, %v2427
        %v2467 = vadd.f32 %v2191, %v2430
        %v2468 = vadd.f32 %v2192, %v2433
        %v2469 = vadd.f32 %v2193, %v2436
        %s2470 = scalar_lea.vmem [#allocation2], 48
        %v2471 = vld [vmem:[%s2470] sm:$0xff]
        %v2472 = vld [vmem:[%s2470 + $0x8] sm:$0xff]
        %v2473 = vld [vmem:[%s2470 + $0x18] sm:$0xff]
        %v2474 = vld [vmem:[%s2470 + $0x20] sm:$0xff]
        %v2475 = vld [vmem:[%s2470 + $0x30] sm:$0xff]
        %v2476 = vld [vmem:[%s2470 + $0x38] sm:$0xff]
        %v2477 = vld [vmem:[%s2470 + $0x48] sm:$0xff]
        %v2478 = vld [vmem:[%s2470 + $0x50] sm:$0xff]
        %v2479 = vld [vmem:[%s2470 + $0x60] sm:$0xff]
        %v2480 = vld [vmem:[%s2470 + $0x68] sm:$0xff]
        %v2481 = vld [vmem:[%s2470 + $0x78] sm:$0xff]
        %v2482 = vld [vmem:[%s2470 + $0x80] sm:$0xff]
        %v2483 = vld [vmem:[%s2470 + $0x90] sm:$0xff]
        %v2484 = vld [vmem:[%s2470 + $0x98] sm:$0xff]
        %v2485 = vld [vmem:[%s2470 + $0xa8] sm:$0xff]
        %v2486 = vld [vmem:[%s2470 + $0xb0] sm:$0xff]
        %v2487 = vld [vmem:[%s2470 + $0xc0] sm:$0xff]
        %v2488 = vld [vmem:[%s2470 + $0xc8] sm:$0xff]
        %v2489 = vld [vmem:[%s2470 + $0xd8] sm:$0xff]
        %v2490 = vld [vmem:[%s2470 + $0xe0] sm:$0xff]
        %v2491 = vld [vmem:[%s2470 + $0xf0] sm:$0xff]
        %v2492 = vld [vmem:[%s2470 + $0xf8] sm:$0xff]
        %v2493 = vld [vmem:[%s2470 + $0x108] sm:$0xff]
        %v2494 = vld [vmem:[%s2470 + $0x110] sm:$0xff]
        %v2495 = vld [vmem:[%s2470 + $0x120] sm:$0xff]
        %v2496 = vld [vmem:[%s2470 + $0x128] sm:$0xff]
        %v2497 = vld [vmem:[%s2470 + $0x138] sm:$0xff]
        %v2498 = vld [vmem:[%s2470 + $0x140] sm:$0xff]
        %v2499 = vld [vmem:[%s2470 + $0x150] sm:$0xff]
        %v2500 = vld [vmem:[%s2470 + $0x158] sm:$0xff]
        %v2501 = vld [vmem:[%s2470 + $0x168] sm:$0xff]
        %v2502 = vld [vmem:[%s2470 + $0x170] sm:$0xff]
        %s2503 = scalar_lea.vmem %s2, 96
        %v2504 = vld [vmem:[%s2503] sm:$0xff]
        %v2505 = vld [vmem:[%s2503 + $0x8] sm:$0xff]
        %v2507 = vsel %vm790, %v2471, 0
        %v2510 = vsel %vm790, %v2472, 0
        %v2513 = vsel %vm790, %v2473, 0
        %v2516 = vsel %vm790, %v2474, 0
        %v2519 = vsel %vm790, %v2475, 0
        %v2522 = vsel %vm790, %v2476, 0
        %v2525 = vsel %vm790, %v2477, 0
        %v2528 = vsel %vm790, %v2478, 0
        %v2531 = vsel %vm790, %v2479, 0
        %v2534 = vsel %vm790, %v2480, 0
        %v2537 = vsel %vm790, %v2481, 0
        %v2540 = vsel %vm790, %v2482, 0
        %v2543 = vsel %vm790, %v2483, 0
        %v2546 = vsel %vm790, %v2484, 0
        %v2549 = vsel %vm790, %v2485, 0
        %v2552 = vsel %vm790, %v2486, 0
        %v2555 = vsel %vm790, %v2487, 0
        %v2558 = vsel %vm790, %v2488, 0
        %v2561 = vsel %vm790, %v2489, 0
        %v2564 = vsel %vm790, %v2490, 0
        %v2567 = vsel %vm790, %v2491, 0
        %v2570 = vsel %vm790, %v2492, 0
        %v2573 = vsel %vm790, %v2493, 0
        %v2576 = vsel %vm790, %v2494, 0
        %v2579 = vsel %vm790, %v2495, 0
        %v2582 = vsel %vm790, %v2496, 0
        %v2585 = vsel %vm790, %v2497, 0
        %v2588 = vsel %vm790, %v2498, 0
        %v2591 = vsel %vm790, %v2499, 0
        %v2594 = vsel %vm790, %v2500, 0
        %v2597 = vsel %vm790, %v2501, 0
        %v2600 = vsel %vm790, %v2502, 0
        %2602 = vmatpush.msra.mxu0 0.0
        %2603 = vmatpush.msra.mxu0 0.0
        %2604 = vmatpush.msra.mxu0 0.0
        %2605 = vmatpush.msra.mxu0 0.0
        %2606 = vmatpush.msra.mxu0 0.0
        %2607 = vmatpush.msra.mxu0 0.0
        %2608 = vmatpush.msra.mxu0 0.0
        %2609 = vmatpush.msra.mxu0 0.0
        %2610 = vmatpush.msra.mxu0 0.0
        %2611 = vmatpush.msra.mxu0 0.0
        %2612 = vmatpush.msra.mxu0 0.0
        %2613 = vmatpush.msra.mxu0 0.0
        %2614 = vmatpush.msra.mxu0 0.0
        %2615 = vmatpush.msra.mxu0 0.0
        %2616 = vmatpush.msra.mxu0 %v2505
        %2617 = vmatpush.msra.mxu0 %v2504
        %2618 = vmatmul.f32.gmra.mxu0 %v2507
        %v2619 = vpop.f32.mrf.mxu0
        %v2620 = vadd.f32 0.0, %v2619
        %2621 = vmatmul.f32.gmra.mxu0 %v2510
        %v2622 = vpop.f32.mrf.mxu0
        %v2623 = vadd.f32 0.0, %v2622
        %2624 = vmatmul.f32.gmra.mxu0 %v2513
        %v2625 = vpop.f32.mrf.mxu0
        %v2626 = vadd.f32 0.0, %v2625
        %2627 = vmatmul.f32.gmra.mxu0 %v2516
        %v2628 = vpop.f32.mrf.mxu0
        %v2629 = vadd.f32 0.0, %v2628
        %2630 = vmatmul.f32.gmra.mxu0 %v2519
        %v2631 = vpop.f32.mrf.mxu0
        %v2632 = vadd.f32 0.0, %v2631
        %2633 = vmatmul.f32.gmra.mxu0 %v2522
        %v2634 = vpop.f32.mrf.mxu0
        %v2635 = vadd.f32 0.0, %v2634
        %2636 = vmatmul.f32.gmra.mxu0 %v2525
        %v2637 = vpop.f32.mrf.mxu0
        %v2638 = vadd.f32 0.0, %v2637
        %2639 = vmatmul.f32.gmra.mxu0 %v2528
        %v2640 = vpop.f32.mrf.mxu0
        %v2641 = vadd.f32 0.0, %v2640
        %2642 = vmatmul.f32.gmra.mxu0 %v2531
        %v2643 = vpop.f32.mrf.mxu0
        %v2644 = vadd.f32 0.0, %v2643
        %2645 = vmatmul.f32.gmra.mxu0 %v2534
        %v2646 = vpop.f32.mrf.mxu0
        %v2647 = vadd.f32 0.0, %v2646
        %2648 = vmatmul.f32.gmra.mxu0 %v2537
        %v2649 = vpop.f32.mrf.mxu0
        %v2650 = vadd.f32 0.0, %v2649
        %2651 = vmatmul.f32.gmra.mxu0 %v2540
        %v2652 = vpop.f32.mrf.mxu0
        %v2653 = vadd.f32 0.0, %v2652
        %2654 = vmatmul.f32.gmra.mxu0 %v2543
        %v2655 = vpop.f32.mrf.mxu0
        %v2656 = vadd.f32 0.0, %v2655
        %2657 = vmatmul.f32.gmra.mxu0 %v2546
        %v2658 = vpop.f32.mrf.mxu0
        %v2659 = vadd.f32 0.0, %v2658
        %2660 = vmatmul.f32.gmra.mxu0 %v2549
        %v2661 = vpop.f32.mrf.mxu0
        %v2662 = vadd.f32 0.0, %v2661
        %2663 = vmatmul.f32.gmra.mxu0 %v2552
        %v2664 = vpop.f32.mrf.mxu0
        %v2665 = vadd.f32 0.0, %v2664
        %2666 = vmatmul.f32.gmra.mxu0 %v2555
        %v2667 = vpop.f32.mrf.mxu0
        %v2668 = vadd.f32 0.0, %v2667
        %2669 = vmatmul.f32.gmra.mxu0 %v2558
        %v2670 = vpop.f32.mrf.mxu0
        %v2671 = vadd.f32 0.0, %v2670
        %2672 = vmatmul.f32.gmra.mxu0 %v2561
        %v2673 = vpop.f32.mrf.mxu0
        %v2674 = vadd.f32 0.0, %v2673
        %2675 = vmatmul.f32.gmra.mxu0 %v2564
        %v2676 = vpop.f32.mrf.mxu0
        %v2677 = vadd.f32 0.0, %v2676
        %2678 = vmatmul.f32.gmra.mxu0 %v2567
        %v2679 = vpop.f32.mrf.mxu0
        %v2680 = vadd.f32 0.0, %v2679
        %2681 = vmatmul.f32.gmra.mxu0 %v2570
        %v2682 = vpop.f32.mrf.mxu0
        %v2683 = vadd.f32 0.0, %v2682
        %2684 = vmatmul.f32.gmra.mxu0 %v2573
        %v2685 = vpop.f32.mrf.mxu0
        %v2686 = vadd.f32 0.0, %v2685
        %2687 = vmatmul.f32.gmra.mxu0 %v2576
        %v2688 = vpop.f32.mrf.mxu0
        %v2689 = vadd.f32 0.0, %v2688
        %2690 = vmatmul.f32.gmra.mxu0 %v2579
        %v2691 = vpop.f32.mrf.mxu0
        %v2692 = vadd.f32 0.0, %v2691
        %2693 = vmatmul.f32.gmra.mxu0 %v2582
        %v2694 = vpop.f32.mrf.mxu0
        %v2695 = vadd.f32 0.0, %v2694
        %2696 = vmatmul.f32.gmra.mxu0 %v2585
        %v2697 = vpop.f32.mrf.mxu0
        %v2698 = vadd.f32 0.0, %v2697
        %2699 = vmatmul.f32.gmra.mxu0 %v2588
        %v2700 = vpop.f32.mrf.mxu0
        %v2701 = vadd.f32 0.0, %v2700
        %2702 = vmatmul.f32.gmra.mxu0 %v2591
        %v2703 = vpop.f32.mrf.mxu0
        %v2704 = vadd.f32 0.0, %v2703
        %2705 = vmatmul.f32.gmra.mxu0 %v2594
        %v2706 = vpop.f32.mrf.mxu0
        %v2707 = vadd.f32 0.0, %v2706
        %2708 = vmatmul.f32.gmra.mxu0 %v2597
        %v2709 = vpop.f32.mrf.mxu0
        %v2710 = vadd.f32 0.0, %v2709
        %2711 = vmatmul.f32.gmra.mxu0 %v2600
        %v2712 = vpop.f32.mrf.mxu0
        %v2713 = vadd.f32 0.0, %v2712
        %2714 = vdwg.mxu0
        %v2715 = vadd.f32 %v2438, %v2620
        %v2716 = vadd.f32 %v2439, %v2623
        %v2717 = vadd.f32 %v2440, %v2626
        %v2718 = vadd.f32 %v2441, %v2629
        %v2719 = vadd.f32 %v2442, %v2632
        %v2720 = vadd.f32 %v2443, %v2635
        %v2721 = vadd.f32 %v2444, %v2638
        %v2722 = vadd.f32 %v2445, %v2641
        %v2723 = vadd.f32 %v2446, %v2644
        %v2724 = vadd.f32 %v2447, %v2647
        %v2725 = vadd.f32 %v2448, %v2650
        %v2726 = vadd.f32 %v2449, %v2653
        %v2727 = vadd.f32 %v2450, %v2656
        %v2728 = vadd.f32 %v2451, %v2659
        %v2729 = vadd.f32 %v2452, %v2662
        %v2730 = vadd.f32 %v2453, %v2665
        %v2731 = vadd.f32 %v2454, %v2668
        %v2732 = vadd.f32 %v2455, %v2671
        %v2733 = vadd.f32 %v2456, %v2674
        %v2734 = vadd.f32 %v2457, %v2677
        %v2735 = vadd.f32 %v2458, %v2680
        %v2736 = vadd.f32 %v2459, %v2683
        %v2737 = vadd.f32 %v2460, %v2686
        %v2738 = vadd.f32 %v2461, %v2689
        %v2739 = vadd.f32 %v2462, %v2692
        %v2740 = vadd.f32 %v2463, %v2695
        %v2741 = vadd.f32 %v2464, %v2698
        %v2742 = vadd.f32 %v2465, %v2701
        %v2743 = vadd.f32 %v2466, %v2704
        %v2744 = vadd.f32 %v2467, %v2707
        %v2745 = vadd.f32 %v2468, %v2710
        %v2746 = vadd.f32 %v2469, %v2713
        %v2747 = vld [vmem:[%s2470 + $0x1] sm:$0xff]
        %v2748 = vld [vmem:[%s2470 + $0x9] sm:$0xff]
        %v2749 = vld [vmem:[%s2470 + $0x19] sm:$0xff]
        %v2750 = vld [vmem:[%s2470 + $0x21] sm:$0xff]
        %v2751 = vld [vmem:[%s2470 + $0x31] sm:$0xff]
        %v2752 = vld [vmem:[%s2470 + $0x39] sm:$0xff]
        %v2753 = vld [vmem:[%s2470 + $0x49] sm:$0xff]
        %v2754 = vld [vmem:[%s2470 + $0x51] sm:$0xff]
        %v2755 = vld [vmem:[%s2470 + $0x61] sm:$0xff]
        %v2756 = vld [vmem:[%s2470 + $0x69] sm:$0xff]
        %v2757 = vld [vmem:[%s2470 + $0x79] sm:$0xff]
        %v2758 = vld [vmem:[%s2470 + $0x81] sm:$0xff]
        %v2759 = vld [vmem:[%s2470 + $0x91] sm:$0xff]
        %v2760 = vld [vmem:[%s2470 + $0x99] sm:$0xff]
        %v2761 = vld [vmem:[%s2470 + $0xa9] sm:$0xff]
        %v2762 = vld [vmem:[%s2470 + $0xb1] sm:$0xff]
        %v2763 = vld [vmem:[%s2470 + $0xc1] sm:$0xff]
        %v2764 = vld [vmem:[%s2470 + $0xc9] sm:$0xff]
        %v2765 = vld [vmem:[%s2470 + $0xd9] sm:$0xff]
        %v2766 = vld [vmem:[%s2470 + $0xe1] sm:$0xff]
        %v2767 = vld [vmem:[%s2470 + $0xf1] sm:$0xff]
        %v2768 = vld [vmem:[%s2470 + $0xf9] sm:$0xff]
        %v2769 = vld [vmem:[%s2470 + $0x109] sm:$0xff]
        %v2770 = vld [vmem:[%s2470 + $0x111] sm:$0xff]
        %v2771 = vld [vmem:[%s2470 + $0x121] sm:$0xff]
        %v2772 = vld [vmem:[%s2470 + $0x129] sm:$0xff]
        %v2773 = vld [vmem:[%s2470 + $0x139] sm:$0xff]
        %v2774 = vld [vmem:[%s2470 + $0x141] sm:$0xff]
        %v2775 = vld [vmem:[%s2470 + $0x151] sm:$0xff]
        %v2776 = vld [vmem:[%s2470 + $0x159] sm:$0xff]
        %v2777 = vld [vmem:[%s2470 + $0x169] sm:$0xff]
        %v2778 = vld [vmem:[%s2470 + $0x171] sm:$0xff]
        %s2779 = scalar_lea.vmem %s2, 112
        %v2780 = vld [vmem:[%s2779] sm:$0xff]
        %v2781 = vld [vmem:[%s2779 + $0x8] sm:$0xff]
        %v2783 = vsel %vm790, %v2747, 0
        %v2786 = vsel %vm790, %v2748, 0
        %v2789 = vsel %vm790, %v2749, 0
        %v2792 = vsel %vm790, %v2750, 0
        %v2795 = vsel %vm790, %v2751, 0
        %v2798 = vsel %vm790, %v2752, 0
        %v2801 = vsel %vm790, %v2753, 0
        %v2804 = vsel %vm790, %v2754, 0
        %v2807 = vsel %vm790, %v2755, 0
        %v2810 = vsel %vm790, %v2756, 0
        %v2813 = vsel %vm790, %v2757, 0
        %v2816 = vsel %vm790, %v2758, 0
        %v2819 = vsel %vm790, %v2759, 0
        %v2822 = vsel %vm790, %v2760, 0
        %v2825 = vsel %vm790, %v2761, 0
        %v2828 = vsel %vm790, %v2762, 0
        %v2831 = vsel %vm790, %v2763, 0
        %v2834 = vsel %vm790, %v2764, 0
        %v2837 = vsel %vm790, %v2765, 0
        %v2840 = vsel %vm790, %v2766, 0
        %v2843 = vsel %vm790, %v2767, 0
        %v2846 = vsel %vm790, %v2768, 0
        %v2849 = vsel %vm790, %v2769, 0
        %v2852 = vsel %vm790, %v2770, 0
        %v2855 = vsel %vm790, %v2771, 0
        %v2858 = vsel %vm790, %v2772, 0
        %v2861 = vsel %vm790, %v2773, 0
        %v2864 = vsel %vm790, %v2774, 0
        %v2867 = vsel %vm790, %v2775, 0
        %v2870 = vsel %vm790, %v2776, 0
        %v2873 = vsel %vm790, %v2777, 0
        %v2876 = vsel %vm790, %v2778, 0
        %2878 = vmatpush.msra.mxu0 0.0
        %2879 = vmatpush.msra.mxu0 0.0
        %2880 = vmatpush.msra.mxu0 0.0
        %2881 = vmatpush.msra.mxu0 0.0
        %2882 = vmatpush.msra.mxu0 0.0
        %2883 = vmatpush.msra.mxu0 0.0
        %2884 = vmatpush.msra.mxu0 0.0
        %2885 = vmatpush.msra.mxu0 0.0
        %2886 = vmatpush.msra.mxu0 0.0
        %2887 = vmatpush.msra.mxu0 0.0
        %2888 = vmatpush.msra.mxu0 0.0
        %2889 = vmatpush.msra.mxu0 0.0
        %2890 = vmatpush.msra.mxu0 0.0
        %2891 = vmatpush.msra.mxu0 0.0
        %2892 = vmatpush.msra.mxu0 %v2781
        %2893 = vmatpush.msra.mxu0 %v2780
        %2894 = vmatmul.f32.gmra.mxu0 %v2783
        %v2895 = vpop.f32.mrf.mxu0
        %v2896 = vadd.f32 0.0, %v2895
        %2897 = vmatmul.f32.gmra.mxu0 %v2786
        %v2898 = vpop.f32.mrf.mxu0
        %v2899 = vadd.f32 0.0, %v2898
        %2900 = vmatmul.f32.gmra.mxu0 %v2789
        %v2901 = vpop.f32.mrf.mxu0
        %v2902 = vadd.f32 0.0, %v2901
        %2903 = vmatmul.f32.gmra.mxu0 %v2792
        %v2904 = vpop.f32.mrf.mxu0
        %v2905 = vadd.f32 0.0, %v2904
        %2906 = vmatmul.f32.gmra.mxu0 %v2795
        %v2907 = vpop.f32.mrf.mxu0
        %v2908 = vadd.f32 0.0, %v2907
        %2909 = vmatmul.f32.gmra.mxu0 %v2798
        %v2910 = vpop.f32.mrf.mxu0
        %v2911 = vadd.f32 0.0, %v2910
        %2912 = vmatmul.f32.gmra.mxu0 %v2801
        %v2913 = vpop.f32.mrf.mxu0
        %v2914 = vadd.f32 0.0, %v2913
        %2915 = vmatmul.f32.gmra.mxu0 %v2804
        %v2916 = vpop.f32.mrf.mxu0
        %v2917 = vadd.f32 0.0, %v2916
        %2918 = vmatmul.f32.gmra.mxu0 %v2807
        %v2919 = vpop.f32.mrf.mxu0
        %v2920 = vadd.f32 0.0, %v2919
        %2921 = vmatmul.f32.gmra.mxu0 %v2810
        %v2922 = vpop.f32.mrf.mxu0
        %v2923 = vadd.f32 0.0, %v2922
        %2924 = vmatmul.f32.gmra.mxu0 %v2813
        %v2925 = vpop.f32.mrf.mxu0
        %v2926 = vadd.f32 0.0, %v2925
        %2927 = vmatmul.f32.gmra.mxu0 %v2816
        %v2928 = vpop.f32.mrf.mxu0
        %v2929 = vadd.f32 0.0, %v2928
        %2930 = vmatmul.f32.gmra.mxu0 %v2819
        %v2931 = vpop.f32.mrf.mxu0
        %v2932 = vadd.f32 0.0, %v2931
        %2933 = vmatmul.f32.gmra.mxu0 %v2822
        %v2934 = vpop.f32.mrf.mxu0
        %v2935 = vadd.f32 0.0, %v2934
        %2936 = vmatmul.f32.gmra.mxu0 %v2825
        %v2937 = vpop.f32.mrf.mxu0
        %v2938 = vadd.f32 0.0, %v2937
        %2939 = vmatmul.f32.gmra.mxu0 %v2828
        %v2940 = vpop.f32.mrf.mxu0
        %v2941 = vadd.f32 0.0, %v2940
        %2942 = vmatmul.f32.gmra.mxu0 %v2831
        %v2943 = vpop.f32.mrf.mxu0
        %v2944 = vadd.f32 0.0, %v2943
        %2945 = vmatmul.f32.gmra.mxu0 %v2834
        %v2946 = vpop.f32.mrf.mxu0
        %v2947 = vadd.f32 0.0, %v2946
        %2948 = vmatmul.f32.gmra.mxu0 %v2837
        %v2949 = vpop.f32.mrf.mxu0
        %v2950 = vadd.f32 0.0, %v2949
        %2951 = vmatmul.f32.gmra.mxu0 %v2840
        %v2952 = vpop.f32.mrf.mxu0
        %v2953 = vadd.f32 0.0, %v2952
        %2954 = vmatmul.f32.gmra.mxu0 %v2843
        %v2955 = vpop.f32.mrf.mxu0
        %v2956 = vadd.f32 0.0, %v2955
        %2957 = vmatmul.f32.gmra.mxu0 %v2846
        %v2958 = vpop.f32.mrf.mxu0
        %v2959 = vadd.f32 0.0, %v2958
        %2960 = vmatmul.f32.gmra.mxu0 %v2849
        %v2961 = vpop.f32.mrf.mxu0
        %v2962 = vadd.f32 0.0, %v2961
        %2963 = vmatmul.f32.gmra.mxu0 %v2852
        %v2964 = vpop.f32.mrf.mxu0
        %v2965 = vadd.f32 0.0, %v2964
        %2966 = vmatmul.f32.gmra.mxu0 %v2855
        %v2967 = vpop.f32.mrf.mxu0
        %v2968 = vadd.f32 0.0, %v2967
        %2969 = vmatmul.f32.gmra.mxu0 %v2858
        %v2970 = vpop.f32.mrf.mxu0
        %v2971 = vadd.f32 0.0, %v2970
        %2972 = vmatmul.f32.gmra.mxu0 %v2861
        %v2973 = vpop.f32.mrf.mxu0
        %v2974 = vadd.f32 0.0, %v2973
        %2975 = vmatmul.f32.gmra.mxu0 %v2864
        %v2976 = vpop.f32.mrf.mxu0
        %v2977 = vadd.f32 0.0, %v2976
        %2978 = vmatmul.f32.gmra.mxu0 %v2867
        %v2979 = vpop.f32.mrf.mxu0
        %v2980 = vadd.f32 0.0, %v2979
        %2981 = vmatmul.f32.gmra.mxu0 %v2870
        %v2982 = vpop.f32.mrf.mxu0
        %v2983 = vadd.f32 0.0, %v2982
        %2984 = vmatmul.f32.gmra.mxu0 %v2873
        %v2985 = vpop.f32.mrf.mxu0
        %v2986 = vadd.f32 0.0, %v2985
        %2987 = vmatmul.f32.gmra.mxu0 %v2876
        %v2988 = vpop.f32.mrf.mxu0
        %v2989 = vadd.f32 0.0, %v2988
        %2990 = vdwg.mxu0
        %v2991 = vadd.f32 %v2715, %v2896
        %v2992 = vadd.f32 %v2716, %v2899
        %v2993 = vadd.f32 %v2717, %v2902
        %v2994 = vadd.f32 %v2718, %v2905
        %v2995 = vadd.f32 %v2719, %v2908
        %v2996 = vadd.f32 %v2720, %v2911
        %v2997 = vadd.f32 %v2721, %v2914
        %v2998 = vadd.f32 %v2722, %v2917
        %v2999 = vadd.f32 %v2723, %v2920
        %v3000 = vadd.f32 %v2724, %v2923
        %v3001 = vadd.f32 %v2725, %v2926
        %v3002 = vadd.f32 %v2726, %v2929
        %v3003 = vadd.f32 %v2727, %v2932
        %v3004 = vadd.f32 %v2728, %v2935
        %v3005 = vadd.f32 %v2729, %v2938
        %v3006 = vadd.f32 %v2730, %v2941
        %v3007 = vadd.f32 %v2731, %v2944
        %v3008 = vadd.f32 %v2732, %v2947
        %v3009 = vadd.f32 %v2733, %v2950
        %v3010 = vadd.f32 %v2734, %v2953
        %v3011 = vadd.f32 %v2735, %v2956
        %v3012 = vadd.f32 %v2736, %v2959
        %v3013 = vadd.f32 %v2737, %v2962
        %v3014 = vadd.f32 %v2738, %v2965
        %v3015 = vadd.f32 %v2739, %v2968
        %v3016 = vadd.f32 %v2740, %v2971
        %v3017 = vadd.f32 %v2741, %v2974
        %v3018 = vadd.f32 %v2742, %v2977
        %v3019 = vadd.f32 %v2743, %v2980
        %v3020 = vadd.f32 %v2744, %v2983
        %v3021 = vadd.f32 %v2745, %v2986
        %v3022 = vadd.f32 %v2746, %v2989
        %v3023 = vld [vmem:[%s2470 + $0x2] sm:$0xff]
        %v3024 = vld [vmem:[%s2470 + $0xa] sm:$0xff]
        %v3025 = vld [vmem:[%s2470 + $0x1a] sm:$0xff]
        %v3026 = vld [vmem:[%s2470 + $0x22] sm:$0xff]
        %v3027 = vld [vmem:[%s2470 + $0x32] sm:$0xff]
        %v3028 = vld [vmem:[%s2470 + $0x3a] sm:$0xff]
        %v3029 = vld [vmem:[%s2470 + $0x4a] sm:$0xff]
        %v3030 = vld [vmem:[%s2470 + $0x52] sm:$0xff]
        %v3031 = vld [vmem:[%s2470 + $0x62] sm:$0xff]
        %v3032 = vld [vmem:[%s2470 + $0x6a] sm:$0xff]
        %v3033 = vld [vmem:[%s2470 + $0x7a] sm:$0xff]
        %v3034 = vld [vmem:[%s2470 + $0x82] sm:$0xff]
        %v3035 = vld [vmem:[%s2470 + $0x92] sm:$0xff]
        %v3036 = vld [vmem:[%s2470 + $0x9a] sm:$0xff]
        %v3037 = vld [vmem:[%s2470 + $0xaa] sm:$0xff]
        %v3038 = vld [vmem:[%s2470 + $0xb2] sm:$0xff]
        %v3039 = vld [vmem:[%s2470 + $0xc2] sm:$0xff]
        %v3040 = vld [vmem:[%s2470 + $0xca] sm:$0xff]
        %v3041 = vld [vmem:[%s2470 + $0xda] sm:$0xff]
        %v3042 = vld [vmem:[%s2470 + $0xe2] sm:$0xff]
        %v3043 = vld [vmem:[%s2470 + $0xf2] sm:$0xff]
        %v3044 = vld [vmem:[%s2470 + $0xfa] sm:$0xff]
        %v3045 = vld [vmem:[%s2470 + $0x10a] sm:$0xff]
        %v3046 = vld [vmem:[%s2470 + $0x112] sm:$0xff]
        %v3047 = vld [vmem:[%s2470 + $0x122] sm:$0xff]
        %v3048 = vld [vmem:[%s2470 + $0x12a] sm:$0xff]
        %v3049 = vld [vmem:[%s2470 + $0x13a] sm:$0xff]
        %v3050 = vld [vmem:[%s2470 + $0x142] sm:$0xff]
        %v3051 = vld [vmem:[%s2470 + $0x152] sm:$0xff]
        %v3052 = vld [vmem:[%s2470 + $0x15a] sm:$0xff]
        %v3053 = vld [vmem:[%s2470 + $0x16a] sm:$0xff]
        %v3054 = vld [vmem:[%s2470 + $0x172] sm:$0xff]
        %s3055 = scalar_lea.vmem %s2, 128
        %v3056 = vld [vmem:[%s3055] sm:$0xff]
        %v3057 = vld [vmem:[%s3055 + $0x8] sm:$0xff]
        %v3059 = vsel %vm790, %v3023, 0
        %v3062 = vsel %vm790, %v3024, 0
        %v3065 = vsel %vm790, %v3025, 0
        %v3068 = vsel %vm790, %v3026, 0
        %v3071 = vsel %vm790, %v3027, 0
        %v3074 = vsel %vm790, %v3028, 0
        %v3077 = vsel %vm790, %v3029, 0
        %v3080 = vsel %vm790, %v3030, 0
        %v3083 = vsel %vm790, %v3031, 0
        %v3086 = vsel %vm790, %v3032, 0
        %v3089 = vsel %vm790, %v3033, 0
        %v3092 = vsel %vm790, %v3034, 0
        %v3095 = vsel %vm790, %v3035, 0
        %v3098 = vsel %vm790, %v3036, 0
        %v3101 = vsel %vm790, %v3037, 0
        %v3104 = vsel %vm790, %v3038, 0
        %v3107 = vsel %vm790, %v3039, 0
        %v3110 = vsel %vm790, %v3040, 0
        %v3113 = vsel %vm790, %v3041, 0
        %v3116 = vsel %vm790, %v3042, 0
        %v3119 = vsel %vm790, %v3043, 0
        %v3122 = vsel %vm790, %v3044, 0
        %v3125 = vsel %vm790, %v3045, 0
        %v3128 = vsel %vm790, %v3046, 0
        %v3131 = vsel %vm790, %v3047, 0
        %v3134 = vsel %vm790, %v3048, 0
        %v3137 = vsel %vm790, %v3049, 0
        %v3140 = vsel %vm790, %v3050, 0
        %v3143 = vsel %vm790, %v3051, 0
        %v3146 = vsel %vm790, %v3052, 0
        %v3149 = vsel %vm790, %v3053, 0
        %v3152 = vsel %vm790, %v3054, 0
        %3154 = vmatpush.msra.mxu0 0.0
        %3155 = vmatpush.msra.mxu0 0.0
        %3156 = vmatpush.msra.mxu0 0.0
        %3157 = vmatpush.msra.mxu0 0.0
        %3158 = vmatpush.msra.mxu0 0.0
        %3159 = vmatpush.msra.mxu0 0.0
        %3160 = vmatpush.msra.mxu0 0.0
        %3161 = vmatpush.msra.mxu0 0.0
        %3162 = vmatpush.msra.mxu0 0.0
        %3163 = vmatpush.msra.mxu0 0.0
        %3164 = vmatpush.msra.mxu0 0.0
        %3165 = vmatpush.msra.mxu0 0.0
        %3166 = vmatpush.msra.mxu0 0.0
        %3167 = vmatpush.msra.mxu0 0.0
        %3168 = vmatpush.msra.mxu0 %v3057
        %3169 = vmatpush.msra.mxu0 %v3056
        %3170 = vmatmul.f32.gmra.mxu0 %v3059
        %v3171 = vpop.f32.mrf.mxu0
        %v3172 = vadd.f32 0.0, %v3171
        %3173 = vmatmul.f32.gmra.mxu0 %v3062
        %v3174 = vpop.f32.mrf.mxu0
        %v3175 = vadd.f32 0.0, %v3174
        %3176 = vmatmul.f32.gmra.mxu0 %v3065
        %v3177 = vpop.f32.mrf.mxu0
        %v3178 = vadd.f32 0.0, %v3177
        %3179 = vmatmul.f32.gmra.mxu0 %v3068
        %v3180 = vpop.f32.mrf.mxu0
        %v3181 = vadd.f32 0.0, %v3180
        %3182 = vmatmul.f32.gmra.mxu0 %v3071
        %v3183 = vpop.f32.mrf.mxu0
        %v3184 = vadd.f32 0.0, %v3183
        %3185 = vmatmul.f32.gmra.mxu0 %v3074
        %v3186 = vpop.f32.mrf.mxu0
        %v3187 = vadd.f32 0.0, %v3186
        %3188 = vmatmul.f32.gmra.mxu0 %v3077
        %v3189 = vpop.f32.mrf.mxu0
        %v3190 = vadd.f32 0.0, %v3189
        %3191 = vmatmul.f32.gmra.mxu0 %v3080
        %v3192 = vpop.f32.mrf.mxu0
        %v3193 = vadd.f32 0.0, %v3192
        %3194 = vmatmul.f32.gmra.mxu0 %v3083
        %v3195 = vpop.f32.mrf.mxu0
        %v3196 = vadd.f32 0.0, %v3195
        %3197 = vmatmul.f32.gmra.mxu0 %v3086
        %v3198 = vpop.f32.mrf.mxu0
        %v3199 = vadd.f32 0.0, %v3198
        %3200 = vmatmul.f32.gmra.mxu0 %v3089
        %v3201 = vpop.f32.mrf.mxu0
        %v3202 = vadd.f32 0.0, %v3201
        %3203 = vmatmul.f32.gmra.mxu0 %v3092
        %v3204 = vpop.f32.mrf.mxu0
        %v3205 = vadd.f32 0.0, %v3204
        %3206 = vmatmul.f32.gmra.mxu0 %v3095
        %v3207 = vpop.f32.mrf.mxu0
        %v3208 = vadd.f32 0.0, %v3207
        %3209 = vmatmul.f32.gmra.mxu0 %v3098
        %v3210 = vpop.f32.mrf.mxu0
        %v3211 = vadd.f32 0.0, %v3210
        %3212 = vmatmul.f32.gmra.mxu0 %v3101
        %v3213 = vpop.f32.mrf.mxu0
        %v3214 = vadd.f32 0.0, %v3213
        %3215 = vmatmul.f32.gmra.mxu0 %v3104
        %v3216 = vpop.f32.mrf.mxu0
        %v3217 = vadd.f32 0.0, %v3216
        %3218 = vmatmul.f32.gmra.mxu0 %v3107
        %v3219 = vpop.f32.mrf.mxu0
        %v3220 = vadd.f32 0.0, %v3219
        %3221 = vmatmul.f32.gmra.mxu0 %v3110
        %v3222 = vpop.f32.mrf.mxu0
        %v3223 = vadd.f32 0.0, %v3222
        %3224 = vmatmul.f32.gmra.mxu0 %v3113
        %v3225 = vpop.f32.mrf.mxu0
        %v3226 = vadd.f32 0.0, %v3225
        %3227 = vmatmul.f32.gmra.mxu0 %v3116
        %v3228 = vpop.f32.mrf.mxu0
        %v3229 = vadd.f32 0.0, %v3228
        %3230 = vmatmul.f32.gmra.mxu0 %v3119
        %v3231 = vpop.f32.mrf.mxu0
        %v3232 = vadd.f32 0.0, %v3231
        %3233 = vmatmul.f32.gmra.mxu0 %v3122
        %v3234 = vpop.f32.mrf.mxu0
        %v3235 = vadd.f32 0.0, %v3234
        %3236 = vmatmul.f32.gmra.mxu0 %v3125
        %v3237 = vpop.f32.mrf.mxu0
        %v3238 = vadd.f32 0.0, %v3237
        %3239 = vmatmul.f32.gmra.mxu0 %v3128
        %v3240 = vpop.f32.mrf.mxu0
        %v3241 = vadd.f32 0.0, %v3240
        %3242 = vmatmul.f32.gmra.mxu0 %v3131
        %v3243 = vpop.f32.mrf.mxu0
        %v3244 = vadd.f32 0.0, %v3243
        %3245 = vmatmul.f32.gmra.mxu0 %v3134
        %v3246 = vpop.f32.mrf.mxu0
        %v3247 = vadd.f32 0.0, %v3246
        %3248 = vmatmul.f32.gmra.mxu0 %v3137
        %v3249 = vpop.f32.mrf.mxu0
        %v3250 = vadd.f32 0.0, %v3249
        %3251 = vmatmul.f32.gmra.mxu0 %v3140
        %v3252 = vpop.f32.mrf.mxu0
        %v3253 = vadd.f32 0.0, %v3252
        %3254 = vmatmul.f32.gmra.mxu0 %v3143
        %v3255 = vpop.f32.mrf.mxu0
        %v3256 = vadd.f32 0.0, %v3255
        %3257 = vmatmul.f32.gmra.mxu0 %v3146
        %v3258 = vpop.f32.mrf.mxu0
        %v3259 = vadd.f32 0.0, %v3258
        %3260 = vmatmul.f32.gmra.mxu0 %v3149
        %v3261 = vpop.f32.mrf.mxu0
        %v3262 = vadd.f32 0.0, %v3261
        %3263 = vmatmul.f32.gmra.mxu0 %v3152
        %v3264 = vpop.f32.mrf.mxu0
        %v3265 = vadd.f32 0.0, %v3264
        %3266 = vdwg.mxu0
        %v3267 = vadd.f32 %v2991, %v3172
        %v3268 = vadd.f32 %v2992, %v3175
        %v3269 = vadd.f32 %v2993, %v3178
        %v3270 = vadd.f32 %v2994, %v3181
        %v3271 = vadd.f32 %v2995, %v3184
        %v3272 = vadd.f32 %v2996, %v3187
        %v3273 = vadd.f32 %v2997, %v3190
        %v3274 = vadd.f32 %v2998, %v3193
        %v3275 = vadd.f32 %v2999, %v3196
        %v3276 = vadd.f32 %v3000, %v3199
        %v3277 = vadd.f32 %v3001, %v3202
        %v3278 = vadd.f32 %v3002, %v3205
        %v3279 = vadd.f32 %v3003, %v3208
        %v3280 = vadd.f32 %v3004, %v3211
        %v3281 = vadd.f32 %v3005, %v3214
        %v3282 = vadd.f32 %v3006, %v3217
        %v3283 = vadd.f32 %v3007, %v3220
        %v3284 = vadd.f32 %v3008, %v3223
        %v3285 = vadd.f32 %v3009, %v3226
        %v3286 = vadd.f32 %v3010, %v3229
        %v3287 = vadd.f32 %v3011, %v3232
        %v3288 = vadd.f32 %v3012, %v3235
        %v3289 = vadd.f32 %v3013, %v3238
        %v3290 = vadd.f32 %v3014, %v3241
        %v3291 = vadd.f32 %v3015, %v3244
        %v3292 = vadd.f32 %v3016, %v3247
        %v3293 = vadd.f32 %v3017, %v3250
        %v3294 = vadd.f32 %v3018, %v3253
        %v3295 = vadd.f32 %v3019, %v3256
        %v3296 = vadd.f32 %v3020, %v3259
        %v3297 = vadd.f32 %v3021, %v3262
        %v3298 = vadd.f32 %v3022, %v3265
        %v3299 = vld [vmem:[%s7] sm:$0x1]
        %v3301 = vperm.slane %v3299, 0
        %v3303 = vmul.f32 %v3267, %v3301
        %v3304 = vmul.f32 %v3268, %v3301
        %v3305 = vmul.f32 %v3269, %v3301
        %v3306 = vmul.f32 %v3270, %v3301
        %v3307 = vmul.f32 %v3271, %v3301
        %v3308 = vmul.f32 %v3272, %v3301
        %v3309 = vmul.f32 %v3273, %v3301
        %v3310 = vmul.f32 %v3274, %v3301
        %v3311 = vmul.f32 %v3275, %v3301
        %v3312 = vmul.f32 %v3276, %v3301
        %v3313 = vmul.f32 %v3277, %v3301
        %v3314 = vmul.f32 %v3278, %v3301
        %v3315 = vmul.f32 %v3279, %v3301
        %v3316 = vmul.f32 %v3280, %v3301
        %v3317 = vmul.f32 %v3281, %v3301
        %v3318 = vmul.f32 %v3282, %v3301
        %v3319 = vmul.f32 %v3283, %v3301
        %v3320 = vmul.f32 %v3284, %v3301
        %v3321 = vmul.f32 %v3285, %v3301
        %v3322 = vmul.f32 %v3286, %v3301
        %v3323 = vmul.f32 %v3287, %v3301
        %v3324 = vmul.f32 %v3288, %v3301
        %v3325 = vmul.f32 %v3289, %v3301
        %v3326 = vmul.f32 %v3290, %v3301
        %v3327 = vmul.f32 %v3291, %v3301
        %v3328 = vmul.f32 %v3292, %v3301
        %v3329 = vmul.f32 %v3293, %v3301
        %v3330 = vmul.f32 %v3294, %v3301
        %v3331 = vmul.f32 %v3295, %v3301
        %v3332 = vmul.f32 %v3296, %v3301
        %v3333 = vmul.f32 %v3297, %v3301
        %v3334 = vmul.f32 %v3298, %v3301
        %v3335 = vld [vmem:[%s8] sm:$0x1]
        %v3337 = vperm.slane %v3335, 0
        %v3339 = vadd.f32 %v3303, %v3337
        %v3340 = vadd.f32 %v3304, %v3337
        %v3341 = vadd.f32 %v3305, %v3337
        %v3342 = vadd.f32 %v3306, %v3337
        %v3343 = vadd.f32 %v3307, %v3337
        %v3344 = vadd.f32 %v3308, %v3337
        %v3345 = vadd.f32 %v3309, %v3337
        %v3346 = vadd.f32 %v3310, %v3337
        %v3347 = vadd.f32 %v3311, %v3337
        %v3348 = vadd.f32 %v3312, %v3337
        %v3349 = vadd.f32 %v3313, %v3337
        %v3350 = vadd.f32 %v3314, %v3337
        %v3351 = vadd.f32 %v3315, %v3337
        %v3352 = vadd.f32 %v3316, %v3337
        %v3353 = vadd.f32 %v3317, %v3337
        %v3354 = vadd.f32 %v3318, %v3337
        %v3355 = vadd.f32 %v3319, %v3337
        %v3356 = vadd.f32 %v3320, %v3337
        %v3357 = vadd.f32 %v3321, %v3337
        %v3358 = vadd.f32 %v3322, %v3337
        %v3359 = vadd.f32 %v3323, %v3337
        %v3360 = vadd.f32 %v3324, %v3337
        %v3361 = vadd.f32 %v3325, %v3337
        %v3362 = vadd.f32 %v3326, %v3337
        %v3363 = vadd.f32 %v3327, %v3337
        %v3364 = vadd.f32 %v3328, %v3337
        %v3365 = vadd.f32 %v3329, %v3337
        %v3366 = vadd.f32 %v3330, %v3337
        %v3367 = vadd.f32 %v3331, %v3337
        %v3368 = vadd.f32 %v3332, %v3337
        %v3369 = vadd.f32 %v3333, %v3337
        %v3370 = vadd.f32 %v3334, %v3337
        %v3371 = vmax.f32 %v3339, 0.0
        %v3372 = vmax.f32 %v3340, 0.0
        %v3373 = vmax.f32 %v3341, 0.0
        %v3374 = vmax.f32 %v3342, 0.0
        %v3375 = vmax.f32 %v3343, 0.0
        %v3376 = vmax.f32 %v3344, 0.0
        %v3377 = vmax.f32 %v3345, 0.0
        %v3378 = vmax.f32 %v3346, 0.0
        %v3379 = vmax.f32 %v3347, 0.0
        %v3380 = vmax.f32 %v3348, 0.0
        %v3381 = vmax.f32 %v3349, 0.0
        %v3382 = vmax.f32 %v3350, 0.0
        %v3383 = vmax.f32 %v3351, 0.0
        %v3384 = vmax.f32 %v3352, 0.0
        %v3385 = vmax.f32 %v3353, 0.0
        %v3386 = vmax.f32 %v3354, 0.0
        %v3387 = vmax.f32 %v3355, 0.0
        %v3388 = vmax.f32 %v3356, 0.0
        %v3389 = vmax.f32 %v3357, 0.0
        %v3390 = vmax.f32 %v3358, 0.0
        %v3391 = vmax.f32 %v3359, 0.0
        %v3392 = vmax.f32 %v3360, 0.0
        %v3393 = vmax.f32 %v3361, 0.0
        %v3394 = vmax.f32 %v3362, 0.0
        %v3395 = vmax.f32 %v3363, 0.0
        %v3396 = vmax.f32 %v3364, 0.0
        %v3397 = vmax.f32 %v3365, 0.0
        %v3398 = vmax.f32 %v3366, 0.0
        %v3399 = vmax.f32 %v3367, 0.0
        %v3400 = vmax.f32 %v3368, 0.0
        %v3401 = vmax.f32 %v3369, 0.0
        %v3402 = vmax.f32 %v3370, 0.0
        %v3403 = vld [vmem:[%s3] sm:$0xff]
        %v3404 = vld [vmem:[%s3 + $0x8] sm:$0xff]
        %v3406 = vsel %vm790, %v3371, 0
        %v3409 = vsel %vm790, %v3372, 0
        %v3412 = vsel %vm790, %v3373, 0
        %v3415 = vsel %vm790, %v3374, 0
        %v3418 = vsel %vm790, %v3375, 0
        %v3421 = vsel %vm790, %v3376, 0
        %v3424 = vsel %vm790, %v3377, 0
        %v3427 = vsel %vm790, %v3378, 0
        %v3430 = vsel %vm790, %v3379, 0
        %v3433 = vsel %vm790, %v3380, 0
        %v3436 = vsel %vm790, %v3381, 0
        %v3439 = vsel %vm790, %v3382, 0
        %v3442 = vsel %vm790, %v3383, 0
        %v3445 = vsel %vm790, %v3384, 0
        %v3448 = vsel %vm790, %v3385, 0
        %v3451 = vsel %vm790, %v3386, 0
        %v3454 = vsel %vm790, %v3387, 0
        %v3457 = vsel %vm790, %v3388, 0
        %v3460 = vsel %vm790, %v3389, 0
        %v3463 = vsel %vm790, %v3390, 0
        %v3466 = vsel %vm790, %v3391, 0
        %v3469 = vsel %vm790, %v3392, 0
        %v3472 = vsel %vm790, %v3393, 0
        %v3475 = vsel %vm790, %v3394, 0
        %v3478 = vsel %vm790, %v3395, 0
        %v3481 = vsel %vm790, %v3396, 0
        %v3484 = vsel %vm790, %v3397, 0
        %v3487 = vsel %vm790, %v3398, 0
        %v3490 = vsel %vm790, %v3399, 0
        %v3493 = vsel %vm790, %v3400, 0
        %v3496 = vsel %vm790, %v3401, 0
        %v3499 = vsel %vm790, %v3402, 0
        %3501 = vmatpush.msra.mxu0 0.0
        %3502 = vmatpush.msra.mxu0 0.0
        %3503 = vmatpush.msra.mxu0 0.0
        %3504 = vmatpush.msra.mxu0 0.0
        %3505 = vmatpush.msra.mxu0 0.0
        %3506 = vmatpush.msra.mxu0 0.0
        %3507 = vmatpush.msra.mxu0 0.0
        %3508 = vmatpush.msra.mxu0 0.0
        %3509 = vmatpush.msra.mxu0 0.0
        %3510 = vmatpush.msra.mxu0 0.0
        %3511 = vmatpush.msra.mxu0 0.0
        %3512 = vmatpush.msra.mxu0 0.0
        %3513 = vmatpush.msra.mxu0 0.0
        %3514 = vmatpush.msra.mxu0 0.0
        %3515 = vmatpush.msra.mxu0 %v3404
        %3516 = vmatpush.msra.mxu0 %v3403
        %3517 = vmatmul.f32.gmra.mxu0 %v3406
        %v3518 = vpop.f32.mrf.mxu0
        %v3519 = vadd.f32 0.0, %v3518
        %3520 = vmatmul.f32.gmra.mxu0 %v3409
        %v3521 = vpop.f32.mrf.mxu0
        %v3522 = vadd.f32 0.0, %v3521
        %3523 = vmatmul.f32.gmra.mxu0 %v3412
        %v3524 = vpop.f32.mrf.mxu0
        %v3525 = vadd.f32 0.0, %v3524
        %3526 = vmatmul.f32.gmra.mxu0 %v3415
        %v3527 = vpop.f32.mrf.mxu0
        %v3528 = vadd.f32 0.0, %v3527
        %3529 = vmatmul.f32.gmra.mxu0 %v3418
        %v3530 = vpop.f32.mrf.mxu0
        %v3531 = vadd.f32 0.0, %v3530
        %3532 = vmatmul.f32.gmra.mxu0 %v3421
        %v3533 = vpop.f32.mrf.mxu0
        %v3534 = vadd.f32 0.0, %v3533
        %3535 = vmatmul.f32.gmra.mxu0 %v3424
        %v3536 = vpop.f32.mrf.mxu0
        %v3537 = vadd.f32 0.0, %v3536
        %3538 = vmatmul.f32.gmra.mxu0 %v3427
        %v3539 = vpop.f32.mrf.mxu0
        %v3540 = vadd.f32 0.0, %v3539
        %3541 = vmatmul.f32.gmra.mxu0 %v3430
        %v3542 = vpop.f32.mrf.mxu0
        %v3543 = vadd.f32 0.0, %v3542
        %3544 = vmatmul.f32.gmra.mxu0 %v3433
        %v3545 = vpop.f32.mrf.mxu0
        %v3546 = vadd.f32 0.0, %v3545
        %3547 = vmatmul.f32.gmra.mxu0 %v3436
        %v3548 = vpop.f32.mrf.mxu0
        %v3549 = vadd.f32 0.0, %v3548
        %3550 = vmatmul.f32.gmra.mxu0 %v3439
        %v3551 = vpop.f32.mrf.mxu0
        %v3552 = vadd.f32 0.0, %v3551
        %3553 = vmatmul.f32.gmra.mxu0 %v3442
        %v3554 = vpop.f32.mrf.mxu0
        %v3555 = vadd.f32 0.0, %v3554
        %3556 = vmatmul.f32.gmra.mxu0 %v3445
        %v3557 = vpop.f32.mrf.mxu0
        %v3558 = vadd.f32 0.0, %v3557
        %3559 = vmatmul.f32.gmra.mxu0 %v3448
        %v3560 = vpop.f32.mrf.mxu0
        %v3561 = vadd.f32 0.0, %v3560
        %3562 = vmatmul.f32.gmra.mxu0 %v3451
        %v3563 = vpop.f32.mrf.mxu0
        %v3564 = vadd.f32 0.0, %v3563
        %3565 = vmatmul.f32.gmra.mxu0 %v3454
        %v3566 = vpop.f32.mrf.mxu0
        %v3567 = vadd.f32 0.0, %v3566
        %3568 = vmatmul.f32.gmra.mxu0 %v3457
        %v3569 = vpop.f32.mrf.mxu0
        %v3570 = vadd.f32 0.0, %v3569
        %3571 = vmatmul.f32.gmra.mxu0 %v3460
        %v3572 = vpop.f32.mrf.mxu0
        %v3573 = vadd.f32 0.0, %v3572
        %3574 = vmatmul.f32.gmra.mxu0 %v3463
        %v3575 = vpop.f32.mrf.mxu0
        %v3576 = vadd.f32 0.0, %v3575
        %3577 = vmatmul.f32.gmra.mxu0 %v3466
        %v3578 = vpop.f32.mrf.mxu0
        %v3579 = vadd.f32 0.0, %v3578
        %3580 = vmatmul.f32.gmra.mxu0 %v3469
        %v3581 = vpop.f32.mrf.mxu0
        %v3582 = vadd.f32 0.0, %v3581
        %3583 = vmatmul.f32.gmra.mxu0 %v3472
        %v3584 = vpop.f32.mrf.mxu0
        %v3585 = vadd.f32 0.0, %v3584
        %3586 = vmatmul.f32.gmra.mxu0 %v3475
        %v3587 = vpop.f32.mrf.mxu0
        %v3588 = vadd.f32 0.0, %v3587
        %3589 = vmatmul.f32.gmra.mxu0 %v3478
        %v3590 = vpop.f32.mrf.mxu0
        %v3591 = vadd.f32 0.0, %v3590
        %3592 = vmatmul.f32.gmra.mxu0 %v3481
        %v3593 = vpop.f32.mrf.mxu0
        %v3594 = vadd.f32 0.0, %v3593
        %3595 = vmatmul.f32.gmra.mxu0 %v3484
        %v3596 = vpop.f32.mrf.mxu0
        %v3597 = vadd.f32 0.0, %v3596
        %3598 = vmatmul.f32.gmra.mxu0 %v3487
        %v3599 = vpop.f32.mrf.mxu0
        %v3600 = vadd.f32 0.0, %v3599
        %3601 = vmatmul.f32.gmra.mxu0 %v3490
        %v3602 = vpop.f32.mrf.mxu0
        %v3603 = vadd.f32 0.0, %v3602
        %3604 = vmatmul.f32.gmra.mxu0 %v3493
        %v3605 = vpop.f32.mrf.mxu0
        %v3606 = vadd.f32 0.0, %v3605
        %3607 = vmatmul.f32.gmra.mxu0 %v3496
        %v3608 = vpop.f32.mrf.mxu0
        %v3609 = vadd.f32 0.0, %v3608
        %3610 = vmatmul.f32.gmra.mxu0 %v3499
        %v3611 = vpop.f32.mrf.mxu0
        %v3612 = vadd.f32 0.0, %v3611
        %3613 = vdwg.mxu0
        %v3614 = vld [vmem:[%s9] sm:$0x1]
        %v3616 = vperm.slane %v3614, 0
        %v3618 = vmul.f32 %v3519, %v3616
        %v3619 = vmul.f32 %v3522, %v3616
        %v3620 = vmul.f32 %v3525, %v3616
        %v3621 = vmul.f32 %v3528, %v3616
        %v3622 = vmul.f32 %v3531, %v3616
        %v3623 = vmul.f32 %v3534, %v3616
        %v3624 = vmul.f32 %v3537, %v3616
        %v3625 = vmul.f32 %v3540, %v3616
        %v3626 = vmul.f32 %v3543, %v3616
        %v3627 = vmul.f32 %v3546, %v3616
        %v3628 = vmul.f32 %v3549, %v3616
        %v3629 = vmul.f32 %v3552, %v3616
        %v3630 = vmul.f32 %v3555, %v3616
        %v3631 = vmul.f32 %v3558, %v3616
        %v3632 = vmul.f32 %v3561, %v3616
        %v3633 = vmul.f32 %v3564, %v3616
        %v3634 = vmul.f32 %v3567, %v3616
        %v3635 = vmul.f32 %v3570, %v3616
        %v3636 = vmul.f32 %v3573, %v3616
        %v3637 = vmul.f32 %v3576, %v3616
        %v3638 = vmul.f32 %v3579, %v3616
        %v3639 = vmul.f32 %v3582, %v3616
        %v3640 = vmul.f32 %v3585, %v3616
        %v3641 = vmul.f32 %v3588, %v3616
        %v3642 = vmul.f32 %v3591, %v3616
        %v3643 = vmul.f32 %v3594, %v3616
        %v3644 = vmul.f32 %v3597, %v3616
        %v3645 = vmul.f32 %v3600, %v3616
        %v3646 = vmul.f32 %v3603, %v3616
        %v3647 = vmul.f32 %v3606, %v3616
        %v3648 = vmul.f32 %v3609, %v3616
        %v3649 = vmul.f32 %v3612, %v3616
        %v3650 = vld [vmem:[%s10] sm:$0x1]
        %v3652 = vperm.slane %v3650, 0
        %v3654 = vadd.f32 %v3618, %v3652
        %v3655 = vadd.f32 %v3619, %v3652
        %v3656 = vadd.f32 %v3620, %v3652
        %v3657 = vadd.f32 %v3621, %v3652
        %v3658 = vadd.f32 %v3622, %v3652
        %v3659 = vadd.f32 %v3623, %v3652
        %v3660 = vadd.f32 %v3624, %v3652
        %v3661 = vadd.f32 %v3625, %v3652
        %v3662 = vadd.f32 %v3626, %v3652
        %v3663 = vadd.f32 %v3627, %v3652
        %v3664 = vadd.f32 %v3628, %v3652
        %v3665 = vadd.f32 %v3629, %v3652
        %v3666 = vadd.f32 %v3630, %v3652
        %v3667 = vadd.f32 %v3631, %v3652
        %v3668 = vadd.f32 %v3632, %v3652
        %v3669 = vadd.f32 %v3633, %v3652
        %v3670 = vadd.f32 %v3634, %v3652
        %v3671 = vadd.f32 %v3635, %v3652
        %v3672 = vadd.f32 %v3636, %v3652
        %v3673 = vadd.f32 %v3637, %v3652
        %v3674 = vadd.f32 %v3638, %v3652
        %v3675 = vadd.f32 %v3639, %v3652
        %v3676 = vadd.f32 %v3640, %v3652
        %v3677 = vadd.f32 %v3641, %v3652
        %v3678 = vadd.f32 %v3642, %v3652
        %v3679 = vadd.f32 %v3643, %v3652
        %v3680 = vadd.f32 %v3644, %v3652
        %v3681 = vadd.f32 %v3645, %v3652
        %v3682 = vadd.f32 %v3646, %v3652
        %v3683 = vadd.f32 %v3647, %v3652
        %v3684 = vadd.f32 %v3648, %v3652
        %v3685 = vadd.f32 %v3649, %v3652
        %v3686 = vld [vmem:[%s4] sm:$0xf]
        %v3688 = vsel %vm569, %v3686, 0
        %3690 = vmatpush.msra.mxu0 0.0
        %3691 = vmatpush.msra.mxu0 0.0
        %3692 = vmatpush.msra.mxu0 0.0
        %3693 = vmatpush.msra.mxu0 0.0
        %3694 = vmatpush.msra.mxu0 0.0
        %3695 = vmatpush.msra.mxu0 0.0
        %3696 = vmatpush.msra.mxu0 0.0
        %3697 = vmatpush.msra.mxu0 0.0
        %3698 = vmatpush.msra.mxu0 0.0
        %3699 = vmatpush.msra.mxu0 0.0
        %3700 = vmatpush.msra.mxu0 0.0
        %3701 = vmatpush.msra.mxu0 0.0
        %3702 = vmatpush.msra.mxu0 0.0
        %3703 = vmatpush.msra.mxu0 0.0
        %3704 = vmatpush.msra.mxu0 0.0
        %3705 = vmatpush.msra.mxu0 %v3688
        %3706 = vmatmul.f32.gmra.mxu0 %v474
        %v3707 = vpop.f32.mrf.mxu0
        %v3708 = vadd.f32 0.0, %v3707
        %3709 = vmatmul.f32.gmra.mxu0 %v477
        %v3710 = vpop.f32.mrf.mxu0
        %v3711 = vadd.f32 0.0, %v3710
        %3712 = vmatmul.f32.gmra.mxu0 %v480
        %v3713 = vpop.f32.mrf.mxu0
        %v3714 = vadd.f32 0.0, %v3713
        %3715 = vmatmul.f32.gmra.mxu0 %v483
        %v3716 = vpop.f32.mrf.mxu0
        %v3717 = vadd.f32 0.0, %v3716
        %3718 = vmatmul.f32.gmra.mxu0 %v486
        %v3719 = vpop.f32.mrf.mxu0
        %v3720 = vadd.f32 0.0, %v3719
        %3721 = vmatmul.f32.gmra.mxu0 %v489
        %v3722 = vpop.f32.mrf.mxu0
        %v3723 = vadd.f32 0.0, %v3722
        %3724 = vmatmul.f32.gmra.mxu0 %v492
        %v3725 = vpop.f32.mrf.mxu0
        %v3726 = vadd.f32 0.0, %v3725
        %3727 = vmatmul.f32.gmra.mxu0 %v495
        %v3728 = vpop.f32.mrf.mxu0
        %v3729 = vadd.f32 0.0, %v3728
        %3730 = vmatmul.f32.gmra.mxu0 %v498
        %v3731 = vpop.f32.mrf.mxu0
        %v3732 = vadd.f32 0.0, %v3731
        %3733 = vmatmul.f32.gmra.mxu0 %v501
        %v3734 = vpop.f32.mrf.mxu0
        %v3735 = vadd.f32 0.0, %v3734
        %3736 = vmatmul.f32.gmra.mxu0 %v504
        %v3737 = vpop.f32.mrf.mxu0
        %v3738 = vadd.f32 0.0, %v3737
        %3739 = vmatmul.f32.gmra.mxu0 %v507
        %v3740 = vpop.f32.mrf.mxu0
        %v3741 = vadd.f32 0.0, %v3740
        %3742 = vmatmul.f32.gmra.mxu0 %v510
        %v3743 = vpop.f32.mrf.mxu0
        %v3744 = vadd.f32 0.0, %v3743
        %3745 = vmatmul.f32.gmra.mxu0 %v513
        %v3746 = vpop.f32.mrf.mxu0
        %v3747 = vadd.f32 0.0, %v3746
        %3748 = vmatmul.f32.gmra.mxu0 %v516
        %v3749 = vpop.f32.mrf.mxu0
        %v3750 = vadd.f32 0.0, %v3749
        %3751 = vmatmul.f32.gmra.mxu0 %v519
        %v3752 = vpop.f32.mrf.mxu0
        %v3753 = vadd.f32 0.0, %v3752
        %3754 = vmatmul.f32.gmra.mxu0 %v522
        %v3755 = vpop.f32.mrf.mxu0
        %v3756 = vadd.f32 0.0, %v3755
        %3757 = vmatmul.f32.gmra.mxu0 %v525
        %v3758 = vpop.f32.mrf.mxu0
        %v3759 = vadd.f32 0.0, %v3758
        %3760 = vmatmul.f32.gmra.mxu0 %v528
        %v3761 = vpop.f32.mrf.mxu0
        %v3762 = vadd.f32 0.0, %v3761
        %3763 = vmatmul.f32.gmra.mxu0 %v531
        %v3764 = vpop.f32.mrf.mxu0
        %v3765 = vadd.f32 0.0, %v3764
        %3766 = vmatmul.f32.gmra.mxu0 %v534
        %v3767 = vpop.f32.mrf.mxu0
        %v3768 = vadd.f32 0.0, %v3767
        %3769 = vmatmul.f32.gmra.mxu0 %v537
        %v3770 = vpop.f32.mrf.mxu0
        %v3771 = vadd.f32 0.0, %v3770
        %3772 = vmatmul.f32.gmra.mxu0 %v540
        %v3773 = vpop.f32.mrf.mxu0
        %v3774 = vadd.f32 0.0, %v3773
        %3775 = vmatmul.f32.gmra.mxu0 %v543
        %v3776 = vpop.f32.mrf.mxu0
        %v3777 = vadd.f32 0.0, %v3776
        %3778 = vmatmul.f32.gmra.mxu0 %v546
        %v3779 = vpop.f32.mrf.mxu0
        %v3780 = vadd.f32 0.0, %v3779
        %3781 = vmatmul.f32.gmra.mxu0 %v549
        %v3782 = vpop.f32.mrf.mxu0
        %v3783 = vadd.f32 0.0, %v3782
        %3784 = vmatmul.f32.gmra.mxu0 %v552
        %v3785 = vpop.f32.mrf.mxu0
        %v3786 = vadd.f32 0.0, %v3785
        %3787 = vmatmul.f32.gmra.mxu0 %v555
        %v3788 = vpop.f32.mrf.mxu0
        %v3789 = vadd.f32 0.0, %v3788
        %3790 = vmatmul.f32.gmra.mxu0 %v558
        %v3791 = vpop.f32.mrf.mxu0
        %v3792 = vadd.f32 0.0, %v3791
        %3793 = vmatmul.f32.gmra.mxu0 %v561
        %v3794 = vpop.f32.mrf.mxu0
        %v3795 = vadd.f32 0.0, %v3794
        %3796 = vmatmul.f32.gmra.mxu0 %v564
        %v3797 = vpop.f32.mrf.mxu0
        %v3798 = vadd.f32 0.0, %v3797
        %3799 = vmatmul.f32.gmra.mxu0 %v567
        %v3800 = vpop.f32.mrf.mxu0
        %v3801 = vadd.f32 0.0, %v3800
        %3802 = vdwg.mxu0
        %v3803 = vld [vmem:[%s11] sm:$0x1]
        %v3805 = vperm.slane %v3803, 0
        %v3807 = vmul.f32 %v3708, %v3805
        %v3808 = vmul.f32 %v3711, %v3805
        %v3809 = vmul.f32 %v3714, %v3805
        %v3810 = vmul.f32 %v3717, %v3805
        %v3811 = vmul.f32 %v3720, %v3805
        %v3812 = vmul.f32 %v3723, %v3805
        %v3813 = vmul.f32 %v3726, %v3805
        %v3814 = vmul.f32 %v3729, %v3805
        %v3815 = vmul.f32 %v3732, %v3805
        %v3816 = vmul.f32 %v3735, %v3805
        %v3817 = vmul.f32 %v3738, %v3805
        %v3818 = vmul.f32 %v3741, %v3805
        %v3819 = vmul.f32 %v3744, %v3805
        %v3820 = vmul.f32 %v3747, %v3805
        %v3821 = vmul.f32 %v3750, %v3805
        %v3822 = vmul.f32 %v3753, %v3805
        %v3823 = vmul.f32 %v3756, %v3805
        %v3824 = vmul.f32 %v3759, %v3805
        %v3825 = vmul.f32 %v3762, %v3805
        %v3826 = vmul.f32 %v3765, %v3805
        %v3827 = vmul.f32 %v3768, %v3805
        %v3828 = vmul.f32 %v3771, %v3805
        %v3829 = vmul.f32 %v3774, %v3805
        %v3830 = vmul.f32 %v3777, %v3805
        %v3831 = vmul.f32 %v3780, %v3805
        %v3832 = vmul.f32 %v3783, %v3805
        %v3833 = vmul.f32 %v3786, %v3805
        %v3834 = vmul.f32 %v3789, %v3805
        %v3835 = vmul.f32 %v3792, %v3805
        %v3836 = vmul.f32 %v3795, %v3805
        %v3837 = vmul.f32 %v3798, %v3805
        %v3838 = vmul.f32 %v3801, %v3805
        %v3839 = vld [vmem:[%s12] sm:$0x1]
        %v3841 = vperm.slane %v3839, 0
        %v3843 = vadd.f32 %v3807, %v3841
        %v3844 = vadd.f32 %v3808, %v3841
        %v3845 = vadd.f32 %v3809, %v3841
        %v3846 = vadd.f32 %v3810, %v3841
        %v3847 = vadd.f32 %v3811, %v3841
        %v3848 = vadd.f32 %v3812, %v3841
        %v3849 = vadd.f32 %v3813, %v3841
        %v3850 = vadd.f32 %v3814, %v3841
        %v3851 = vadd.f32 %v3815, %v3841
        %v3852 = vadd.f32 %v3816, %v3841
        %v3853 = vadd.f32 %v3817, %v3841
        %v3854 = vadd.f32 %v3818, %v3841
        %v3855 = vadd.f32 %v3819, %v3841
        %v3856 = vadd.f32 %v3820, %v3841
        %v3857 = vadd.f32 %v3821, %v3841
        %v3858 = vadd.f32 %v3822, %v3841
        %v3859 = vadd.f32 %v3823, %v3841
        %v3860 = vadd.f32 %v3824, %v3841
        %v3861 = vadd.f32 %v3825, %v3841
        %v3862 = vadd.f32 %v3826, %v3841
        %v3863 = vadd.f32 %v3827, %v3841
        %v3864 = vadd.f32 %v3828, %v3841
        %v3865 = vadd.f32 %v3829, %v3841
        %v3866 = vadd.f32 %v3830, %v3841
        %v3867 = vadd.f32 %v3831, %v3841
        %v3868 = vadd.f32 %v3832, %v3841
        %v3869 = vadd.f32 %v3833, %v3841
        %v3870 = vadd.f32 %v3834, %v3841
        %v3871 = vadd.f32 %v3835, %v3841
        %v3872 = vadd.f32 %v3836, %v3841
        %v3873 = vadd.f32 %v3837, %v3841
        %v3874 = vadd.f32 %v3838, %v3841
        %v3875 = vadd.f32 %v3654, %v3843
        %v3876 = vadd.f32 %v3655, %v3844
        %v3877 = vadd.f32 %v3656, %v3845
        %v3878 = vadd.f32 %v3657, %v3846
        %v3879 = vadd.f32 %v3658, %v3847
        %v3880 = vadd.f32 %v3659, %v3848
        %v3881 = vadd.f32 %v3660, %v3849
        %v3882 = vadd.f32 %v3661, %v3850
        %v3883 = vadd.f32 %v3662, %v3851
        %v3884 = vadd.f32 %v3663, %v3852
        %v3885 = vadd.f32 %v3664, %v3853
        %v3886 = vadd.f32 %v3665, %v3854
        %v3887 = vadd.f32 %v3666, %v3855
        %v3888 = vadd.f32 %v3667, %v3856
        %v3889 = vadd.f32 %v3668, %v3857
        %v3890 = vadd.f32 %v3669, %v3858
        %v3891 = vadd.f32 %v3670, %v3859
        %v3892 = vadd.f32 %v3671, %v3860
        %v3893 = vadd.f32 %v3672, %v3861
        %v3894 = vadd.f32 %v3673, %v3862
        %v3895 = vadd.f32 %v3674, %v3863
        %v3896 = vadd.f32 %v3675, %v3864
        %v3897 = vadd.f32 %v3676, %v3865
        %v3898 = vadd.f32 %v3677, %v3866
        %v3899 = vadd.f32 %v3678, %v3867
        %v3900 = vadd.f32 %v3679, %v3868
        %v3901 = vadd.f32 %v3680, %v3869
        %v3902 = vadd.f32 %v3681, %v3870
        %v3903 = vadd.f32 %v3682, %v3871
        %v3904 = vadd.f32 %v3683, %v3872
        %v3905 = vadd.f32 %v3684, %v3873
        %v3906 = vadd.f32 %v3685, %v3874
        %v3907 = vmax.f32 %v3875, 0.0
        %v3908 = vmax.f32 %v3876, 0.0
        %v3909 = vmax.f32 %v3877, 0.0
        %v3910 = vmax.f32 %v3878, 0.0
        %v3911 = vmax.f32 %v3879, 0.0
        %v3912 = vmax.f32 %v3880, 0.0
        %v3913 = vmax.f32 %v3881, 0.0
        %v3914 = vmax.f32 %v3882, 0.0
        %v3915 = vmax.f32 %v3883, 0.0
        %v3916 = vmax.f32 %v3884, 0.0
        %v3917 = vmax.f32 %v3885, 0.0
        %v3918 = vmax.f32 %v3886, 0.0
        %v3919 = vmax.f32 %v3887, 0.0
        %v3920 = vmax.f32 %v3888, 0.0
        %v3921 = vmax.f32 %v3889, 0.0
        %v3922 = vmax.f32 %v3890, 0.0
        %v3923 = vmax.f32 %v3891, 0.0
        %v3924 = vmax.f32 %v3892, 0.0
        %v3925 = vmax.f32 %v3893, 0.0
        %v3926 = vmax.f32 %v3894, 0.0
        %v3927 = vmax.f32 %v3895, 0.0
        %v3928 = vmax.f32 %v3896, 0.0
        %v3929 = vmax.f32 %v3897, 0.0
        %v3930 = vmax.f32 %v3898, 0.0
        %v3931 = vmax.f32 %v3899, 0.0
        %v3932 = vmax.f32 %v3900, 0.0
        %v3933 = vmax.f32 %v3901, 0.0
        %v3934 = vmax.f32 %v3902, 0.0
        %v3935 = vmax.f32 %v3903, 0.0
        %v3936 = vmax.f32 %v3904, 0.0
        %v3937 = vmax.f32 %v3905, 0.0
        %v3938 = vmax.f32 %v3906, 0.0
        %vm3939 = vcmask 523264
        %3940 = vst.msk [vmem:[%s433] sm:$0xff] %vm3939, %v3907
        %3941 = vst.msk [vmem:[%s433 + $0x8] sm:$0xff] %vm3939, %v3908
        %3942 = vst.msk [vmem:[%s433 + $0x10] sm:$0xff] %vm3939, %v3909
        %3943 = vst.msk [vmem:[%s433 + $0x18] sm:$0xff] %vm3939, %v3910
        %3944 = vst.msk [vmem:[%s433 + $0x20] sm:$0xff] %vm3939, %v3911
        %3945 = vst.msk [vmem:[%s433 + $0x28] sm:$0xff] %vm3939, %v3912
        %3946 = vst.msk [vmem:[%s433 + $0x30] sm:$0xff] %vm3939, %v3913
        %3947 = vst.msk [vmem:[%s433 + $0x38] sm:$0xff] %vm3939, %v3914
        %3948 = vst.msk [vmem:[%s433 + $0x40] sm:$0xff] %vm3939, %v3915
        %3949 = vst.msk [vmem:[%s433 + $0x48] sm:$0xff] %vm3939, %v3916
        %3950 = vst.msk [vmem:[%s433 + $0x50] sm:$0xff] %vm3939, %v3917
        %3951 = vst.msk [vmem:[%s433 + $0x58] sm:$0xff] %vm3939, %v3918
        %3952 = vst.msk [vmem:[%s433 + $0x60] sm:$0xff] %vm3939, %v3919
        %3953 = vst.msk [vmem:[%s433 + $0x68] sm:$0xff] %vm3939, %v3920
        %3954 = vst.msk [vmem:[%s433 + $0x70] sm:$0xff] %vm3939, %v3921
        %3955 = vst.msk [vmem:[%s433 + $0x78] sm:$0xff] %vm3939, %v3922
        %3956 = vst.msk [vmem:[%s433 + $0x80] sm:$0xff] %vm3939, %v3923
        %3957 = vst.msk [vmem:[%s433 + $0x88] sm:$0xff] %vm3939, %v3924
        %3958 = vst.msk [vmem:[%s433 + $0x90] sm:$0xff] %vm3939, %v3925
        %3959 = vst.msk [vmem:[%s433 + $0x98] sm:$0xff] %vm3939, %v3926
        %3960 = vst.msk [vmem:[%s433 + $0xa0] sm:$0xff] %vm3939, %v3927
        %3961 = vst.msk [vmem:[%s433 + $0xa8] sm:$0xff] %vm3939, %v3928
        %3962 = vst.msk [vmem:[%s433 + $0xb0] sm:$0xff] %vm3939, %v3929
        %3963 = vst.msk [vmem:[%s433 + $0xb8] sm:$0xff] %vm3939, %v3930
        %3964 = vst.msk [vmem:[%s433 + $0xc0] sm:$0xff] %vm3939, %v3931
        %3965 = vst.msk [vmem:[%s433 + $0xc8] sm:$0xff] %vm3939, %v3932
        %3966 = vst.msk [vmem:[%s433 + $0xd0] sm:$0xff] %vm3939, %v3933
        %3967 = vst.msk [vmem:[%s433 + $0xd8] sm:$0xff] %vm3939, %v3934
        %3968 = vst.msk [vmem:[%s433 + $0xe0] sm:$0xff] %vm3939, %v3935
        %3969 = vst.msk [vmem:[%s433 + $0xe8] sm:$0xff] %vm3939, %v3936
        %3970 = vst.msk [vmem:[%s433 + $0xf0] sm:$0xff] %vm3939, %v3937
        %3971 = vst.msk [vmem:[%s433 + $0xf8] sm:$0xff] %vm3939, %v3938
        %s3972 = sand.u32 %s313, 1
        %s3973 = scalar_lea.sflag [#allocation4], %s3972
        %s3974 = sand.u32 %s313, 1
        %s3975 = smul.addr %s3974, 256
        %s3976 = scalar_lea.vmem [#allocation3], %s3975
        // Predicated region
        $region73: #{residual_unit_forward.1} parent=71 // pred_check
          %p3977 = pneg %p323
        $region74: #{residual_unit_forward.1} parent=71 // pred_check_branch
          %3979 = sbr.rel (%p3977) target = $region76
        $region75: #{residual_unit_forward.1} parent=71 // pred_region
          %3981 = vsyncadd %s3973, 0
          %s3982 = smul.addr %s27, 32
          %s3983 = smul.addr %s3982, 8
          %s3984 = scalar_lea.hbm %s13, %s3983
          %s3985 = sshll.u32 %s3976, 4
          %s3986 = int_to_ptr.vmem [resolvable:$true] %s3985
          %s3987 = sshll.u32 %s3984, 4
          %s3988 = int_to_ptr.hbm [resolvable:$true] %s3987
          %3993 = dma.vmem_to_hbm [thread:$0]  %s3986, 4096, %s3988, %s3973, 128, 128, 8
        $region76: #{residual_unit_forward.1} parent=71 // pred_fallthru
          _
      $region72: #{residual_unit_forward.1} parent=5 // pred_fallthru
        _
      %p3994 = scmp.le.s32.totalorder 2, %s22
      // Predicated region
      $region77: #{residual_unit_forward.1} parent=5 // pred_check
        %p3995 = pneg %p3994
      $region78: #{residual_unit_forward.1} parent=5 // pred_check_branch
        %3997 = sbr.rel (%p3995) target = $region80
      $region79: #{residual_unit_forward.1} parent=5 // pred_region
        %s3998 = ssub.s32 %s22, 2
        // Predicated region
        $region81: #{residual_unit_forward.1} parent=79 // pred_check
          %p3999 = pneg %p329
        $region82: #{residual_unit_forward.1} parent=79 // pred_check_branch
          %4001 = sbr.rel (%p3999) target = $region84
        $region83: #{residual_unit_forward.1} parent=79 // pred_region
          %s4002 = sand.u32 %s314, 1
          %s4003 = scalar_lea.sflag [#allocation4], %s4002
          %s4004 = sand.u32 %s314, 1
          %s4005 = smul.addr %s4004, 256
          %s4006 = scalar_lea.vmem [#allocation3], %s4005
          %4008 = dma.done %s4003, 4096
        $region84: #{residual_unit_forward.1} parent=79 // pred_fallthru
          _
      $region80: #{residual_unit_forward.1} parent=5 // pred_fallthru
        _
    $region6: #{residual_unit_forward.1} parent=1 // loop_footer
      %s26 = sadd.s32 1, %s22
    $region7: #{residual_unit_forward.1} parent=1 // loop_footer_branch
      %21 = sbr.rel target = $region3
    $region8: #{residual_unit_forward.1} parent=1 // loop_exit
      _
    %4009 = vsyncpa [#allocation4], 1
    %s4010 = scalar_lea.sflag [#allocation4], 1
    %4011 = vsyncpa %s4010, 1

</llo_original>
